<compile_context>
chip_gen: v5e
topology: v5e:2x2
jax: 0.10.0
libtpu: 0.0.40
codegen_flags: <defaults>
</compile_context>

<pallas_src>
import jax
import jax.numpy as jnp
from jax import lax
from jax.experimental import pallas as pl
from jax.experimental.pallas import tpu as pltpu

IN_FEAT = 512 * 2 * 2   # 2048
HID = 512
MAPS = 32
OUT = 2
BN_EPS = 1e-5
PAD_LANES = 128         # lane-dense merged output block (maps | preds | zeros)


def _round_up(x, m):
    return ((x + m - 1) // m) * m


def _physical_vmem_bytes():
    """Best-effort physical VMEM capacity; conservative fallback (v7x per-TC)."""
    try:
        info = pltpu.get_tpu_info()
        for attr in ("vmem_capacity_bytes", "vmem_bytes", "vmem_size_bytes"):
            v = getattr(info, attr, None)
            if v:
                return int(v)
    except Exception:
        pass
    return 64 << 20


def _pick_tile_b(B, sublane, tile_max):
    if B < 2 * sublane:
        # tiny batch: a single sublane-aligned tile
        return _round_up(B, sublane)
    # Prefer >= 2 grid steps so the "parallel" batch axis can shard across
    # both TensorCores on v7x; otherwise make tiles as large as allowed.
    return min(tile_max, _round_up(pl.cdiv(B, 2), sublane))


def _disc_kernel(z_ref, w1_ref, b1_ref, w2_ref, b2_ref, w3_ref, b3_ref, out_ref):
    # ---- Linear(2048,512) with eval-mode BatchNorm folded into (w1, b1) ----
    # z arrives already cast to the weight dtype (bf16 fast path / f32 parity).
    h = jnp.dot(z_ref[...], w1_ref[...], preferred_element_type=jnp.float32) + b1_ref[...]
    h = jnp.maximum(h, 0.0)                      # Dropout(0.3) -> identity (eval); ReLU

    # ---- Linear(512, 32) ----
    m = jnp.dot(h.astype(w2_ref.dtype), w2_ref[...],
                preferred_element_type=jnp.float32) + b2_ref[...]
    m = jnp.maximum(m, 0.0)                      # Dropout(0.3) -> identity; ReLU

    # ---- layer1: Linear(32, 2) + Sigmoid (tiny; negligible cost) ----
    logits = jnp.dot(m, w3_ref[...], preferred_element_type=jnp.float32) + b3_ref[...]
    preds = jax.nn.sigmoid(logits)

    # Single lane-dense output block: [maps | preds | zero pad] -> one DMA/step.
    out_ref[...] = jnp.zeros_like(out_ref)
    out_ref[:, 0:MAPS] = m.astype(out_ref.dtype)
    out_ref[:, MAPS:MAPS + OUT] = preds.astype(out_ref.dtype)


def fold_params(params, use_bf16_weights=True):
    """One-time prep (hoisted off the hot path): fold eval-mode BN into the first
    Linear (exact affine fold) and cast the large weights to bf16."""
    scale = params["gamma"] * lax.rsqrt(params["running_var"] + BN_EPS)      # (1, HID)
    w1 = params["w1"] * scale                                                # (IN, HID)
    b1 = (params["b1"] - params["running_mean"]) * scale + params["beta"]    # (1, HID)
    w2, b2 = params["w2"], params["b2"]
    w3, b3 = params["w3"], params["b3"]
    if use_bf16_weights:
        # Halves HBM weight traffic; MXU takes bf16 natively, accumulation stays f32.
        # TODO(synk): on v7x an fp8 w1 (values + per-output-column f32 scale applied
        #             after the first dot) would halve the weight-bound small-batch
        #             latency again; kept bf16 for portability across v5e/v6e/v7x.
        w1 = w1.astype(jnp.bfloat16)
        w2 = w2.astype(jnp.bfloat16)
    return dict(w1=w1, b1=b1, w2=w2, b2=b2, w3=w3, b3=b3)


@jax.jit
def discriminator_forward(z_s, folded):
    """z_s: (B, 512, 2, 2) or (B, 2048). Returns (maps (B,32), preds (B,2))."""
    B = z_s.shape[0]
    w1, b1 = folded["w1"], folded["b1"]
    w2, b2 = folded["w2"], folded["b2"]
    w3, b3 = folded["w3"], folded["b3"]

    # Host/producer-side cast: feed z in the weight dtype (bf16 on the fast path
    # -> halves the dominant z HBM stream into the kernel).
    z = z_s.reshape(B, IN_FEAT).astype(w1.dtype)
    is_bf16 = z.dtype == jnp.bfloat16
    sublane = 16 if is_bf16 else 8
    tile_max = 2048 if is_bf16 else 1024

    tile_b = _pick_tile_b(B, sublane, tile_max)
    n_tiles = pl.cdiv(B, tile_b)          # ragged last block handled by Pallas; no pad copy

    # Right-sized VMEM budget (~30% headroom), clamped to physical VMEM (v7x: 64 MiB/TC).
    z_bytes = jnp.dtype(z.dtype).itemsize
    w_bytes = jnp.dtype(w1.dtype).itemsize
    vmem_bytes = int(1.3 * (
        2 * tile_b * IN_FEAT * z_bytes                 # double-buffered z tiles
        + 2 * tile_b * PAD_LANES * 4                   # double-buffered merged output tiles
        + IN_FEAT * HID * w_bytes                      # resident w1
        + HID * MAPS * w_bytes                         # resident w2
        + MAPS * OUT * 4                               # resident w3
        + (HID + MAPS + OUT) * 4                       # biases
        + tile_b * (HID + PAD_LANES) * 4               # in-kernel f32 intermediates
    ))
    vmem_bytes = max(vmem_bytes, 8 << 20)
    vmem_bytes = min(vmem_bytes, _physical_vmem_bytes() - (4 << 20))

    resident = lambda i: (0, 0)   # weights/biases: same block every step -> stay VMEM-resident

    out = pl.pallas_call(
        _disc_kernel,
        out_shape=jax.ShapeDtypeStruct((B, PAD_LANES), jnp.float32),
        grid=(n_tiles,),
        in_specs=[
            pl.BlockSpec((tile_b, IN_FEAT), lambda i: (i, 0)),   # z (batch-tiled)
            pl.BlockSpec((IN_FEAT, HID), resident),              # w1 (BN-folded)
            pl.BlockSpec((1, HID), resident),                    # b1 (BN-folded)
            pl.BlockSpec((HID, MAPS), resident),                 # w2
            pl.BlockSpec((1, MAPS), resident),                   # b2
            pl.BlockSpec((MAPS, OUT), resident),                 # w3
            pl.BlockSpec((1, OUT), resident),                    # b3
        ],
        out_specs=pl.BlockSpec((tile_b, PAD_LANES), lambda i: (i, 0)),
        compiler_params=pltpu.CompilerParams(
            dimension_semantics=("parallel",),
            vmem_limit_bytes=vmem_bytes,
        ),
    )(z, w1, b1, w2, b2, w3, b3)

    maps = out[:, :MAPS]
    preds = out[:, MAPS:MAPS + OUT]
    return maps, preds


def discriminator_reference(z_s, params):
    """Pure-JAX reference (inference semantics), high-precision matmuls."""
    B = z_s.shape[0]
    z = z_s.reshape(B, IN_FEAT).astype(jnp.float32)
    hp = lax.Precision.HIGHEST
    h = jnp.dot(z, params["w1"], precision=hp) + params["b1"]
    inv_std = lax.rsqrt(params["running_var"] + BN_EPS)
    h = (h - params["running_mean"]) * inv_std * params["gamma"] + params["beta"]
    h = jnp.maximum(h, 0.0)
    m = jnp.dot(h, params["w2"], precision=hp) + params["b2"]
    m = jnp.maximum(m, 0.0)
    logits = jnp.dot(m, params["w3"], precision=hp) + params["b3"]
    return m, jax.nn.sigmoid(logits)


def init_params(key):
    """Deterministic init mirroring PyTorch Linear default (U[-1/sqrt(fan_in), +1/sqrt(fan_in)]).
    Weights stored as [in, out] (transposed vs. torch's [out, in])."""
    ks = jax.random.split(key, 6)

    def lin(kw, kb, fan_in, fan_out):
        bound = 1.0 / jnp.sqrt(jnp.float32(fan_in))
        w = jax.random.uniform(kw, (fan_in, fan_out), jnp.float32, -bound, bound)
        b = jax.random.uniform(kb, (1, fan_out), jnp.float32, -bound, bound)
        return w, b

    w1, b1 = lin(ks[0], ks[1], IN_FEAT, HID)
    w2, b2 = lin(ks[2], ks[3], HID, MAPS)
    w3, b3 = lin(ks[4], ks[5], MAPS, OUT)

    return dict(
        w1=w1, b1=b1,
        gamma=jnp.ones((1, HID), jnp.float32),
        beta=jnp.zeros((1, HID), jnp.float32),
        running_mean=jnp.zeros((1, HID), jnp.float32),
        running_var=jnp.ones((1, HID), jnp.float32),
        w2=w2, b2=b2,
        w3=w3, b3=b3,
    )


if __name__ == "__main__":
    key = jax.random.PRNGKey(0)
    k_param, k_in = jax.random.split(key)

    params = init_params(k_param)
    # Input consistent with the module's view(B, 512*2*2): (B, 512, 2, 2)
    B = 32
    z_s = jax.random.normal(k_in, (B, 512, 2, 2), jnp.float32)

    ref_maps, ref_preds = discriminator_reference(z_s, params)

    # f32 parity path
    folded_f32 = fold_params(params, use_bf16_weights=False)
    maps32, preds32 = discriminator_forward(z_s, folded_f32)
    jax.block_until_ready((maps32, preds32))
    assert bool(jnp.allclose(maps32, ref_maps, atol=2e-3, rtol=2e-3))
    assert bool(jnp.allclose(preds32, ref_preds, atol=2e-3, rtol=2e-3))

    # bf16 fast path (default): bf16 z + bf16 weights, f32 MXU accumulation
    folded = fold_params(params, use_bf16_weights=True)
    maps, preds = discriminator_forward(z_s, folded)
    jax.block_until_ready((maps, preds))

    assert maps.shape == (B, MAPS) and preds.shape == (B, OUT)
    assert bool(jnp.all(jnp.isfinite(maps))) and bool(jnp.all(jnp.isfinite(preds)))
    assert bool(jnp.all((preds >= 0.0) & (preds <= 1.0)))
    assert bool(jnp.allclose(maps, ref_maps, atol=5e-2))
    assert bool(jnp.allclose(preds, ref_preds, atol=5e-2))
    print("KERNEL_OK")
</pallas_src>

<mosaic_0001>
module attributes {stable_mosaic.version = 11 : i64} {
  func.func @_disc_kernel(%arg0: i32, %arg1: memref<16x2048xf32, #tpu.memory_space<vmem>>, %arg2: memref<2048x512xf32, #tpu.memory_space<vmem>>, %arg3: memref<1x512xf32, #tpu.memory_space<vmem>>, %arg4: memref<512x32xf32, #tpu.memory_space<vmem>>, %arg5: memref<1x32xf32, #tpu.memory_space<vmem>>, %arg6: memref<32x2xf32, #tpu.memory_space<vmem>>, %arg7: memref<1x2xf32, #tpu.memory_space<vmem>>, %arg8: memref<16x128xf32, #tpu.memory_space<vmem>>) attributes {dimension_semantics = [#tpu.dimension_semantics<parallel>], iteration_bounds = array<i64: 2>, scalar_prefetch = 0 : i64, scratch_operands = 0 : i64, tpu.core_type = #tpu.core_type<tc>, window_params = [{transform_indices = @transform_0, window_bounds = array<i64: 16, 2048>}, {pipeline_mode = #tpu.pipeline_mode<synchronous>, transform_indices = @transform_1, window_bounds = array<i64: 2048, 512>}, {pipeline_mode = #tpu.pipeline_mode<synchronous>, transform_indices = @transform_2, window_bounds = array<i64: 1, 512>}, {pipeline_mode = #tpu.pipeline_mode<synchronous>, transform_indices = @transform_3, window_bounds = array<i64: 512, 32>}, {pipeline_mode = #tpu.pipeline_mode<synchronous>, transform_indices = @transform_4, window_bounds = array<i64: 1, 32>}, {pipeline_mode = #tpu.pipeline_mode<synchronous>, transform_indices = @transform_5, window_bounds = array<i64: 32, 2>}, {pipeline_mode = #tpu.pipeline_mode<synchronous>, transform_indices = @transform_6, window_bounds = array<i64: 1, 2>}, {transform_indices = @transform_7, window_bounds = array<i64: 16, 128>}]} {
    %c0 = arith.constant 0 : index
    %c0_0 = arith.constant 0 : index
    %0 = vector.load %arg1[%c0, %c0_0] : memref<16x2048xf32, #tpu.memory_space<vmem>>, vector<16x2048xf32>
    %c0_1 = arith.constant 0 : index
    %c0_2 = arith.constant 0 : index
    %1 = vector.load %arg2[%c0_1, %c0_2] : memref<2048x512xf32, #tpu.memory_space<vmem>>, vector<2048x512xf32>
    %cst = arith.constant dense<0.000000e+00> : vector<16x512xf32>
    %2 = tpu.matmul %0, %1, %cst {dimension_numbers = #tpu.dot_dimension_numbers<[1], [0], [0], [1], [0, 0, 1, 1], [], []>} : vector<16x2048xf32>, vector<2048x512xf32>, vector<16x512xf32> -> vector<16x512xf32>
    %c0_3 = arith.constant 0 : index
    %c0_4 = arith.constant 0 : index
    %3 = vector.load %arg3[%c0_3, %c0_4] : memref<1x512xf32, #tpu.memory_space<vmem>>, vector<1x512xf32>
    %4 = vector.broadcast %3 : vector<1x512xf32> to vector<16x512xf32>
    %5 = arith.addf %2, %4 : vector<16x512xf32>
    %cst_5 = arith.constant 0.000000e+00 : f32
    %6 = vector.broadcast %cst_5 : f32 to vector<16x512xf32>
    %7 = arith.maximumf %5, %6 : vector<16x512xf32>
    %c0_6 = arith.constant 0 : index
    %c0_7 = arith.constant 0 : index
    %8 = vector.load %arg4[%c0_6, %c0_7] : memref<512x32xf32, #tpu.memory_space<vmem>>, vector<512x32xf32>
    %cst_8 = arith.constant dense<0.000000e+00> : vector<16x32xf32>
    %9 = tpu.matmul %7, %8, %cst_8 {dimension_numbers = #tpu.dot_dimension_numbers<[1], [0], [0], [1], [0, 0, 1, 1], [], []>} : vector<16x512xf32>, vector<512x32xf32>, vector<16x32xf32> -> vector<16x32xf32>
    %c0_9 = arith.constant 0 : index
    %c0_10 = arith.constant 0 : index
    %10 = vector.load %arg5[%c0_9, %c0_10] : memref<1x32xf32, #tpu.memory_space<vmem>>, vector<1x32xf32>
    %11 = vector.broadcast %10 : vector<1x32xf32> to vector<16x32xf32>
    %12 = arith.addf %9, %11 : vector<16x32xf32>
    %cst_11 = arith.constant 0.000000e+00 : f32
    %13 = vector.broadcast %cst_11 : f32 to vector<16x32xf32>
    %14 = arith.maximumf %12, %13 : vector<16x32xf32>
    %c0_12 = arith.constant 0 : index
    %c0_13 = arith.constant 0 : index
    %15 = vector.load %arg6[%c0_12, %c0_13] : memref<32x2xf32, #tpu.memory_space<vmem>>, vector<32x2xf32>
    %cst_14 = arith.constant dense<0.000000e+00> : vector<16x2xf32>
    %16 = tpu.matmul %14, %15, %cst_14 {dimension_numbers = #tpu.dot_dimension_numbers<[1], [0], [0], [1], [0, 0, 1, 1], [], []>} : vector<16x32xf32>, vector<32x2xf32>, vector<16x2xf32> -> vector<16x2xf32>
    %c0_15 = arith.constant 0 : index
    %c0_16 = arith.constant 0 : index
    %17 = vector.load %arg7[%c0_15, %c0_16] : memref<1x2xf32, #tpu.memory_space<vmem>>, vector<1x2xf32>
    %18 = vector.broadcast %17 : vector<1x2xf32> to vector<16x2xf32>
    %19 = arith.addf %16, %18 : vector<16x2xf32>
    %20 = arith.negf %19 : vector<16x2xf32>
    %21 = math.exp %20 : vector<16x2xf32>
    %cst_17 = arith.constant 1.000000e+00 : f32
    %22 = vector.broadcast %cst_17 : f32 to vector<16x2xf32>
    %23 = arith.addf %22, %21 : vector<16x2xf32>
    %24 = arith.divf %22, %23 : vector<16x2xf32>
    %cst_18 = arith.constant 0.000000e+00 : f32
    %25 = vector.broadcast %cst_18 : f32 to vector<16x128xf32>
    %c0_19 = arith.constant 0 : index
    %c0_20 = arith.constant 0 : index
    %26 = vector.load %arg8[%c0_19, %c0_20] : memref<16x128xf32, #tpu.memory_space<vmem>>, vector<16x128xf32>
    tpu.vector_store %arg8[%c0_19, %c0_20], %25 {strides = array<i32>} : memref<16x128xf32, #tpu.memory_space<vmem>>, vector<16x128xf32>,
    %c0_21 = arith.constant 0 : index
    %c0_22 = arith.constant 0 : index
    %27 = vector.load %arg8[%c0_21, %c0_22] : memref<16x128xf32, #tpu.memory_space<vmem>>, vector<16x32xf32>
    tpu.vector_store %arg8[%c0_21, %c0_22], %14 {strides = array<i32>} : memref<16x128xf32, #tpu.memory_space<vmem>>, vector<16x32xf32>,
    %c0_23 = arith.constant 0 : index
    %c32 = arith.constant 32 : index
    %28 = vector.load %arg8[%c0_23, %c32] : memref<16x128xf32, #tpu.memory_space<vmem>>, vector<16x2xf32>
    tpu.vector_store %arg8[%c0_23, %c32], %24 {strides = array<i32>} : memref<16x128xf32, #tpu.memory_space<vmem>>, vector<16x2xf32>,
    return
  }
  func.func @transform_0(%arg0: i32) -> (i32, i32) {
    %c0_i32 = arith.constant 0 : i32
    %c0_i32_0 = arith.constant 0 : i32
    return %arg0, %c0_i32 : i32, i32
  }
  func.func @transform_1(%arg0: i32) -> (i32, i32) {
    %c0_i32 = arith.constant 0 : i32
    %c0_i32_0 = arith.constant 0 : i32
    %c0_i32_1 = arith.constant 0 : i32
    return %c0_i32, %c0_i32_0 : i32, i32
  }
  func.func @transform_2(%arg0: i32) -> (i32, i32) {
    %c0_i32 = arith.constant 0 : i32
    %c0_i32_0 = arith.constant 0 : i32
    %c0_i32_1 = arith.constant 0 : i32
    return %c0_i32, %c0_i32_0 : i32, i32
  }
  func.func @transform_3(%arg0: i32) -> (i32, i32) {
    %c0_i32 = arith.constant 0 : i32
    %c0_i32_0 = arith.constant 0 : i32
    %c0_i32_1 = arith.constant 0 : i32
    return %c0_i32, %c0_i32_0 : i32, i32
  }
  func.func @transform_4(%arg0: i32) -> (i32, i32) {
    %c0_i32 = arith.constant 0 : i32
    %c0_i32_0 = arith.constant 0 : i32
    %c0_i32_1 = arith.constant 0 : i32
    return %c0_i32, %c0_i32_0 : i32, i32
  }
  func.func @transform_5(%arg0: i32) -> (i32, i32) {
    %c0_i32 = arith.constant 0 : i32
    %c0_i32_0 = arith.constant 0 : i32
    %c0_i32_1 = arith.constant 0 : i32
    return %c0_i32, %c0_i32_0 : i32, i32
  }
  func.func @transform_6(%arg0: i32) -> (i32, i32) {
    %c0_i32 = arith.constant 0 : i32
    %c0_i32_0 = arith.constant 0 : i32
    %c0_i32_1 = arith.constant 0 : i32
    return %c0_i32, %c0_i32_0 : i32, i32
  }
  func.func @transform_7(%arg0: i32) -> (i32, i32) {
    %c0_i32 = arith.constant 0 : i32
    %c0_i32_0 = arith.constant 0 : i32
    return %arg0, %c0_i32 : i32, i32
  }
}

</mosaic_0001>

<llo_original>
// kernel: discriminator_forward.1
$region0: #{discriminator_forward.1}
  #allocation0 [shape = 'u32[]', space=smem, size = 0x4, offset = 0x4, fixed_abs, tag = 'smem constant byte address 0x4 - core index']
  #allocation1 [shape = 'u32[72,128]{1,0:T(1,128)}', space=vmem, size = 0x9000, scoped, tag = 'internal scratch']
  %s0 = inlined_call_operand.vmem [shape: f32[32,2048], index: 0, kind: input, shape index: {}]
  %s1 = inlined_call_operand.hbm [shape: f32[2048,512], index: 1, kind: input, shape index: {}]
  %s2 = inlined_call_operand.hbm [shape: f32[1,512], index: 2, kind: input, shape index: {}]
  %s3 = inlined_call_operand.vmem [shape: f32[512,32], index: 3, kind: input, shape index: {}]
  %s4 = inlined_call_operand.hbm [shape: f32[1,32], index: 4, kind: input, shape index: {}]
  %s5 = inlined_call_operand.vmem [shape: f32[32,2], index: 5, kind: input, shape index: {}]
  %s6 = inlined_call_operand.hbm [shape: f32[1,2], index: 6, kind: input, shape index: {}]
  %s7 = inlined_call_operand.vmem [shape: f32[32,128], index: 7, kind: output, shape index: {}]
  %s8 = sld [smem:[#allocation0]]
  $region77: #{discriminator_forward.1} parent=0
    _
  %s10 = ssub.s32 1, %s8
  %s11 = scalar_select 0, %s10, %s8
  $region1: #{discriminator_forward.1} parent=0
    #allocation2 [shape = 'u8[4194304]{0}', space=vmem, size = 0x400000, scoped, tag = 'input window, operand 1, single buffered']
    #allocation3 [shape = 's32[2]{0}', space=sflag, size = 0x8, scoped, tag = 'scoped memory for discriminator_forward.1']
    #allocation4 [shape = 'u8[2048]{0}', space=vmem, size = 0x800, scoped, tag = 'input window, operand 2, single buffered']
    #allocation5 [shape = 's32[1]{0}', space=sflag, size = 0x4, scoped, tag = 'scoped memory for discriminator_forward.1']
    #allocation6 [shape = 'u8[512]{0}', space=vmem, size = 0x400, scoped, tag = 'input window, operand 4, single buffered']
    #allocation7 [shape = 'u8[512]{0}', space=vmem, size = 0x400, scoped, tag = 'input window, operand 6, single buffered']
    #allocation8 [shape = 's32[1]{0}', space=sflag, size = 0x4, scoped, tag = 'scoped memory for discriminator_forward.1']
    %12 = vsyncpa [#allocation3], 0
    %13 = vsyncpa [#allocation5], 0
    %14 = vsyncpa [#allocation8], 0
    loop: start=0, step=1, limit=4
    $region2: #{discriminator_forward.1} parent=1 // loop_pre_header
      _
    $region3: #{discriminator_forward.1} parent=1 // loop_header
      %s16 = sphi 0, %s20
      %p17 = scmp.ge.s32.totalorder %s16, 4
      %s26 = sphi 0, %s28
      %s29 = sphi 0, %s26
      %s30 = sphi 0, %s29
      %s46 = sphi 0, %s30
      %s50 = sphi 0, %s50
      %s52 = sphi 0, %s50
      %s53 = sphi 0, %s52
      %s67 = sphi 0, %s53
      %s71 = sphi 0, %s71
      %s73 = sphi 0, %s71
      %s74 = sphi 0, %s73
      %s88 = sphi 0, %s74
      %s92 = sphi 0, %s92
      %s94 = sphi 0, %s92
      %s95 = sphi 0, %s94
      %s109 = sphi 0, %s95
      %s113 = sphi 0, %s113
      %s115 = sphi 0, %s113
      %s116 = sphi 0, %s115
      %s130 = sphi 0, %s116
      %s134 = sphi 0, %s134
      %s136 = sphi 0, %s134
      %s137 = sphi 0, %s136
      %s151 = sphi 0, %s137
      %s155 = sphi 0, %s155
      %s157 = sphi 0, %s155
      %s158 = sphi 0, %s157
      %s172 = sphi 0, %s158
      %s178 = sphi 0, %s180
      %s181 = sphi 0, %s178
      %s182 = sphi 0, %s181
      %s198 = sphi 0, %s182
    $region4: #{discriminator_forward.1} parent=1 // loop_header_branch
      %19 = sbr.rel (%p17) target = $region8
    $region5: #{discriminator_forward.1} parent=1 // loop_body
      %s21 = ssub.s32 %s16, 1
      %s22 = ssub.s32 %s16, 2
      %s23 = sadd.s32 %s16, 1
      %s24 = ssub.s32 %s16, %s23
      %p25 = scmp.eq.s32.totalorder %s24, 0
      %s27 = sadd.s32 %s26, 1
      %s28 = scalar_select %p25, %s26, %s27
      %p31 = pneg %p25
      %p32 = scmp.eq.s32.totalorder %s16, 1
      %p33 = por %p31, %p32
      %p34 = scmp.ne.s32.totalorder %s26, %s29
      %p35 = scmp.eq.s32.totalorder %s16, 0
      %p36 = por %p34, %p35
      %p37 = scmp.ne.s32.totalorder %s26, %s29
      %p38 = scmp.eq.s32.totalorder %s21, 1
      %p39 = por %p37, %p38
      %p40 = scmp.ne.s32.totalorder %s29, %s30
      %p41 = scmp.eq.s32.totalorder %s21, 0
      %p42 = por %p40, %p41
      %p43 = scmp.ne.s32.totalorder %s29, %s30
      %p44 = scmp.eq.s32.totalorder %s22, 1
      %p45 = por %p43, %p44
      %p47 = scmp.ne.s32.totalorder %s30, %s46
      %p48 = scmp.eq.s32.totalorder %s22, 0
      %p49 = por %p47, %p48
      %s51 = sadd.s32 %s50, 1
      %p54 = scmp.eq.s32.totalorder %s16, 1
      %p55 = scmp.ne.s32.totalorder %s50, %s52
      %p56 = scmp.eq.s32.totalorder %s16, 0
      %p57 = por %p55, %p56
      %p58 = scmp.ne.s32.totalorder %s50, %s52
      %p59 = scmp.eq.s32.totalorder %s21, 1
      %p60 = por %p58, %p59
      %p61 = scmp.ne.s32.totalorder %s52, %s53
      %p62 = scmp.eq.s32.totalorder %s21, 0
      %p63 = por %p61, %p62
      %p64 = scmp.ne.s32.totalorder %s52, %s53
      %p65 = scmp.eq.s32.totalorder %s22, 1
      %p66 = por %p64, %p65
      %p68 = scmp.ne.s32.totalorder %s53, %s67
      %p69 = scmp.eq.s32.totalorder %s22, 0
      %p70 = por %p68, %p69
      %s72 = sadd.s32 %s71, 1
      %p75 = scmp.eq.s32.totalorder %s16, 1
      %p76 = scmp.ne.s32.totalorder %s71, %s73
      %p77 = scmp.eq.s32.totalorder %s16, 0
      %p78 = por %p76, %p77
      %p79 = scmp.ne.s32.totalorder %s71, %s73
      %p80 = scmp.eq.s32.totalorder %s21, 1
      %p81 = por %p79, %p80
      %p82 = scmp.ne.s32.totalorder %s73, %s74
      %p83 = scmp.eq.s32.totalorder %s21, 0
      %p84 = por %p82, %p83
      %p85 = scmp.ne.s32.totalorder %s73, %s74
      %p86 = scmp.eq.s32.totalorder %s22, 1
      %p87 = por %p85, %p86
      %p89 = scmp.ne.s32.totalorder %s74, %s88
      %p90 = scmp.eq.s32.totalorder %s22, 0
      %p91 = por %p89, %p90
      %s93 = sadd.s32 %s92, 1
      %p96 = scmp.eq.s32.totalorder %s16, 1
      %p97 = scmp.ne.s32.totalorder %s92, %s94
      %p98 = scmp.eq.s32.totalorder %s16, 0
      %p99 = por %p97, %p98
      %p100 = scmp.ne.s32.totalorder %s92, %s94
      %p101 = scmp.eq.s32.totalorder %s21, 1
      %p102 = por %p100, %p101
      %p103 = scmp.ne.s32.totalorder %s94, %s95
      %p104 = scmp.eq.s32.totalorder %s21, 0
      %p105 = por %p103, %p104
      %p106 = scmp.ne.s32.totalorder %s94, %s95
      %p107 = scmp.eq.s32.totalorder %s22, 1
      %p108 = por %p106, %p107
      %p110 = scmp.ne.s32.totalorder %s95, %s109
      %p111 = scmp.eq.s32.totalorder %s22, 0
      %p112 = por %p110, %p111
      %s114 = sadd.s32 %s113, 1
      %p117 = scmp.eq.s32.totalorder %s16, 1
      %p118 = scmp.ne.s32.totalorder %s113, %s115
      %p119 = scmp.eq.s32.totalorder %s16, 0
      %p120 = por %p118, %p119
      %p121 = scmp.ne.s32.totalorder %s113, %s115
      %p122 = scmp.eq.s32.totalorder %s21, 1
      %p123 = por %p121, %p122
      %p124 = scmp.ne.s32.totalorder %s115, %s116
      %p125 = scmp.eq.s32.totalorder %s21, 0
      %p126 = por %p124, %p125
      %p127 = scmp.ne.s32.totalorder %s115, %s116
      %p128 = scmp.eq.s32.totalorder %s22, 1
      %p129 = por %p127, %p128
      %p131 = scmp.ne.s32.totalorder %s116, %s130
      %p132 = scmp.eq.s32.totalorder %s22, 0
      %p133 = por %p131, %p132
      %s135 = sadd.s32 %s134, 1
      %p138 = scmp.eq.s32.totalorder %s16, 1
      %p139 = scmp.ne.s32.totalorder %s134, %s136
      %p140 = scmp.eq.s32.totalorder %s16, 0
      %p141 = por %p139, %p140
      %p142 = scmp.ne.s32.totalorder %s134, %s136
      %p143 = scmp.eq.s32.totalorder %s21, 1
      %p144 = por %p142, %p143
      %p145 = scmp.ne.s32.totalorder %s136, %s137
      %p146 = scmp.eq.s32.totalorder %s21, 0
      %p147 = por %p145, %p146
      %p148 = scmp.ne.s32.totalorder %s136, %s137
      %p149 = scmp.eq.s32.totalorder %s22, 1
      %p150 = por %p148, %p149
      %p152 = scmp.ne.s32.totalorder %s137, %s151
      %p153 = scmp.eq.s32.totalorder %s22, 0
      %p154 = por %p152, %p153
      %s156 = sadd.s32 %s155, 1
      %p159 = scmp.eq.s32.totalorder %s16, 1
      %p160 = scmp.ne.s32.totalorder %s155, %s157
      %p161 = scmp.eq.s32.totalorder %s16, 0
      %p162 = por %p160, %p161
      %p163 = scmp.ne.s32.totalorder %s155, %s157
      %p164 = scmp.eq.s32.totalorder %s21, 1
      %p165 = por %p163, %p164
      %p166 = scmp.ne.s32.totalorder %s157, %s158
      %p167 = scmp.eq.s32.totalorder %s21, 0
      %p168 = por %p166, %p167
      %p169 = scmp.ne.s32.totalorder %s157, %s158
      %p170 = scmp.eq.s32.totalorder %s22, 1
      %p171 = por %p169, %p170
      %p173 = scmp.ne.s32.totalorder %s158, %s172
      %p174 = scmp.eq.s32.totalorder %s22, 0
      %p175 = por %p173, %p174
      %s176 = ssub.s32 %s16, %s23
      %p177 = scmp.eq.s32.totalorder %s176, 0
      %s179 = sadd.s32 %s178, 1
      %s180 = scalar_select %p177, %s178, %s179
      %p183 = pneg %p177
      %p184 = scmp.eq.s32.totalorder %s16, 1
      %p185 = por %p183, %p184
      %p186 = scmp.ne.s32.totalorder %s178, %s181
      %p187 = scmp.eq.s32.totalorder %s16, 0
      %p188 = por %p186, %p187
      %p189 = scmp.ne.s32.totalorder %s178, %s181
      %p190 = scmp.eq.s32.totalorder %s21, 1
      %p191 = por %p189, %p190
      %p192 = scmp.ne.s32.totalorder %s181, %s182
      %p193 = scmp.eq.s32.totalorder %s21, 0
      %p194 = por %p192, %p193
      %p195 = scmp.ne.s32.totalorder %s181, %s182
      %p196 = scmp.eq.s32.totalorder %s22, 1
      %p197 = por %p195, %p196
      %p199 = scmp.ne.s32.totalorder %s182, %s198
      %p200 = scmp.eq.s32.totalorder %s22, 0
      %p201 = por %p199, %p200
      %p202 = scmp.le.s32.totalorder 1, %s16
      %p203 = scmp.lt.s32.totalorder %s16, 3
      %p204 = pnand %p202, %p203
      %p205 = pneg %p204
      // Predicated region
      $region9: #{discriminator_forward.1} parent=5 // pred_check
        _
      $region10: #{discriminator_forward.1} parent=5 // pred_check_branch
        %207 = sbr.rel (%p204) target = $region12
      $region11: #{discriminator_forward.1} parent=5 // pred_region
        %s208 = ssub.s32 %s16, 1
        // Predicated region
        $region13: #{discriminator_forward.1} parent=11 // pred_check
          %p209 = pneg %p63
        $region14: #{discriminator_forward.1} parent=11 // pred_check_branch
          %211 = sbr.rel (%p209) target = $region16
        $region15: #{discriminator_forward.1} parent=11 // pred_region
          %213 = vsyncadd [#allocation3], 0
          %s214 = sshll.u32 %s1, 4
          %s215 = int_to_ptr.hbm [resolvable:$true] %s214
          %s216 = sshll.u32 [#allocation2], 4
          %s217 = int_to_ptr.vmem [resolvable:$true] %s216
          %222 = dma.hbm_to_vmem [thread:$0]  %s215, 131072, %s217, [#allocation3], 512, 512, 32
        $region16: #{discriminator_forward.1} parent=11 // pred_fallthru
          _
        // Predicated region
        $region17: #{discriminator_forward.1} parent=11 // pred_check
          %p223 = pneg %p84
        $region18: #{discriminator_forward.1} parent=11 // pred_check_branch
          %225 = sbr.rel (%p223) target = $region20
        $region19: #{discriminator_forward.1} parent=11 // pred_region
          %227 = vsyncadd [#allocation5], 0
          %s229 = sshll.u32 %s2, 4
          %s230 = int_to_ptr.hbm [resolvable:$true] %s229
          %s231 = sshll.u32 [#allocation4], 4
          %s232 = int_to_ptr.vmem [resolvable:$true] %s231
          %234 = dma.hbm_to_vmem [thread:$0]  %s230, 64, %s232, [#allocation5]
        $region20: #{discriminator_forward.1} parent=11 // pred_fallthru
          _
        // Predicated region
        $region21: #{discriminator_forward.1} parent=11 // pred_check
          %p235 = pneg %p105
        $region22: #{discriminator_forward.1} parent=11 // pred_check_branch
          %237 = sbr.rel (%p235) target = $region24
        $region23: #{discriminator_forward.1} parent=11 // pred_region
          _
        $region24: #{discriminator_forward.1} parent=11 // pred_fallthru
          _
        // Predicated region
        $region25: #{discriminator_forward.1} parent=11 // pred_check
          %p238 = pneg %p126
        $region26: #{discriminator_forward.1} parent=11 // pred_check_branch
          %240 = sbr.rel (%p238) target = $region28
        $region27: #{discriminator_forward.1} parent=11 // pred_region
          %242 = vsyncadd [#allocation5], 0
          %s244 = sshll.u32 %s4, 4
          %s245 = int_to_ptr.hbm [resolvable:$true] %s244
          %s246 = sshll.u32 [#allocation6], 4
          %s247 = int_to_ptr.vmem [resolvable:$true] %s246
          %249 = dma.hbm_to_vmem [thread:$0]  %s245, 16, %s247, [#allocation5]
        $region28: #{discriminator_forward.1} parent=11 // pred_fallthru
          _
        // Predicated region
        $region29: #{discriminator_forward.1} parent=11 // pred_check
          %p250 = pneg %p147
        $region30: #{discriminator_forward.1} parent=11 // pred_check_branch
          %252 = sbr.rel (%p250) target = $region32
        $region31: #{discriminator_forward.1} parent=11 // pred_region
          _
        $region32: #{discriminator_forward.1} parent=11 // pred_fallthru
          _
        // Predicated region
        $region33: #{discriminator_forward.1} parent=11 // pred_check
          %p253 = pneg %p168
        $region34: #{discriminator_forward.1} parent=11 // pred_check_branch
          %255 = sbr.rel (%p253) target = $region36
        $region35: #{discriminator_forward.1} parent=11 // pred_region
          %257 = vsyncadd [#allocation8], 0
          %s259 = sshll.u32 %s6, 4
          %s260 = int_to_ptr.hbm [resolvable:$true] %s259
          %s261 = sshll.u32 [#allocation7], 4
          %s262 = int_to_ptr.vmem [resolvable:$true] %s261
          %264 = dma.hbm_to_vmem [thread:$0]  %s260, 16, %s262, [#allocation8]
        $region36: #{discriminator_forward.1} parent=11 // pred_fallthru
          _
      $region12: #{discriminator_forward.1} parent=5 // pred_fallthru
        _
      %p265 = scmp.lt.s32.totalorder %s16, 2
      // Predicated region
      $region37: #{discriminator_forward.1} parent=5 // pred_check
        %p266 = pneg %p265
      $region38: #{discriminator_forward.1} parent=5 // pred_check_branch
        %268 = sbr.rel (%p266) target = $region40
      $region39: #{discriminator_forward.1} parent=5 // pred_region
        // Predicated region
        $region41: #{discriminator_forward.1} parent=39 // pred_check
          %p269 = pneg %p36
        $region42: #{discriminator_forward.1} parent=39 // pred_check_branch
          %271 = sbr.rel (%p269) target = $region44
        $region43: #{discriminator_forward.1} parent=39 // pred_region
          %s272 = smul.u32 2, %s16
          %p273 = scmp.lt.s32.totalorder %s272, 3
          %s274 = scalar_select %p273, %s272, 3
          %s275 = smul.addr %s274, 16
          %s276 = smul.addr %s275, 8
          %s277 = scalar_lea.vmem %s0, %s276
          %s278 = smul.u32 2, %s16
        $region44: #{discriminator_forward.1} parent=39 // pred_fallthru
          _
      $region40: #{discriminator_forward.1} parent=5 // pred_fallthru
        _
      %p279 = scmp.le.s32.totalorder 1, %s16
      %p280 = scmp.lt.s32.totalorder %s16, 3
      %p281 = pnand %p279, %p280
      %p282 = pneg %p281
      // Predicated region
      $region45: #{discriminator_forward.1} parent=5 // pred_check
        _
      $region46: #{discriminator_forward.1} parent=5 // pred_check_branch
        %284 = sbr.rel (%p281) target = $region48
      $region47: #{discriminator_forward.1} parent=5 // pred_region
        %s285 = ssub.s32 %s16, 1
        // Predicated region
        $region49: #{discriminator_forward.1} parent=47 // pred_check
          %p286 = pneg %p63
        $region50: #{discriminator_forward.1} parent=47 // pred_check_branch
          %288 = sbr.rel (%p286) target = $region52
        $region51: #{discriminator_forward.1} parent=47 // pred_region
          %290 = dma.done [#allocation3], 131072
        $region52: #{discriminator_forward.1} parent=47 // pred_fallthru
          _
        // Predicated region
        $region53: #{discriminator_forward.1} parent=47 // pred_check
          %p291 = pneg %p84
        $region54: #{discriminator_forward.1} parent=47 // pred_check_branch
          %293 = sbr.rel (%p291) target = $region56
        $region55: #{discriminator_forward.1} parent=47 // pred_region
          %295 = dma.done [#allocation5], 64
        $region56: #{discriminator_forward.1} parent=47 // pred_fallthru
          _
        // Predicated region
        $region57: #{discriminator_forward.1} parent=47 // pred_check
          %p296 = pneg %p126
        $region58: #{discriminator_forward.1} parent=47 // pred_check_branch
          %298 = sbr.rel (%p296) target = $region60
        $region59: #{discriminator_forward.1} parent=47 // pred_region
          %300 = dma.done [#allocation5], 16
        $region60: #{discriminator_forward.1} parent=47 // pred_fallthru
          _
        // Predicated region
        $region61: #{discriminator_forward.1} parent=47 // pred_check
          %p301 = pneg %p168
        $region62: #{discriminator_forward.1} parent=47 // pred_check_branch
          %303 = sbr.rel (%p301) target = $region64
        $region63: #{discriminator_forward.1} parent=47 // pred_region
          %305 = dma.done [#allocation8], 16
        $region64: #{discriminator_forward.1} parent=47 // pred_fallthru
          _
        %s306 = smul.u32 2, %s21
        %p307 = scmp.lt.s32.totalorder %s306, 3
        %s308 = scalar_select %p307, %s306, 3
        %s309 = smul.addr %s308, 16
        %s310 = smul.addr %s309, 8
        %s311 = scalar_lea.vmem %s0, %s310
        %p312 = pneg %p42
        %p313 = pneg %p39
        %p314 = pneg %p63
        %p315 = pneg %p60
        %p316 = pneg %p84
        %p317 = pneg %p81
        %p318 = pneg %p105
        %p319 = pneg %p102
        %p320 = pneg %p126
        %p321 = pneg %p123
        %p322 = pneg %p147
        %p323 = pneg %p144
        %p324 = pneg %p168
        %p325 = pneg %p165
        %p326 = pneg %p194
        %p327 = pneg %p191
        %s328 = smul.u32 2, %s21
        %p329 = scmp.lt.s32.totalorder %s328, 3
        %s330 = scalar_select %p329, %s328, 3
        %s331 = smul.addr %s330, 8
        %s332 = scalar_lea.vmem %s7, %s331
        %s333 = smul.u32 2, %s21
        %p334 = scmp.lt.s32.totalorder %s333, 3
        %s335 = scalar_select %p334, %s333, 3
        %s336 = smul.addr %s335, 16
        %s337 = smul.addr %s336, 8
        %s338 = scalar_lea.vmem %s0, %s337
        %s339 = smul.u32 2, %s21
        %s340 = smul.u32 2, %s21
        %p341 = scmp.lt.s32.totalorder %s340, 3
        %s342 = scalar_select %p341, %s340, 3
        %s343 = smul.addr %s342, 8
        %s344 = scalar_lea.vmem %s7, %s343
        %s345 = smul.u32 2, %s21
        %v346 = vld [vmem:[%s338] sm:$0xff]
        %v347 = vld [vmem:[%s338 + $0x8] sm:$0xff]
        %v348 = vld [vmem:[%s338 + $0x10] sm:$0xff]
        %v349 = vld [vmem:[%s338 + $0x18] sm:$0xff]
        %v350 = vld [vmem:[%s338 + $0x20] sm:$0xff]
        %v351 = vld [vmem:[%s338 + $0x28] sm:$0xff]
        %v352 = vld [vmem:[%s338 + $0x30] sm:$0xff]
        %v353 = vld [vmem:[%s338 + $0x38] sm:$0xff]
        %v354 = vld [vmem:[%s338 + $0x40] sm:$0xff]
        %v355 = vld [vmem:[%s338 + $0x48] sm:$0xff]
        %v356 = vld [vmem:[%s338 + $0x50] sm:$0xff]
        %v357 = vld [vmem:[%s338 + $0x58] sm:$0xff]
        %v358 = vld [vmem:[%s338 + $0x60] sm:$0xff]
        %v359 = vld [vmem:[%s338 + $0x68] sm:$0xff]
        %v360 = vld [vmem:[%s338 + $0x70] sm:$0xff]
        %v361 = vld [vmem:[%s338 + $0x78] sm:$0xff]
        %v362 = vld [vmem:[%s338 + $0x80] sm:$0xff]
        %v363 = vld [vmem:[%s338 + $0x88] sm:$0xff]
        %v364 = vld [vmem:[%s338 + $0x90] sm:$0xff]
        %v365 = vld [vmem:[%s338 + $0x98] sm:$0xff]
        %v366 = vld [vmem:[%s338 + $0xa0] sm:$0xff]
        %v367 = vld [vmem:[%s338 + $0xa8] sm:$0xff]
        %v368 = vld [vmem:[%s338 + $0xb0] sm:$0xff]
        %v369 = vld [vmem:[%s338 + $0xb8] sm:$0xff]
        %v370 = vld [vmem:[%s338 + $0xc0] sm:$0xff]
        %v371 = vld [vmem:[%s338 + $0xc8] sm:$0xff]
        %v372 = vld [vmem:[%s338 + $0xd0] sm:$0xff]
        %v373 = vld [vmem:[%s338 + $0xd8] sm:$0xff]
        %v374 = vld [vmem:[%s338 + $0xe0] sm:$0xff]
        %v375 = vld [vmem:[%s338 + $0xe8] sm:$0xff]
        %v376 = vld [vmem:[%s338 + $0xf0] sm:$0xff]
        %v377 = vld [vmem:[%s338 + $0xf8] sm:$0xff]
        %v378 = vld [vmem:[#allocation2] sm:$0xff]
        %v379 = vld [vmem:[#allocation2 + $0x8] sm:$0xff]
        %v380 = vld [vmem:[#allocation2 + $0x10] sm:$0xff]
        %v381 = vld [vmem:[#allocation2 + $0x18] sm:$0xff]
        %v382 = vld [vmem:[#allocation2 + $0x20] sm:$0xff]
        %v383 = vld [vmem:[#allocation2 + $0x28] sm:$0xff]
        %v384 = vld [vmem:[#allocation2 + $0x30] sm:$0xff]
        %v385 = vld [vmem:[#allocation2 + $0x38] sm:$0xff]
        %v386 = vld [vmem:[#allocation2 + $0x40] sm:$0xff]
        %v387 = vld [vmem:[#allocation2 + $0x48] sm:$0xff]
        %v388 = vld [vmem:[#allocation2 + $0x50] sm:$0xff]
        %v389 = vld [vmem:[#allocation2 + $0x58] sm:$0xff]
        %v390 = vld [vmem:[#allocation2 + $0x60] sm:$0xff]
        %v391 = vld [vmem:[#allocation2 + $0x68] sm:$0xff]
        %v392 = vld [vmem:[#allocation2 + $0x70] sm:$0xff]
        %v393 = vld [vmem:[#allocation2 + $0x78] sm:$0xff]
        %v394 = vld [vmem:[#allocation2 + $0x80] sm:$0xff]
        %v395 = vld [vmem:[#allocation2 + $0x88] sm:$0xff]
        %v396 = vld [vmem:[#allocation2 + $0x90] sm:$0xff]
        %v397 = vld [vmem:[#allocation2 + $0x98] sm:$0xff]
        %v398 = vld [vmem:[#allocation2 + $0xa0] sm:$0xff]
        %v399 = vld [vmem:[#allocation2 + $0xa8] sm:$0xff]
        %v400 = vld [vmem:[#allocation2 + $0xb0] sm:$0xff]
        %v401 = vld [vmem:[#allocation2 + $0xb8] sm:$0xff]
        %v402 = vld [vmem:[#allocation2 + $0xc0] sm:$0xff]
        %v403 = vld [vmem:[#allocation2 + $0xc8] sm:$0xff]
        %v404 = vld [vmem:[#allocation2 + $0xd0] sm:$0xff]
        %v405 = vld [vmem:[#allocation2 + $0xd8] sm:$0xff]
        %v406 = vld [vmem:[#allocation2 + $0xe0] sm:$0xff]
        %v407 = vld [vmem:[#allocation2 + $0xe8] sm:$0xff]
        %v408 = vld [vmem:[#allocation2 + $0xf0] sm:$0xff]
        %v409 = vld [vmem:[#allocation2 + $0xf8] sm:$0xff]
        %v410 = vld [vmem:[#allocation2 + $0x100] sm:$0xff]
        %v411 = vld [vmem:[#allocation2 + $0x108] sm:$0xff]
        %v412 = vld [vmem:[#allocation2 + $0x110] sm:$0xff]
        %v413 = vld [vmem:[#allocation2 + $0x118] sm:$0xff]
        %v414 = vld [vmem:[#allocation2 + $0x120] sm:$0xff]
        %v415 = vld [vmem:[#allocation2 + $0x128] sm:$0xff]
        %v416 = vld [vmem:[#allocation2 + $0x130] sm:$0xff]
        %v417 = vld [vmem:[#allocation2 + $0x138] sm:$0xff]
        %v418 = vld [vmem:[#allocation2 + $0x140] sm:$0xff]
        %v419 = vld [vmem:[#allocation2 + $0x148] sm:$0xff]
        %v420 = vld [vmem:[#allocation2 + $0x150] sm:$0xff]
        %v421 = vld [vmem:[#allocation2 + $0x158] sm:$0xff]
        %v422 = vld [vmem:[#allocation2 + $0x160] sm:$0xff]
        %v423 = vld [vmem:[#allocation2 + $0x168] sm:$0xff]
        %v424 = vld [vmem:[#allocation2 + $0x170] sm:$0xff]
        %v425 = vld [vmem:[#allocation2 + $0x178] sm:$0xff]
        %v426 = vld [vmem:[#allocation2 + $0x180] sm:$0xff]
        %v427 = vld [vmem:[#allocation2 + $0x188] sm:$0xff]
        %v428 = vld [vmem:[#allocation2 + $0x190] sm:$0xff]
        %v429 = vld [vmem:[#allocation2 + $0x198] sm:$0xff]
        %v430 = vld [vmem:[#allocation2 + $0x1a0] sm:$0xff]
        %v431 = vld [vmem:[#allocation2 + $0x1a8] sm:$0xff]
        %v432 = vld [vmem:[#allocation2 + $0x1b0] sm:$0xff]
        %v433 = vld [vmem:[#allocation2 + $0x1b8] sm:$0xff]
        %v434 = vld [vmem:[#allocation2 + $0x1c0] sm:$0xff]
        %v435 = vld [vmem:[#allocation2 + $0x1c8] sm:$0xff]
        %v436 = vld [vmem:[#allocation2 + $0x1d0] sm:$0xff]
        %v437 = vld [vmem:[#allocation2 + $0x1d8] sm:$0xff]
        %v438 = vld [vmem:[#allocation2 + $0x1e0] sm:$0xff]
        %v439 = vld [vmem:[#allocation2 + $0x1e8] sm:$0xff]
        %v440 = vld [vmem:[#allocation2 + $0x1f0] sm:$0xff]
        %v441 = vld [vmem:[#allocation2 + $0x1f8] sm:$0xff]
        %v442 = vld [vmem:[#allocation2 + $0x200] sm:$0xff]
        %v443 = vld [vmem:[#allocation2 + $0x208] sm:$0xff]
        %v444 = vld [vmem:[#allocation2 + $0x210] sm:$0xff]
        %v445 = vld [vmem:[#allocation2 + $0x218] sm:$0xff]
        %v446 = vld [vmem:[#allocation2 + $0x220] sm:$0xff]
        %v447 = vld [vmem:[#allocation2 + $0x228] sm:$0xff]
        %v448 = vld [vmem:[#allocation2 + $0x230] sm:$0xff]
        %v449 = vld [vmem:[#allocation2 + $0x238] sm:$0xff]
        %v450 = vld [vmem:[#allocation2 + $0x240] sm:$0xff]
        %v451 = vld [vmem:[#allocation2 + $0x248] sm:$0xff]
        %v452 = vld [vmem:[#allocation2 + $0x250] sm:$0xff]
        %v453 = vld [vmem:[#allocation2 + $0x258] sm:$0xff]
        %v454 = vld [vmem:[#allocation2 + $0x260] sm:$0xff]
        %v455 = vld [vmem:[#allocation2 + $0x268] sm:$0xff]
        %v456 = vld [vmem:[#allocation2 + $0x270] sm:$0xff]
        %v457 = vld [vmem:[#allocation2 + $0x278] sm:$0xff]
        %v458 = vld [vmem:[#allocation2 + $0x280] sm:$0xff]
        %v459 = vld [vmem:[#allocation2 + $0x288] sm:$0xff]
        %v460 = vld [vmem:[#allocation2 + $0x290] sm:$0xff]
        %v461 = vld [vmem:[#allocation2 + $0x298] sm:$0xff]
        %v462 = vld [vmem:[#allocation2 + $0x2a0] sm:$0xff]
        %v463 = vld [vmem:[#allocation2 + $0x2a8] sm:$0xff]
        %v464 = vld [vmem:[#allocation2 + $0x2b0] sm:$0xff]
        %v465 = vld [vmem:[#allocation2 + $0x2b8] sm:$0xff]
        %v466 = vld [vmem:[#allocation2 + $0x2c0] sm:$0xff]
        %v467 = vld [vmem:[#allocation2 + $0x2c8] sm:$0xff]
        %v468 = vld [vmem:[#allocation2 + $0x2d0] sm:$0xff]
        %v469 = vld [vmem:[#allocation2 + $0x2d8] sm:$0xff]
        %v470 = vld [vmem:[#allocation2 + $0x2e0] sm:$0xff]
        %v471 = vld [vmem:[#allocation2 + $0x2e8] sm:$0xff]
        %v472 = vld [vmem:[#allocation2 + $0x2f0] sm:$0xff]
        %v473 = vld [vmem:[#allocation2 + $0x2f8] sm:$0xff]
        %v474 = vld [vmem:[#allocation2 + $0x300] sm:$0xff]
        %v475 = vld [vmem:[#allocation2 + $0x308] sm:$0xff]
        %v476 = vld [vmem:[#allocation2 + $0x310] sm:$0xff]
        %v477 = vld [vmem:[#allocation2 + $0x318] sm:$0xff]
        %v478 = vld [vmem:[#allocation2 + $0x320] sm:$0xff]
        %v479 = vld [vmem:[#allocation2 + $0x328] sm:$0xff]
        %v480 = vld [vmem:[#allocation2 + $0x330] sm:$0xff]
        %v481 = vld [vmem:[#allocation2 + $0x338] sm:$0xff]
        %v482 = vld [vmem:[#allocation2 + $0x340] sm:$0xff]
        %v483 = vld [vmem:[#allocation2 + $0x348] sm:$0xff]
        %v484 = vld [vmem:[#allocation2 + $0x350] sm:$0xff]
        %v485 = vld [vmem:[#allocation2 + $0x358] sm:$0xff]
        %v486 = vld [vmem:[#allocation2 + $0x360] sm:$0xff]
        %v487 = vld [vmem:[#allocation2 + $0x368] sm:$0xff]
        %v488 = vld [vmem:[#allocation2 + $0x370] sm:$0xff]
        %v489 = vld [vmem:[#allocation2 + $0x378] sm:$0xff]
        %v490 = vld [vmem:[#allocation2 + $0x380] sm:$0xff]
        %v491 = vld [vmem:[#allocation2 + $0x388] sm:$0xff]
        %v492 = vld [vmem:[#allocation2 + $0x390] sm:$0xff]
        %v493 = vld [vmem:[#allocation2 + $0x398] sm:$0xff]
        %v494 = vld [vmem:[#allocation2 + $0x3a0] sm:$0xff]
        %v495 = vld [vmem:[#allocation2 + $0x3a8] sm:$0xff]
        %v496 = vld [vmem:[#allocation2 + $0x3b0] sm:$0xff]
        %v497 = vld [vmem:[#allocation2 + $0x3b8] sm:$0xff]
        %v498 = vld [vmem:[#allocation2 + $0x3c0] sm:$0xff]
        %v499 = vld [vmem:[#allocation2 + $0x3c8] sm:$0xff]
        %v500 = vld [vmem:[#allocation2 + $0x3d0] sm:$0xff]
        %v501 = vld [vmem:[#allocation2 + $0x3d8] sm:$0xff]
        %v502 = vld [vmem:[#allocation2 + $0x3e0] sm:$0xff]
        %v503 = vld [vmem:[#allocation2 + $0x3e8] sm:$0xff]
        %v504 = vld [vmem:[#allocation2 + $0x3f0] sm:$0xff]
        %v505 = vld [vmem:[#allocation2 + $0x3f8] sm:$0xff]
        %v506 = vld [vmem:[#allocation2 + $0x400] sm:$0xff]
        %v507 = vld [vmem:[#allocation2 + $0x408] sm:$0xff]
        %v508 = vld [vmem:[#allocation2 + $0x410] sm:$0xff]
        %v509 = vld [vmem:[#allocation2 + $0x418] sm:$0xff]
        %v510 = vld [vmem:[#allocation2 + $0x420] sm:$0xff]
        %v511 = vld [vmem:[#allocation2 + $0x428] sm:$0xff]
        %v512 = vld [vmem:[#allocation2 + $0x430] sm:$0xff]
        %v513 = vld [vmem:[#allocation2 + $0x438] sm:$0xff]
        %v514 = vld [vmem:[#allocation2 + $0x440] sm:$0xff]
        %v515 = vld [vmem:[#allocation2 + $0x448] sm:$0xff]
        %v516 = vld [vmem:[#allocation2 + $0x450] sm:$0xff]
        %v517 = vld [vmem:[#allocation2 + $0x458] sm:$0xff]
        %v518 = vld [vmem:[#allocation2 + $0x460] sm:$0xff]
        %v519 = vld [vmem:[#allocation2 + $0x468] sm:$0xff]
        %v520 = vld [vmem:[#allocation2 + $0x470] sm:$0xff]
        %v521 = vld [vmem:[#allocation2 + $0x478] sm:$0xff]
        %v522 = vld [vmem:[#allocation2 + $0x480] sm:$0xff]
        %v523 = vld [vmem:[#allocation2 + $0x488] sm:$0xff]
        %v524 = vld [vmem:[#allocation2 + $0x490] sm:$0xff]
        %v525 = vld [vmem:[#allocation2 + $0x498] sm:$0xff]
        %v526 = vld [vmem:[#allocation2 + $0x4a0] sm:$0xff]
        %v527 = vld [vmem:[#allocation2 + $0x4a8] sm:$0xff]
        %v528 = vld [vmem:[#allocation2 + $0x4b0] sm:$0xff]
        %v529 = vld [vmem:[#allocation2 + $0x4b8] sm:$0xff]
        %v530 = vld [vmem:[#allocation2 + $0x4c0] sm:$0xff]
        %v531 = vld [vmem:[#allocation2 + $0x4c8] sm:$0xff]
        %v532 = vld [vmem:[#allocation2 + $0x4d0] sm:$0xff]
        %v533 = vld [vmem:[#allocation2 + $0x4d8] sm:$0xff]
        %v534 = vld [vmem:[#allocation2 + $0x4e0] sm:$0xff]
        %v535 = vld [vmem:[#allocation2 + $0x4e8] sm:$0xff]
        %v536 = vld [vmem:[#allocation2 + $0x4f0] sm:$0xff]
        %v537 = vld [vmem:[#allocation2 + $0x4f8] sm:$0xff]
        %v538 = vld [vmem:[#allocation2 + $0x500] sm:$0xff]
        %v539 = vld [vmem:[#allocation2 + $0x508] sm:$0xff]
        %v540 = vld [vmem:[#allocation2 + $0x510] sm:$0xff]
        %v541 = vld [vmem:[#allocation2 + $0x518] sm:$0xff]
        %v542 = vld [vmem:[#allocation2 + $0x520] sm:$0xff]
        %v543 = vld [vmem:[#allocation2 + $0x528] sm:$0xff]
        %v544 = vld [vmem:[#allocation2 + $0x530] sm:$0xff]
        %v545 = vld [vmem:[#allocation2 + $0x538] sm:$0xff]
        %v546 = vld [vmem:[#allocation2 + $0x540] sm:$0xff]
        %v547 = vld [vmem:[#allocation2 + $0x548] sm:$0xff]
        %v548 = vld [vmem:[#allocation2 + $0x550] sm:$0xff]
        %v549 = vld [vmem:[#allocation2 + $0x558] sm:$0xff]
        %v550 = vld [vmem:[#allocation2 + $0x560] sm:$0xff]
        %v551 = vld [vmem:[#allocation2 + $0x568] sm:$0xff]
        %v552 = vld [vmem:[#allocation2 + $0x570] sm:$0xff]
        %v553 = vld [vmem:[#allocation2 + $0x578] sm:$0xff]
        %v554 = vld [vmem:[#allocation2 + $0x580] sm:$0xff]
        %v555 = vld [vmem:[#allocation2 + $0x588] sm:$0xff]
        %v556 = vld [vmem:[#allocation2 + $0x590] sm:$0xff]
        %v557 = vld [vmem:[#allocation2 + $0x598] sm:$0xff]
        %v558 = vld [vmem:[#allocation2 + $0x5a0] sm:$0xff]
        %v559 = vld [vmem:[#allocation2 + $0x5a8] sm:$0xff]
        %v560 = vld [vmem:[#allocation2 + $0x5b0] sm:$0xff]
        %v561 = vld [vmem:[#allocation2 + $0x5b8] sm:$0xff]
        %v562 = vld [vmem:[#allocation2 + $0x5c0] sm:$0xff]
        %v563 = vld [vmem:[#allocation2 + $0x5c8] sm:$0xff]
        %v564 = vld [vmem:[#allocation2 + $0x5d0] sm:$0xff]
        %v565 = vld [vmem:[#allocation2 + $0x5d8] sm:$0xff]
        %v566 = vld [vmem:[#allocation2 + $0x5e0] sm:$0xff]
        %v567 = vld [vmem:[#allocation2 + $0x5e8] sm:$0xff]
        %v568 = vld [vmem:[#allocation2 + $0x5f0] sm:$0xff]
        %v569 = vld [vmem:[#allocation2 + $0x5f8] sm:$0xff]
        %v570 = vld [vmem:[#allocation2 + $0x600] sm:$0xff]
        %v571 = vld [vmem:[#allocation2 + $0x608] sm:$0xff]
        %v572 = vld [vmem:[#allocation2 + $0x610] sm:$0xff]
        %v573 = vld [vmem:[#allocation2 + $0x618] sm:$0xff]
        %v574 = vld [vmem:[#allocation2 + $0x620] sm:$0xff]
        %v575 = vld [vmem:[#allocation2 + $0x628] sm:$0xff]
        %v576 = vld [vmem:[#allocation2 + $0x630] sm:$0xff]
        %v577 = vld [vmem:[#allocation2 + $0x638] sm:$0xff]
        %v578 = vld [vmem:[#allocation2 + $0x640] sm:$0xff]
        %v579 = vld [vmem:[#allocation2 + $0x648] sm:$0xff]
        %v580 = vld [vmem:[#allocation2 + $0x650] sm:$0xff]
        %v581 = vld [vmem:[#allocation2 + $0x658] sm:$0xff]
        %v582 = vld [vmem:[#allocation2 + $0x660] sm:$0xff]
        %v583 = vld [vmem:[#allocation2 + $0x668] sm:$0xff]
        %v584 = vld [vmem:[#allocation2 + $0x670] sm:$0xff]
        %v585 = vld [vmem:[#allocation2 + $0x678] sm:$0xff]
        %v586 = vld [vmem:[#allocation2 + $0x680] sm:$0xff]
        %v587 = vld [vmem:[#allocation2 + $0x688] sm:$0xff]
        %v588 = vld [vmem:[#allocation2 + $0x690] sm:$0xff]
        %v589 = vld [vmem:[#allocation2 + $0x698] sm:$0xff]
        %v590 = vld [vmem:[#allocation2 + $0x6a0] sm:$0xff]
        %v591 = vld [vmem:[#allocation2 + $0x6a8] sm:$0xff]
        %v592 = vld [vmem:[#allocation2 + $0x6b0] sm:$0xff]
        %v593 = vld [vmem:[#allocation2 + $0x6b8] sm:$0xff]
        %v594 = vld [vmem:[#allocation2 + $0x6c0] sm:$0xff]
        %v595 = vld [vmem:[#allocation2 + $0x6c8] sm:$0xff]
        %v596 = vld [vmem:[#allocation2 + $0x6d0] sm:$0xff]
        %v597 = vld [vmem:[#allocation2 + $0x6d8] sm:$0xff]
        %v598 = vld [vmem:[#allocation2 + $0x6e0] sm:$0xff]
        %v599 = vld [vmem:[#allocation2 + $0x6e8] sm:$0xff]
        %v600 = vld [vmem:[#allocation2 + $0x6f0] sm:$0xff]
        %v601 = vld [vmem:[#allocation2 + $0x6f8] sm:$0xff]
        %v602 = vld [vmem:[#allocation2 + $0x700] sm:$0xff]
        %v603 = vld [vmem:[#allocation2 + $0x708] sm:$0xff]
        %v604 = vld [vmem:[#allocation2 + $0x710] sm:$0xff]
        %v605 = vld [vmem:[#allocation2 + $0x718] sm:$0xff]
        %v606 = vld [vmem:[#allocation2 + $0x720] sm:$0xff]
        %v607 = vld [vmem:[#allocation2 + $0x728] sm:$0xff]
        %v608 = vld [vmem:[#allocation2 + $0x730] sm:$0xff]
        %v609 = vld [vmem:[#allocation2 + $0x738] sm:$0xff]
        %v610 = vld [vmem:[#allocation2 + $0x740] sm:$0xff]
        %v611 = vld [vmem:[#allocation2 + $0x748] sm:$0xff]
        %v612 = vld [vmem:[#allocation2 + $0x750] sm:$0xff]
        %v613 = vld [vmem:[#allocation2 + $0x758] sm:$0xff]
        %v614 = vld [vmem:[#allocation2 + $0x760] sm:$0xff]
        %v615 = vld [vmem:[#allocation2 + $0x768] sm:$0xff]
        %v616 = vld [vmem:[#allocation2 + $0x770] sm:$0xff]
        %v617 = vld [vmem:[#allocation2 + $0x778] sm:$0xff]
        %v618 = vld [vmem:[#allocation2 + $0x780] sm:$0xff]
        %v619 = vld [vmem:[#allocation2 + $0x788] sm:$0xff]
        %v620 = vld [vmem:[#allocation2 + $0x790] sm:$0xff]
        %v621 = vld [vmem:[#allocation2 + $0x798] sm:$0xff]
        %v622 = vld [vmem:[#allocation2 + $0x7a0] sm:$0xff]
        %v623 = vld [vmem:[#allocation2 + $0x7a8] sm:$0xff]
        %v624 = vld [vmem:[#allocation2 + $0x7b0] sm:$0xff]
        %v625 = vld [vmem:[#allocation2 + $0x7b8] sm:$0xff]
        %v626 = vld [vmem:[#allocation2 + $0x7c0] sm:$0xff]
        %v627 = vld [vmem:[#allocation2 + $0x7c8] sm:$0xff]
        %v628 = vld [vmem:[#allocation2 + $0x7d0] sm:$0xff]
        %v629 = vld [vmem:[#allocation2 + $0x7d8] sm:$0xff]
        %v630 = vld [vmem:[#allocation2 + $0x7e0] sm:$0xff]
        %v631 = vld [vmem:[#allocation2 + $0x7e8] sm:$0xff]
        %v632 = vld [vmem:[#allocation2 + $0x7f0] sm:$0xff]
        %v633 = vld [vmem:[#allocation2 + $0x7f8] sm:$0xff]
        %v634 = vld [vmem:[#allocation2 + $0x800] sm:$0xff]
        %v635 = vld [vmem:[#allocation2 + $0x808] sm:$0xff]
        %v636 = vld [vmem:[#allocation2 + $0x810] sm:$0xff]
        %v637 = vld [vmem:[#allocation2 + $0x818] sm:$0xff]
        %v638 = vld [vmem:[#allocation2 + $0x820] sm:$0xff]
        %v639 = vld [vmem:[#allocation2 + $0x828] sm:$0xff]
        %v640 = vld [vmem:[#allocation2 + $0x830] sm:$0xff]
        %v641 = vld [vmem:[#allocation2 + $0x838] sm:$0xff]
        %v642 = vld [vmem:[#allocation2 + $0x840] sm:$0xff]
        %v643 = vld [vmem:[#allocation2 + $0x848] sm:$0xff]
        %v644 = vld [vmem:[#allocation2 + $0x850] sm:$0xff]
        %v645 = vld [vmem:[#allocation2 + $0x858] sm:$0xff]
        %v646 = vld [vmem:[#allocation2 + $0x860] sm:$0xff]
        %v647 = vld [vmem:[#allocation2 + $0x868] sm:$0xff]
        %v648 = vld [vmem:[#allocation2 + $0x870] sm:$0xff]
        %v649 = vld [vmem:[#allocation2 + $0x878] sm:$0xff]
        %v650 = vld [vmem:[#allocation2 + $0x880] sm:$0xff]
        %v651 = vld [vmem:[#allocation2 + $0x888] sm:$0xff]
        %v652 = vld [vmem:[#allocation2 + $0x890] sm:$0xff]
        %v653 = vld [vmem:[#allocation2 + $0x898] sm:$0xff]
        %v654 = vld [vmem:[#allocation2 + $0x8a0] sm:$0xff]
        %v655 = vld [vmem:[#allocation2 + $0x8a8] sm:$0xff]
        %v656 = vld [vmem:[#allocation2 + $0x8b0] sm:$0xff]
        %v657 = vld [vmem:[#allocation2 + $0x8b8] sm:$0xff]
        %v658 = vld [vmem:[#allocation2 + $0x8c0] sm:$0xff]
        %v659 = vld [vmem:[#allocation2 + $0x8c8] sm:$0xff]
        %v660 = vld [vmem:[#allocation2 + $0x8d0] sm:$0xff]
        %v661 = vld [vmem:[#allocation2 + $0x8d8] sm:$0xff]
        %v662 = vld [vmem:[#allocation2 + $0x8e0] sm:$0xff]
        %v663 = vld [vmem:[#allocation2 + $0x8e8] sm:$0xff]
        %v664 = vld [vmem:[#allocation2 + $0x8f0] sm:$0xff]
        %v665 = vld [vmem:[#allocation2 + $0x8f8] sm:$0xff]
        %v666 = vld [vmem:[#allocation2 + $0x900] sm:$0xff]
        %v667 = vld [vmem:[#allocation2 + $0x908] sm:$0xff]
        %v668 = vld [vmem:[#allocation2 + $0x910] sm:$0xff]
        %v669 = vld [vmem:[#allocation2 + $0x918] sm:$0xff]
        %v670 = vld [vmem:[#allocation2 + $0x920] sm:$0xff]
        %v671 = vld [vmem:[#allocation2 + $0x928] sm:$0xff]
        %v672 = vld [vmem:[#allocation2 + $0x930] sm:$0xff]
        %v673 = vld [vmem:[#allocation2 + $0x938] sm:$0xff]
        %v674 = vld [vmem:[#allocation2 + $0x940] sm:$0xff]
        %v675 = vld [vmem:[#allocation2 + $0x948] sm:$0xff]
        %v676 = vld [vmem:[#allocation2 + $0x950] sm:$0xff]
        %v677 = vld [vmem:[#allocation2 + $0x958] sm:$0xff]
        %v678 = vld [vmem:[#allocation2 + $0x960] sm:$0xff]
        %v679 = vld [vmem:[#allocation2 + $0x968] sm:$0xff]
        %v680 = vld [vmem:[#allocation2 + $0x970] sm:$0xff]
        %v681 = vld [vmem:[#allocation2 + $0x978] sm:$0xff]
        %v682 = vld [vmem:[#allocation2 + $0x980] sm:$0xff]
        %v683 = vld [vmem:[#allocation2 + $0x988] sm:$0xff]
        %v684 = vld [vmem:[#allocation2 + $0x990] sm:$0xff]
        %v685 = vld [vmem:[#allocation2 + $0x998] sm:$0xff]
        %v686 = vld [vmem:[#allocation2 + $0x9a0] sm:$0xff]
        %v687 = vld [vmem:[#allocation2 + $0x9a8] sm:$0xff]
        %v688 = vld [vmem:[#allocation2 + $0x9b0] sm:$0xff]
        %v689 = vld [vmem:[#allocation2 + $0x9b8] sm:$0xff]
        %v690 = vld [vmem:[#allocation2 + $0x9c0] sm:$0xff]
        %v691 = vld [vmem:[#allocation2 + $0x9c8] sm:$0xff]
        %v692 = vld [vmem:[#allocation2 + $0x9d0] sm:$0xff]
        %v693 = vld [vmem:[#allocation2 + $0x9d8] sm:$0xff]
        %v694 = vld [vmem:[#allocation2 + $0x9e0] sm:$0xff]
        %v695 = vld [vmem:[#allocation2 + $0x9e8] sm:$0xff]
        %v696 = vld [vmem:[#allocation2 + $0x9f0] sm:$0xff]
        %v697 = vld [vmem:[#allocation2 + $0x9f8] sm:$0xff]
        %v698 = vld [vmem:[#allocation2 + $0xa00] sm:$0xff]
        %v699 = vld [vmem:[#allocation2 + $0xa08] sm:$0xff]
        %v700 = vld [vmem:[#allocation2 + $0xa10] sm:$0xff]
        %v701 = vld [vmem:[#allocation2 + $0xa18] sm:$0xff]
        %v702 = vld [vmem:[#allocation2 + $0xa20] sm:$0xff]
        %v703 = vld [vmem:[#allocation2 + $0xa28] sm:$0xff]
        %v704 = vld [vmem:[#allocation2 + $0xa30] sm:$0xff]
        %v705 = vld [vmem:[#allocation2 + $0xa38] sm:$0xff]
        %v706 = vld [vmem:[#allocation2 + $0xa40] sm:$0xff]
        %v707 = vld [vmem:[#allocation2 + $0xa48] sm:$0xff]
        %v708 = vld [vmem:[#allocation2 + $0xa50] sm:$0xff]
        %v709 = vld [vmem:[#allocation2 + $0xa58] sm:$0xff]
        %v710 = vld [vmem:[#allocation2 + $0xa60] sm:$0xff]
        %v711 = vld [vmem:[#allocation2 + $0xa68] sm:$0xff]
        %v712 = vld [vmem:[#allocation2 + $0xa70] sm:$0xff]
        %v713 = vld [vmem:[#allocation2 + $0xa78] sm:$0xff]
        %v714 = vld [vmem:[#allocation2 + $0xa80] sm:$0xff]
        %v715 = vld [vmem:[#allocation2 + $0xa88] sm:$0xff]
        %v716 = vld [vmem:[#allocation2 + $0xa90] sm:$0xff]
        %v717 = vld [vmem:[#allocation2 + $0xa98] sm:$0xff]
        %v718 = vld [vmem:[#allocation2 + $0xaa0] sm:$0xff]
        %v719 = vld [vmem:[#allocation2 + $0xaa8] sm:$0xff]
        %v720 = vld [vmem:[#allocation2 + $0xab0] sm:$0xff]
        %v721 = vld [vmem:[#allocation2 + $0xab8] sm:$0xff]
        %v722 = vld [vmem:[#allocation2 + $0xac0] sm:$0xff]
        %v723 = vld [vmem:[#allocation2 + $0xac8] sm:$0xff]
        %v724 = vld [vmem:[#allocation2 + $0xad0] sm:$0xff]
        %v725 = vld [vmem:[#allocation2 + $0xad8] sm:$0xff]
        %v726 = vld [vmem:[#allocation2 + $0xae0] sm:$0xff]
        %v727 = vld [vmem:[#allocation2 + $0xae8] sm:$0xff]
        %v728 = vld [vmem:[#allocation2 + $0xaf0] sm:$0xff]
        %v729 = vld [vmem:[#allocation2 + $0xaf8] sm:$0xff]
        %v730 = vld [vmem:[#allocation2 + $0xb00] sm:$0xff]
        %v731 = vld [vmem:[#allocation2 + $0xb08] sm:$0xff]
        %v732 = vld [vmem:[#allocation2 + $0xb10] sm:$0xff]
        %v733 = vld [vmem:[#allocation2 + $0xb18] sm:$0xff]
        %v734 = vld [vmem:[#allocation2 + $0xb20] sm:$0xff]
        %v735 = vld [vmem:[#allocation2 + $0xb28] sm:$0xff]
        %v736 = vld [vmem:[#allocation2 + $0xb30] sm:$0xff]
        %v737 = vld [vmem:[#allocation2 + $0xb38] sm:$0xff]
        %v738 = vld [vmem:[#allocation2 + $0xb40] sm:$0xff]
        %v739 = vld [vmem:[#allocation2 + $0xb48] sm:$0xff]
        %v740 = vld [vmem:[#allocation2 + $0xb50] sm:$0xff]
        %v741 = vld [vmem:[#allocation2 + $0xb58] sm:$0xff]
        %v742 = vld [vmem:[#allocation2 + $0xb60] sm:$0xff]
        %v743 = vld [vmem:[#allocation2 + $0xb68] sm:$0xff]
        %v744 = vld [vmem:[#allocation2 + $0xb70] sm:$0xff]
        %v745 = vld [vmem:[#allocation2 + $0xb78] sm:$0xff]
        %v746 = vld [vmem:[#allocation2 + $0xb80] sm:$0xff]
        %v747 = vld [vmem:[#allocation2 + $0xb88] sm:$0xff]
        %v748 = vld [vmem:[#allocation2 + $0xb90] sm:$0xff]
        %v749 = vld [vmem:[#allocation2 + $0xb98] sm:$0xff]
        %v750 = vld [vmem:[#allocation2 + $0xba0] sm:$0xff]
        %v751 = vld [vmem:[#allocation2 + $0xba8] sm:$0xff]
        %v752 = vld [vmem:[#allocation2 + $0xbb0] sm:$0xff]
        %v753 = vld [vmem:[#allocation2 + $0xbb8] sm:$0xff]
        %v754 = vld [vmem:[#allocation2 + $0xbc0] sm:$0xff]
        %v755 = vld [vmem:[#allocation2 + $0xbc8] sm:$0xff]
        %v756 = vld [vmem:[#allocation2 + $0xbd0] sm:$0xff]
        %v757 = vld [vmem:[#allocation2 + $0xbd8] sm:$0xff]
        %v758 = vld [vmem:[#allocation2 + $0xbe0] sm:$0xff]
        %v759 = vld [vmem:[#allocation2 + $0xbe8] sm:$0xff]
        %v760 = vld [vmem:[#allocation2 + $0xbf0] sm:$0xff]
        %v761 = vld [vmem:[#allocation2 + $0xbf8] sm:$0xff]
        %v762 = vld [vmem:[#allocation2 + $0xc00] sm:$0xff]
        %v763 = vld [vmem:[#allocation2 + $0xc08] sm:$0xff]
        %v764 = vld [vmem:[#allocation2 + $0xc10] sm:$0xff]
        %v765 = vld [vmem:[#allocation2 + $0xc18] sm:$0xff]
        %v766 = vld [vmem:[#allocation2 + $0xc20] sm:$0xff]
        %v767 = vld [vmem:[#allocation2 + $0xc28] sm:$0xff]
        %v768 = vld [vmem:[#allocation2 + $0xc30] sm:$0xff]
        %v769 = vld [vmem:[#allocation2 + $0xc38] sm:$0xff]
        %v770 = vld [vmem:[#allocation2 + $0xc40] sm:$0xff]
        %v771 = vld [vmem:[#allocation2 + $0xc48] sm:$0xff]
        %v772 = vld [vmem:[#allocation2 + $0xc50] sm:$0xff]
        %v773 = vld [vmem:[#allocation2 + $0xc58] sm:$0xff]
        %v774 = vld [vmem:[#allocation2 + $0xc60] sm:$0xff]
        %v775 = vld [vmem:[#allocation2 + $0xc68] sm:$0xff]
        %v776 = vld [vmem:[#allocation2 + $0xc70] sm:$0xff]
        %v777 = vld [vmem:[#allocation2 + $0xc78] sm:$0xff]
        %v778 = vld [vmem:[#allocation2 + $0xc80] sm:$0xff]
        %v779 = vld [vmem:[#allocation2 + $0xc88] sm:$0xff]
        %v780 = vld [vmem:[#allocation2 + $0xc90] sm:$0xff]
        %v781 = vld [vmem:[#allocation2 + $0xc98] sm:$0xff]
        %v782 = vld [vmem:[#allocation2 + $0xca0] sm:$0xff]
        %v783 = vld [vmem:[#allocation2 + $0xca8] sm:$0xff]
        %v784 = vld [vmem:[#allocation2 + $0xcb0] sm:$0xff]
        %v785 = vld [vmem:[#allocation2 + $0xcb8] sm:$0xff]
        %v786 = vld [vmem:[#allocation2 + $0xcc0] sm:$0xff]
        %v787 = vld [vmem:[#allocation2 + $0xcc8] sm:$0xff]
        %v788 = vld [vmem:[#allocation2 + $0xcd0] sm:$0xff]
        %v789 = vld [vmem:[#allocation2 + $0xcd8] sm:$0xff]
        %v790 = vld [vmem:[#allocation2 + $0xce0] sm:$0xff]
        %v791 = vld [vmem:[#allocation2 + $0xce8] sm:$0xff]
        %v792 = vld [vmem:[#allocation2 + $0xcf0] sm:$0xff]
        %v793 = vld [vmem:[#allocation2 + $0xcf8] sm:$0xff]
        %v794 = vld [vmem:[#allocation2 + $0xd00] sm:$0xff]
        %v795 = vld [vmem:[#allocation2 + $0xd08] sm:$0xff]
        %v796 = vld [vmem:[#allocation2 + $0xd10] sm:$0xff]
        %v797 = vld [vmem:[#allocation2 + $0xd18] sm:$0xff]
        %v798 = vld [vmem:[#allocation2 + $0xd20] sm:$0xff]
        %v799 = vld [vmem:[#allocation2 + $0xd28] sm:$0xff]
        %v800 = vld [vmem:[#allocation2 + $0xd30] sm:$0xff]
        %v801 = vld [vmem:[#allocation2 + $0xd38] sm:$0xff]
        %v802 = vld [vmem:[#allocation2 + $0xd40] sm:$0xff]
        %v803 = vld [vmem:[#allocation2 + $0xd48] sm:$0xff]
        %v804 = vld [vmem:[#allocation2 + $0xd50] sm:$0xff]
        %v805 = vld [vmem:[#allocation2 + $0xd58] sm:$0xff]
        %v806 = vld [vmem:[#allocation2 + $0xd60] sm:$0xff]
        %v807 = vld [vmem:[#allocation2 + $0xd68] sm:$0xff]
        %v808 = vld [vmem:[#allocation2 + $0xd70] sm:$0xff]
        %v809 = vld [vmem:[#allocation2 + $0xd78] sm:$0xff]
        %v810 = vld [vmem:[#allocation2 + $0xd80] sm:$0xff]
        %v811 = vld [vmem:[#allocation2 + $0xd88] sm:$0xff]
        %v812 = vld [vmem:[#allocation2 + $0xd90] sm:$0xff]
        %v813 = vld [vmem:[#allocation2 + $0xd98] sm:$0xff]
        %v814 = vld [vmem:[#allocation2 + $0xda0] sm:$0xff]
        %v815 = vld [vmem:[#allocation2 + $0xda8] sm:$0xff]
        %v816 = vld [vmem:[#allocation2 + $0xdb0] sm:$0xff]
        %v817 = vld [vmem:[#allocation2 + $0xdb8] sm:$0xff]
        %v818 = vld [vmem:[#allocation2 + $0xdc0] sm:$0xff]
        %v819 = vld [vmem:[#allocation2 + $0xdc8] sm:$0xff]
        %v820 = vld [vmem:[#allocation2 + $0xdd0] sm:$0xff]
        %v821 = vld [vmem:[#allocation2 + $0xdd8] sm:$0xff]
        %v822 = vld [vmem:[#allocation2 + $0xde0] sm:$0xff]
        %v823 = vld [vmem:[#allocation2 + $0xde8] sm:$0xff]
        %v824 = vld [vmem:[#allocation2 + $0xdf0] sm:$0xff]
        %v825 = vld [vmem:[#allocation2 + $0xdf8] sm:$0xff]
        %v826 = vld [vmem:[#allocation2 + $0xe00] sm:$0xff]
        %v827 = vld [vmem:[#allocation2 + $0xe08] sm:$0xff]
        %v828 = vld [vmem:[#allocation2 + $0xe10] sm:$0xff]
        %v829 = vld [vmem:[#allocation2 + $0xe18] sm:$0xff]
        %v830 = vld [vmem:[#allocation2 + $0xe20] sm:$0xff]
        %v831 = vld [vmem:[#allocation2 + $0xe28] sm:$0xff]
        %v832 = vld [vmem:[#allocation2 + $0xe30] sm:$0xff]
        %v833 = vld [vmem:[#allocation2 + $0xe38] sm:$0xff]
        %v834 = vld [vmem:[#allocation2 + $0xe40] sm:$0xff]
        %v835 = vld [vmem:[#allocation2 + $0xe48] sm:$0xff]
        %v836 = vld [vmem:[#allocation2 + $0xe50] sm:$0xff]
        %v837 = vld [vmem:[#allocation2 + $0xe58] sm:$0xff]
        %v838 = vld [vmem:[#allocation2 + $0xe60] sm:$0xff]
        %v839 = vld [vmem:[#allocation2 + $0xe68] sm:$0xff]
        %v840 = vld [vmem:[#allocation2 + $0xe70] sm:$0xff]
        %v841 = vld [vmem:[#allocation2 + $0xe78] sm:$0xff]
        %v842 = vld [vmem:[#allocation2 + $0xe80] sm:$0xff]
        %v843 = vld [vmem:[#allocation2 + $0xe88] sm:$0xff]
        %v844 = vld [vmem:[#allocation2 + $0xe90] sm:$0xff]
        %v845 = vld [vmem:[#allocation2 + $0xe98] sm:$0xff]
        %v846 = vld [vmem:[#allocation2 + $0xea0] sm:$0xff]
        %v847 = vld [vmem:[#allocation2 + $0xea8] sm:$0xff]
        %v848 = vld [vmem:[#allocation2 + $0xeb0] sm:$0xff]
        %v849 = vld [vmem:[#allocation2 + $0xeb8] sm:$0xff]
        %v850 = vld [vmem:[#allocation2 + $0xec0] sm:$0xff]
        %v851 = vld [vmem:[#allocation2 + $0xec8] sm:$0xff]
        %v852 = vld [vmem:[#allocation2 + $0xed0] sm:$0xff]
        %v853 = vld [vmem:[#allocation2 + $0xed8] sm:$0xff]
        %v854 = vld [vmem:[#allocation2 + $0xee0] sm:$0xff]
        %v855 = vld [vmem:[#allocation2 + $0xee8] sm:$0xff]
        %v856 = vld [vmem:[#allocation2 + $0xef0] sm:$0xff]
        %v857 = vld [vmem:[#allocation2 + $0xef8] sm:$0xff]
        %v858 = vld [vmem:[#allocation2 + $0xf00] sm:$0xff]
        %v859 = vld [vmem:[#allocation2 + $0xf08] sm:$0xff]
        %v860 = vld [vmem:[#allocation2 + $0xf10] sm:$0xff]
        %v861 = vld [vmem:[#allocation2 + $0xf18] sm:$0xff]
        %v862 = vld [vmem:[#allocation2 + $0xf20] sm:$0xff]
        %v863 = vld [vmem:[#allocation2 + $0xf28] sm:$0xff]
        %v864 = vld [vmem:[#allocation2 + $0xf30] sm:$0xff]
        %v865 = vld [vmem:[#allocation2 + $0xf38] sm:$0xff]
        %v866 = vld [vmem:[#allocation2 + $0xf40] sm:$0xff]
        %v867 = vld [vmem:[#allocation2 + $0xf48] sm:$0xff]
        %v868 = vld [vmem:[#allocation2 + $0xf50] sm:$0xff]
        %v869 = vld [vmem:[#allocation2 + $0xf58] sm:$0xff]
        %v870 = vld [vmem:[#allocation2 + $0xf60] sm:$0xff]
        %v871 = vld [vmem:[#allocation2 + $0xf68] sm:$0xff]
        %v872 = vld [vmem:[#allocation2 + $0xf70] sm:$0xff]
        %v873 = vld [vmem:[#allocation2 + $0xf78] sm:$0xff]
        %v874 = vld [vmem:[#allocation2 + $0xf80] sm:$0xff]
        %v875 = vld [vmem:[#allocation2 + $0xf88] sm:$0xff]
        %v876 = vld [vmem:[#allocation2 + $0xf90] sm:$0xff]
        %v877 = vld [vmem:[#allocation2 + $0xf98] sm:$0xff]
        %v878 = vld [vmem:[#allocation2 + $0xfa0] sm:$0xff]
        %v879 = vld [vmem:[#allocation2 + $0xfa8] sm:$0xff]
        %v880 = vld [vmem:[#allocation2 + $0xfb0] sm:$0xff]
        %v881 = vld [vmem:[#allocation2 + $0xfb8] sm:$0xff]
        %v882 = vld [vmem:[#allocation2 + $0xfc0] sm:$0xff]
        %v883 = vld [vmem:[#allocation2 + $0xfc8] sm:$0xff]
        %v884 = vld [vmem:[#allocation2 + $0xfd0] sm:$0xff]
        %v885 = vld [vmem:[#allocation2 + $0xfd8] sm:$0xff]
        %v886 = vld [vmem:[#allocation2 + $0xfe0] sm:$0xff]
        %v887 = vld [vmem:[#allocation2 + $0xfe8] sm:$0xff]
        %v888 = vld [vmem:[#allocation2 + $0xff0] sm:$0xff]
        %v889 = vld [vmem:[#allocation2 + $0xff8] sm:$0xff]
        %v890 = vld [vmem:[#allocation2 + $0x1000] sm:$0xff]
        %v891 = vld [vmem:[#allocation2 + $0x1008] sm:$0xff]
        %v892 = vld [vmem:[#allocation2 + $0x1010] sm:$0xff]
        %v893 = vld [vmem:[#allocation2 + $0x1018] sm:$0xff]
        %v894 = vld [vmem:[#allocation2 + $0x1020] sm:$0xff]
        %v895 = vld [vmem:[#allocation2 + $0x1028] sm:$0xff]
        %v896 = vld [vmem:[#allocation2 + $0x1030] sm:$0xff]
        %v897 = vld [vmem:[#allocation2 + $0x1038] sm:$0xff]
        %v898 = vld [vmem:[#allocation2 + $0x1040] sm:$0xff]
        %v899 = vld [vmem:[#allocation2 + $0x1048] sm:$0xff]
        %v900 = vld [vmem:[#allocation2 + $0x1050] sm:$0xff]
        %v901 = vld [vmem:[#allocation2 + $0x1058] sm:$0xff]
        %v902 = vld [vmem:[#allocation2 + $0x1060] sm:$0xff]
        %v903 = vld [vmem:[#allocation2 + $0x1068] sm:$0xff]
        %v904 = vld [vmem:[#allocation2 + $0x1070] sm:$0xff]
        %v905 = vld [vmem:[#allocation2 + $0x1078] sm:$0xff]
        %v906 = vld [vmem:[#allocation2 + $0x1080] sm:$0xff]
        %v907 = vld [vmem:[#allocation2 + $0x1088] sm:$0xff]
        %v908 = vld [vmem:[#allocation2 + $0x1090] sm:$0xff]
        %v909 = vld [vmem:[#allocation2 + $0x1098] sm:$0xff]
        %v910 = vld [vmem:[#allocation2 + $0x10a0] sm:$0xff]
        %v911 = vld [vmem:[#allocation2 + $0x10a8] sm:$0xff]
        %v912 = vld [vmem:[#allocation2 + $0x10b0] sm:$0xff]
        %v913 = vld [vmem:[#allocation2 + $0x10b8] sm:$0xff]
        %v914 = vld [vmem:[#allocation2 + $0x10c0] sm:$0xff]
        %v915 = vld [vmem:[#allocation2 + $0x10c8] sm:$0xff]
        %v916 = vld [vmem:[#allocation2 + $0x10d0] sm:$0xff]
        %v917 = vld [vmem:[#allocation2 + $0x10d8] sm:$0xff]
        %v918 = vld [vmem:[#allocation2 + $0x10e0] sm:$0xff]
        %v919 = vld [vmem:[#allocation2 + $0x10e8] sm:$0xff]
        %v920 = vld [vmem:[#allocation2 + $0x10f0] sm:$0xff]
        %v921 = vld [vmem:[#allocation2 + $0x10f8] sm:$0xff]
        %v922 = vld [vmem:[#allocation2 + $0x1100] sm:$0xff]
        %v923 = vld [vmem:[#allocation2 + $0x1108] sm:$0xff]
        %v924 = vld [vmem:[#allocation2 + $0x1110] sm:$0xff]
        %v925 = vld [vmem:[#allocation2 + $0x1118] sm:$0xff]
        %v926 = vld [vmem:[#allocation2 + $0x1120] sm:$0xff]
        %v927 = vld [vmem:[#allocation2 + $0x1128] sm:$0xff]
        %v928 = vld [vmem:[#allocation2 + $0x1130] sm:$0xff]
        %v929 = vld [vmem:[#allocation2 + $0x1138] sm:$0xff]
        %v930 = vld [vmem:[#allocation2 + $0x1140] sm:$0xff]
        %v931 = vld [vmem:[#allocation2 + $0x1148] sm:$0xff]
        %v932 = vld [vmem:[#allocation2 + $0x1150] sm:$0xff]
        %v933 = vld [vmem:[#allocation2 + $0x1158] sm:$0xff]
        %v934 = vld [vmem:[#allocation2 + $0x1160] sm:$0xff]
        %v935 = vld [vmem:[#allocation2 + $0x1168] sm:$0xff]
        %v936 = vld [vmem:[#allocation2 + $0x1170] sm:$0xff]
        %v937 = vld [vmem:[#allocation2 + $0x1178] sm:$0xff]
        %v938 = vld [vmem:[#allocation2 + $0x1180] sm:$0xff]
        %v939 = vld [vmem:[#allocation2 + $0x1188] sm:$0xff]
        %v940 = vld [vmem:[#allocation2 + $0x1190] sm:$0xff]
        %v941 = vld [vmem:[#allocation2 + $0x1198] sm:$0xff]
        %v942 = vld [vmem:[#allocation2 + $0x11a0] sm:$0xff]
        %v943 = vld [vmem:[#allocation2 + $0x11a8] sm:$0xff]
        %v944 = vld [vmem:[#allocation2 + $0x11b0] sm:$0xff]
        %v945 = vld [vmem:[#allocation2 + $0x11b8] sm:$0xff]
        %v946 = vld [vmem:[#allocation2 + $0x11c0] sm:$0xff]
        %v947 = vld [vmem:[#allocation2 + $0x11c8] sm:$0xff]
        %v948 = vld [vmem:[#allocation2 + $0x11d0] sm:$0xff]
        %v949 = vld [vmem:[#allocation2 + $0x11d8] sm:$0xff]
        %v950 = vld [vmem:[#allocation2 + $0x11e0] sm:$0xff]
        %v951 = vld [vmem:[#allocation2 + $0x11e8] sm:$0xff]
        %v952 = vld [vmem:[#allocation2 + $0x11f0] sm:$0xff]
        %v953 = vld [vmem:[#allocation2 + $0x11f8] sm:$0xff]
        %v954 = vld [vmem:[#allocation2 + $0x1200] sm:$0xff]
        %v955 = vld [vmem:[#allocation2 + $0x1208] sm:$0xff]
        %v956 = vld [vmem:[#allocation2 + $0x1210] sm:$0xff]
        %v957 = vld [vmem:[#allocation2 + $0x1218] sm:$0xff]
        %v958 = vld [vmem:[#allocation2 + $0x1220] sm:$0xff]
        %v959 = vld [vmem:[#allocation2 + $0x1228] sm:$0xff]
        %v960 = vld [vmem:[#allocation2 + $0x1230] sm:$0xff]
        %v961 = vld [vmem:[#allocation2 + $0x1238] sm:$0xff]
        %v962 = vld [vmem:[#allocation2 + $0x1240] sm:$0xff]
        %v963 = vld [vmem:[#allocation2 + $0x1248] sm:$0xff]
        %v964 = vld [vmem:[#allocation2 + $0x1250] sm:$0xff]
        %v965 = vld [vmem:[#allocation2 + $0x1258] sm:$0xff]
        %v966 = vld [vmem:[#allocation2 + $0x1260] sm:$0xff]
        %v967 = vld [vmem:[#allocation2 + $0x1268] sm:$0xff]
        %v968 = vld [vmem:[#allocation2 + $0x1270] sm:$0xff]
        %v969 = vld [vmem:[#allocation2 + $0x1278] sm:$0xff]
        %v970 = vld [vmem:[#allocation2 + $0x1280] sm:$0xff]
        %v971 = vld [vmem:[#allocation2 + $0x1288] sm:$0xff]
        %v972 = vld [vmem:[#allocation2 + $0x1290] sm:$0xff]
        %v973 = vld [vmem:[#allocation2 + $0x1298] sm:$0xff]
        %v974 = vld [vmem:[#allocation2 + $0x12a0] sm:$0xff]
        %v975 = vld [vmem:[#allocation2 + $0x12a8] sm:$0xff]
        %v976 = vld [vmem:[#allocation2 + $0x12b0] sm:$0xff]
        %v977 = vld [vmem:[#allocation2 + $0x12b8] sm:$0xff]
        %v978 = vld [vmem:[#allocation2 + $0x12c0] sm:$0xff]
        %v979 = vld [vmem:[#allocation2 + $0x12c8] sm:$0xff]
        %v980 = vld [vmem:[#allocation2 + $0x12d0] sm:$0xff]
        %v981 = vld [vmem:[#allocation2 + $0x12d8] sm:$0xff]
        %v982 = vld [vmem:[#allocation2 + $0x12e0] sm:$0xff]
        %v983 = vld [vmem:[#allocation2 + $0x12e8] sm:$0xff]
        %v984 = vld [vmem:[#allocation2 + $0x12f0] sm:$0xff]
        %v985 = vld [vmem:[#allocation2 + $0x12f8] sm:$0xff]
        %v986 = vld [vmem:[#allocation2 + $0x1300] sm:$0xff]
        %v987 = vld [vmem:[#allocation2 + $0x1308] sm:$0xff]
        %v988 = vld [vmem:[#allocation2 + $0x1310] sm:$0xff]
        %v989 = vld [vmem:[#allocation2 + $0x1318] sm:$0xff]
        %v990 = vld [vmem:[#allocation2 + $0x1320] sm:$0xff]
        %v991 = vld [vmem:[#allocation2 + $0x1328] sm:$0xff]
        %v992 = vld [vmem:[#allocation2 + $0x1330] sm:$0xff]
        %v993 = vld [vmem:[#allocation2 + $0x1338] sm:$0xff]
        %v994 = vld [vmem:[#allocation2 + $0x1340] sm:$0xff]
        %v995 = vld [vmem:[#allocation2 + $0x1348] sm:$0xff]
        %v996 = vld [vmem:[#allocation2 + $0x1350] sm:$0xff]
        %v997 = vld [vmem:[#allocation2 + $0x1358] sm:$0xff]
        %v998 = vld [vmem:[#allocation2 + $0x1360] sm:$0xff]
        %v999 = vld [vmem:[#allocation2 + $0x1368] sm:$0xff]
        %v1000 = vld [vmem:[#allocation2 + $0x1370] sm:$0xff]
        %v1001 = vld [vmem:[#allocation2 + $0x1378] sm:$0xff]
        %v1002 = vld [vmem:[#allocation2 + $0x1380] sm:$0xff]
        %v1003 = vld [vmem:[#allocation2 + $0x1388] sm:$0xff]
        %v1004 = vld [vmem:[#allocation2 + $0x1390] sm:$0xff]
        %v1005 = vld [vmem:[#allocation2 + $0x1398] sm:$0xff]
        %v1006 = vld [vmem:[#allocation2 + $0x13a0] sm:$0xff]
        %v1007 = vld [vmem:[#allocation2 + $0x13a8] sm:$0xff]
        %v1008 = vld [vmem:[#allocation2 + $0x13b0] sm:$0xff]
        %v1009 = vld [vmem:[#allocation2 + $0x13b8] sm:$0xff]
        %v1010 = vld [vmem:[#allocation2 + $0x13c0] sm:$0xff]
        %v1011 = vld [vmem:[#allocation2 + $0x13c8] sm:$0xff]
        %v1012 = vld [vmem:[#allocation2 + $0x13d0] sm:$0xff]
        %v1013 = vld [vmem:[#allocation2 + $0x13d8] sm:$0xff]
        %v1014 = vld [vmem:[#allocation2 + $0x13e0] sm:$0xff]
        %v1015 = vld [vmem:[#allocation2 + $0x13e8] sm:$0xff]
        %v1016 = vld [vmem:[#allocation2 + $0x13f0] sm:$0xff]
        %v1017 = vld [vmem:[#allocation2 + $0x13f8] sm:$0xff]
        %v1018 = vld [vmem:[#allocation2 + $0x1400] sm:$0xff]
        %v1019 = vld [vmem:[#allocation2 + $0x1408] sm:$0xff]
        %v1020 = vld [vmem:[#allocation2 + $0x1410] sm:$0xff]
        %v1021 = vld [vmem:[#allocation2 + $0x1418] sm:$0xff]
        %v1022 = vld [vmem:[#allocation2 + $0x1420] sm:$0xff]
        %v1023 = vld [vmem:[#allocation2 + $0x1428] sm:$0xff]
        %v1024 = vld [vmem:[#allocation2 + $0x1430] sm:$0xff]
        %v1025 = vld [vmem:[#allocation2 + $0x1438] sm:$0xff]
        %v1026 = vld [vmem:[#allocation2 + $0x1440] sm:$0xff]
        %v1027 = vld [vmem:[#allocation2 + $0x1448] sm:$0xff]
        %v1028 = vld [vmem:[#allocation2 + $0x1450] sm:$0xff]
        %v1029 = vld [vmem:[#allocation2 + $0x1458] sm:$0xff]
        %v1030 = vld [vmem:[#allocation2 + $0x1460] sm:$0xff]
        %v1031 = vld [vmem:[#allocation2 + $0x1468] sm:$0xff]
        %v1032 = vld [vmem:[#allocation2 + $0x1470] sm:$0xff]
        %v1033 = vld [vmem:[#allocation2 + $0x1478] sm:$0xff]
        %v1034 = vld [vmem:[#allocation2 + $0x1480] sm:$0xff]
        %v1035 = vld [vmem:[#allocation2 + $0x1488] sm:$0xff]
        %v1036 = vld [vmem:[#allocation2 + $0x1490] sm:$0xff]
        %v1037 = vld [vmem:[#allocation2 + $0x1498] sm:$0xff]
        %v1038 = vld [vmem:[#allocation2 + $0x14a0] sm:$0xff]
        %v1039 = vld [vmem:[#allocation2 + $0x14a8] sm:$0xff]
        %v1040 = vld [vmem:[#allocation2 + $0x14b0] sm:$0xff]
        %v1041 = vld [vmem:[#allocation2 + $0x14b8] sm:$0xff]
        %v1042 = vld [vmem:[#allocation2 + $0x14c0] sm:$0xff]
        %v1043 = vld [vmem:[#allocation2 + $0x14c8] sm:$0xff]
        %v1044 = vld [vmem:[#allocation2 + $0x14d0] sm:$0xff]
        %v1045 = vld [vmem:[#allocation2 + $0x14d8] sm:$0xff]
        %v1046 = vld [vmem:[#allocation2 + $0x14e0] sm:$0xff]
        %v1047 = vld [vmem:[#allocation2 + $0x14e8] sm:$0xff]
        %v1048 = vld [vmem:[#allocation2 + $0x14f0] sm:$0xff]
        %v1049 = vld [vmem:[#allocation2 + $0x14f8] sm:$0xff]
        %v1050 = vld [vmem:[#allocation2 + $0x1500] sm:$0xff]
        %v1051 = vld [vmem:[#allocation2 + $0x1508] sm:$0xff]
        %v1052 = vld [vmem:[#allocation2 + $0x1510] sm:$0xff]
        %v1053 = vld [vmem:[#allocation2 + $0x1518] sm:$0xff]
        %v1054 = vld [vmem:[#allocation2 + $0x1520] sm:$0xff]
        %v1055 = vld [vmem:[#allocation2 + $0x1528] sm:$0xff]
        %v1056 = vld [vmem:[#allocation2 + $0x1530] sm:$0xff]
        %v1057 = vld [vmem:[#allocation2 + $0x1538] sm:$0xff]
        %v1058 = vld [vmem:[#allocation2 + $0x1540] sm:$0xff]
        %v1059 = vld [vmem:[#allocation2 + $0x1548] sm:$0xff]
        %v1060 = vld [vmem:[#allocation2 + $0x1550] sm:$0xff]
        %v1061 = vld [vmem:[#allocation2 + $0x1558] sm:$0xff]
        %v1062 = vld [vmem:[#allocation2 + $0x1560] sm:$0xff]
        %v1063 = vld [vmem:[#allocation2 + $0x1568] sm:$0xff]
        %v1064 = vld [vmem:[#allocation2 + $0x1570] sm:$0xff]
        %v1065 = vld [vmem:[#allocation2 + $0x1578] sm:$0xff]
        %v1066 = vld [vmem:[#allocation2 + $0x1580] sm:$0xff]
        %v1067 = vld [vmem:[#allocation2 + $0x1588] sm:$0xff]
        %v1068 = vld [vmem:[#allocation2 + $0x1590] sm:$0xff]
        %v1069 = vld [vmem:[#allocation2 + $0x1598] sm:$0xff]
        %v1070 = vld [vmem:[#allocation2 + $0x15a0] sm:$0xff]
        %v1071 = vld [vmem:[#allocation2 + $0x15a8] sm:$0xff]
        %v1072 = vld [vmem:[#allocation2 + $0x15b0] sm:$0xff]
        %v1073 = vld [vmem:[#allocation2 + $0x15b8] sm:$0xff]
        %v1074 = vld [vmem:[#allocation2 + $0x15c0] sm:$0xff]
        %v1075 = vld [vmem:[#allocation2 + $0x15c8] sm:$0xff]
        %v1076 = vld [vmem:[#allocation2 + $0x15d0] sm:$0xff]
        %v1077 = vld [vmem:[#allocation2 + $0x15d8] sm:$0xff]
        %v1078 = vld [vmem:[#allocation2 + $0x15e0] sm:$0xff]
        %v1079 = vld [vmem:[#allocation2 + $0x15e8] sm:$0xff]
        %v1080 = vld [vmem:[#allocation2 + $0x15f0] sm:$0xff]
        %v1081 = vld [vmem:[#allocation2 + $0x15f8] sm:$0xff]
        %v1082 = vld [vmem:[#allocation2 + $0x1600] sm:$0xff]
        %v1083 = vld [vmem:[#allocation2 + $0x1608] sm:$0xff]
        %v1084 = vld [vmem:[#allocation2 + $0x1610] sm:$0xff]
        %v1085 = vld [vmem:[#allocation2 + $0x1618] sm:$0xff]
        %v1086 = vld [vmem:[#allocation2 + $0x1620] sm:$0xff]
        %v1087 = vld [vmem:[#allocation2 + $0x1628] sm:$0xff]
        %v1088 = vld [vmem:[#allocation2 + $0x1630] sm:$0xff]
        %v1089 = vld [vmem:[#allocation2 + $0x1638] sm:$0xff]
        %v1090 = vld [vmem:[#allocation2 + $0x1640] sm:$0xff]
        %v1091 = vld [vmem:[#allocation2 + $0x1648] sm:$0xff]
        %v1092 = vld [vmem:[#allocation2 + $0x1650] sm:$0xff]
        %v1093 = vld [vmem:[#allocation2 + $0x1658] sm:$0xff]
        %v1094 = vld [vmem:[#allocation2 + $0x1660] sm:$0xff]
        %v1095 = vld [vmem:[#allocation2 + $0x1668] sm:$0xff]
        %v1096 = vld [vmem:[#allocation2 + $0x1670] sm:$0xff]
        %v1097 = vld [vmem:[#allocation2 + $0x1678] sm:$0xff]
        %v1098 = vld [vmem:[#allocation2 + $0x1680] sm:$0xff]
        %v1099 = vld [vmem:[#allocation2 + $0x1688] sm:$0xff]
        %v1100 = vld [vmem:[#allocation2 + $0x1690] sm:$0xff]
        %v1101 = vld [vmem:[#allocation2 + $0x1698] sm:$0xff]
        %v1102 = vld [vmem:[#allocation2 + $0x16a0] sm:$0xff]
        %v1103 = vld [vmem:[#allocation2 + $0x16a8] sm:$0xff]
        %v1104 = vld [vmem:[#allocation2 + $0x16b0] sm:$0xff]
        %v1105 = vld [vmem:[#allocation2 + $0x16b8] sm:$0xff]
        %v1106 = vld [vmem:[#allocation2 + $0x16c0] sm:$0xff]
        %v1107 = vld [vmem:[#allocation2 + $0x16c8] sm:$0xff]
        %v1108 = vld [vmem:[#allocation2 + $0x16d0] sm:$0xff]
        %v1109 = vld [vmem:[#allocation2 + $0x16d8] sm:$0xff]
        %v1110 = vld [vmem:[#allocation2 + $0x16e0] sm:$0xff]
        %v1111 = vld [vmem:[#allocation2 + $0x16e8] sm:$0xff]
        %v1112 = vld [vmem:[#allocation2 + $0x16f0] sm:$0xff]
        %v1113 = vld [vmem:[#allocation2 + $0x16f8] sm:$0xff]
        %v1114 = vld [vmem:[#allocation2 + $0x1700] sm:$0xff]
        %v1115 = vld [vmem:[#allocation2 + $0x1708] sm:$0xff]
        %v1116 = vld [vmem:[#allocation2 + $0x1710] sm:$0xff]
        %v1117 = vld [vmem:[#allocation2 + $0x1718] sm:$0xff]
        %v1118 = vld [vmem:[#allocation2 + $0x1720] sm:$0xff]
        %v1119 = vld [vmem:[#allocation2 + $0x1728] sm:$0xff]
        %v1120 = vld [vmem:[#allocation2 + $0x1730] sm:$0xff]
        %v1121 = vld [vmem:[#allocation2 + $0x1738] sm:$0xff]
        %v1122 = vld [vmem:[#allocation2 + $0x1740] sm:$0xff]
        %v1123 = vld [vmem:[#allocation2 + $0x1748] sm:$0xff]
        %v1124 = vld [vmem:[#allocation2 + $0x1750] sm:$0xff]
        %v1125 = vld [vmem:[#allocation2 + $0x1758] sm:$0xff]
        %v1126 = vld [vmem:[#allocation2 + $0x1760] sm:$0xff]
        %v1127 = vld [vmem:[#allocation2 + $0x1768] sm:$0xff]
        %v1128 = vld [vmem:[#allocation2 + $0x1770] sm:$0xff]
        %v1129 = vld [vmem:[#allocation2 + $0x1778] sm:$0xff]
        %v1130 = vld [vmem:[#allocation2 + $0x1780] sm:$0xff]
        %v1131 = vld [vmem:[#allocation2 + $0x1788] sm:$0xff]
        %v1132 = vld [vmem:[#allocation2 + $0x1790] sm:$0xff]
        %v1133 = vld [vmem:[#allocation2 + $0x1798] sm:$0xff]
        %v1134 = vld [vmem:[#allocation2 + $0x17a0] sm:$0xff]
        %v1135 = vld [vmem:[#allocation2 + $0x17a8] sm:$0xff]
        %v1136 = vld [vmem:[#allocation2 + $0x17b0] sm:$0xff]
        %v1137 = vld [vmem:[#allocation2 + $0x17b8] sm:$0xff]
        %v1138 = vld [vmem:[#allocation2 + $0x17c0] sm:$0xff]
        %v1139 = vld [vmem:[#allocation2 + $0x17c8] sm:$0xff]
        %v1140 = vld [vmem:[#allocation2 + $0x17d0] sm:$0xff]
        %v1141 = vld [vmem:[#allocation2 + $0x17d8] sm:$0xff]
        %v1142 = vld [vmem:[#allocation2 + $0x17e0] sm:$0xff]
        %v1143 = vld [vmem:[#allocation2 + $0x17e8] sm:$0xff]
        %v1144 = vld [vmem:[#allocation2 + $0x17f0] sm:$0xff]
        %v1145 = vld [vmem:[#allocation2 + $0x17f8] sm:$0xff]
        %v1146 = vld [vmem:[#allocation2 + $0x1800] sm:$0xff]
        %v1147 = vld [vmem:[#allocation2 + $0x1808] sm:$0xff]
        %v1148 = vld [vmem:[#allocation2 + $0x1810] sm:$0xff]
        %v1149 = vld [vmem:[#allocation2 + $0x1818] sm:$0xff]
        %v1150 = vld [vmem:[#allocation2 + $0x1820] sm:$0xff]
        %v1151 = vld [vmem:[#allocation2 + $0x1828] sm:$0xff]
        %v1152 = vld [vmem:[#allocation2 + $0x1830] sm:$0xff]
        %v1153 = vld [vmem:[#allocation2 + $0x1838] sm:$0xff]
        %v1154 = vld [vmem:[#allocation2 + $0x1840] sm:$0xff]
        %v1155 = vld [vmem:[#allocation2 + $0x1848] sm:$0xff]
        %v1156 = vld [vmem:[#allocation2 + $0x1850] sm:$0xff]
        %v1157 = vld [vmem:[#allocation2 + $0x1858] sm:$0xff]
        %v1158 = vld [vmem:[#allocation2 + $0x1860] sm:$0xff]
        %v1159 = vld [vmem:[#allocation2 + $0x1868] sm:$0xff]
        %v1160 = vld [vmem:[#allocation2 + $0x1870] sm:$0xff]
        %v1161 = vld [vmem:[#allocation2 + $0x1878] sm:$0xff]
        %v1162 = vld [vmem:[#allocation2 + $0x1880] sm:$0xff]
        %v1163 = vld [vmem:[#allocation2 + $0x1888] sm:$0xff]
        %v1164 = vld [vmem:[#allocation2 + $0x1890] sm:$0xff]
        %v1165 = vld [vmem:[#allocation2 + $0x1898] sm:$0xff]
        %v1166 = vld [vmem:[#allocation2 + $0x18a0] sm:$0xff]
        %v1167 = vld [vmem:[#allocation2 + $0x18a8] sm:$0xff]
        %v1168 = vld [vmem:[#allocation2 + $0x18b0] sm:$0xff]
        %v1169 = vld [vmem:[#allocation2 + $0x18b8] sm:$0xff]
        %v1170 = vld [vmem:[#allocation2 + $0x18c0] sm:$0xff]
        %v1171 = vld [vmem:[#allocation2 + $0x18c8] sm:$0xff]
        %v1172 = vld [vmem:[#allocation2 + $0x18d0] sm:$0xff]
        %v1173 = vld [vmem:[#allocation2 + $0x18d8] sm:$0xff]
        %v1174 = vld [vmem:[#allocation2 + $0x18e0] sm:$0xff]
        %v1175 = vld [vmem:[#allocation2 + $0x18e8] sm:$0xff]
        %v1176 = vld [vmem:[#allocation2 + $0x18f0] sm:$0xff]
        %v1177 = vld [vmem:[#allocation2 + $0x18f8] sm:$0xff]
        %v1178 = vld [vmem:[#allocation2 + $0x1900] sm:$0xff]
        %v1179 = vld [vmem:[#allocation2 + $0x1908] sm:$0xff]
        %v1180 = vld [vmem:[#allocation2 + $0x1910] sm:$0xff]
        %v1181 = vld [vmem:[#allocation2 + $0x1918] sm:$0xff]
        %v1182 = vld [vmem:[#allocation2 + $0x1920] sm:$0xff]
        %v1183 = vld [vmem:[#allocation2 + $0x1928] sm:$0xff]
        %v1184 = vld [vmem:[#allocation2 + $0x1930] sm:$0xff]
        %v1185 = vld [vmem:[#allocation2 + $0x1938] sm:$0xff]
        %v1186 = vld [vmem:[#allocation2 + $0x1940] sm:$0xff]
        %v1187 = vld [vmem:[#allocation2 + $0x1948] sm:$0xff]
        %v1188 = vld [vmem:[#allocation2 + $0x1950] sm:$0xff]
        %v1189 = vld [vmem:[#allocation2 + $0x1958] sm:$0xff]
        %v1190 = vld [vmem:[#allocation2 + $0x1960] sm:$0xff]
        %v1191 = vld [vmem:[#allocation2 + $0x1968] sm:$0xff]
        %v1192 = vld [vmem:[#allocation2 + $0x1970] sm:$0xff]
        %v1193 = vld [vmem:[#allocation2 + $0x1978] sm:$0xff]
        %v1194 = vld [vmem:[#allocation2 + $0x1980] sm:$0xff]
        %v1195 = vld [vmem:[#allocation2 + $0x1988] sm:$0xff]
        %v1196 = vld [vmem:[#allocation2 + $0x1990] sm:$0xff]
        %v1197 = vld [vmem:[#allocation2 + $0x1998] sm:$0xff]
        %v1198 = vld [vmem:[#allocation2 + $0x19a0] sm:$0xff]
        %v1199 = vld [vmem:[#allocation2 + $0x19a8] sm:$0xff]
        %v1200 = vld [vmem:[#allocation2 + $0x19b0] sm:$0xff]
        %v1201 = vld [vmem:[#allocation2 + $0x19b8] sm:$0xff]
        %v1202 = vld [vmem:[#allocation2 + $0x19c0] sm:$0xff]
        %v1203 = vld [vmem:[#allocation2 + $0x19c8] sm:$0xff]
        %v1204 = vld [vmem:[#allocation2 + $0x19d0] sm:$0xff]
        %v1205 = vld [vmem:[#allocation2 + $0x19d8] sm:$0xff]
        %v1206 = vld [vmem:[#allocation2 + $0x19e0] sm:$0xff]
        %v1207 = vld [vmem:[#allocation2 + $0x19e8] sm:$0xff]
        %v1208 = vld [vmem:[#allocation2 + $0x19f0] sm:$0xff]
        %v1209 = vld [vmem:[#allocation2 + $0x19f8] sm:$0xff]
        %v1210 = vld [vmem:[#allocation2 + $0x1a00] sm:$0xff]
        %v1211 = vld [vmem:[#allocation2 + $0x1a08] sm:$0xff]
        %v1212 = vld [vmem:[#allocation2 + $0x1a10] sm:$0xff]
        %v1213 = vld [vmem:[#allocation2 + $0x1a18] sm:$0xff]
        %v1214 = vld [vmem:[#allocation2 + $0x1a20] sm:$0xff]
        %v1215 = vld [vmem:[#allocation2 + $0x1a28] sm:$0xff]
        %v1216 = vld [vmem:[#allocation2 + $0x1a30] sm:$0xff]
        %v1217 = vld [vmem:[#allocation2 + $0x1a38] sm:$0xff]
        %v1218 = vld [vmem:[#allocation2 + $0x1a40] sm:$0xff]
        %v1219 = vld [vmem:[#allocation2 + $0x1a48] sm:$0xff]
        %v1220 = vld [vmem:[#allocation2 + $0x1a50] sm:$0xff]
        %v1221 = vld [vmem:[#allocation2 + $0x1a58] sm:$0xff]
        %v1222 = vld [vmem:[#allocation2 + $0x1a60] sm:$0xff]
        %v1223 = vld [vmem:[#allocation2 + $0x1a68] sm:$0xff]
        %v1224 = vld [vmem:[#allocation2 + $0x1a70] sm:$0xff]
        %v1225 = vld [vmem:[#allocation2 + $0x1a78] sm:$0xff]
        %v1226 = vld [vmem:[#allocation2 + $0x1a80] sm:$0xff]
        %v1227 = vld [vmem:[#allocation2 + $0x1a88] sm:$0xff]
        %v1228 = vld [vmem:[#allocation2 + $0x1a90] sm:$0xff]
        %v1229 = vld [vmem:[#allocation2 + $0x1a98] sm:$0xff]
        %v1230 = vld [vmem:[#allocation2 + $0x1aa0] sm:$0xff]
        %v1231 = vld [vmem:[#allocation2 + $0x1aa8] sm:$0xff]
        %v1232 = vld [vmem:[#allocation2 + $0x1ab0] sm:$0xff]
        %v1233 = vld [vmem:[#allocation2 + $0x1ab8] sm:$0xff]
        %v1234 = vld [vmem:[#allocation2 + $0x1ac0] sm:$0xff]
        %v1235 = vld [vmem:[#allocation2 + $0x1ac8] sm:$0xff]
        %v1236 = vld [vmem:[#allocation2 + $0x1ad0] sm:$0xff]
        %v1237 = vld [vmem:[#allocation2 + $0x1ad8] sm:$0xff]
        %v1238 = vld [vmem:[#allocation2 + $0x1ae0] sm:$0xff]
        %v1239 = vld [vmem:[#allocation2 + $0x1ae8] sm:$0xff]
        %v1240 = vld [vmem:[#allocation2 + $0x1af0] sm:$0xff]
        %v1241 = vld [vmem:[#allocation2 + $0x1af8] sm:$0xff]
        %v1242 = vld [vmem:[#allocation2 + $0x1b00] sm:$0xff]
        %v1243 = vld [vmem:[#allocation2 + $0x1b08] sm:$0xff]
        %v1244 = vld [vmem:[#allocation2 + $0x1b10] sm:$0xff]
        %v1245 = vld [vmem:[#allocation2 + $0x1b18] sm:$0xff]
        %v1246 = vld [vmem:[#allocation2 + $0x1b20] sm:$0xff]
        %v1247 = vld [vmem:[#allocation2 + $0x1b28] sm:$0xff]
        %v1248 = vld [vmem:[#allocation2 + $0x1b30] sm:$0xff]
        %v1249 = vld [vmem:[#allocation2 + $0x1b38] sm:$0xff]
        %v1250 = vld [vmem:[#allocation2 + $0x1b40] sm:$0xff]
        %v1251 = vld [vmem:[#allocation2 + $0x1b48] sm:$0xff]
        %v1252 = vld [vmem:[#allocation2 + $0x1b50] sm:$0xff]
        %v1253 = vld [vmem:[#allocation2 + $0x1b58] sm:$0xff]
        %v1254 = vld [vmem:[#allocation2 + $0x1b60] sm:$0xff]
        %v1255 = vld [vmem:[#allocation2 + $0x1b68] sm:$0xff]
        %v1256 = vld [vmem:[#allocation2 + $0x1b70] sm:$0xff]
        %v1257 = vld [vmem:[#allocation2 + $0x1b78] sm:$0xff]
        %v1258 = vld [vmem:[#allocation2 + $0x1b80] sm:$0xff]
        %v1259 = vld [vmem:[#allocation2 + $0x1b88] sm:$0xff]
        %v1260 = vld [vmem:[#allocation2 + $0x1b90] sm:$0xff]
        %v1261 = vld [vmem:[#allocation2 + $0x1b98] sm:$0xff]
        %v1262 = vld [vmem:[#allocation2 + $0x1ba0] sm:$0xff]
        %v1263 = vld [vmem:[#allocation2 + $0x1ba8] sm:$0xff]
        %v1264 = vld [vmem:[#allocation2 + $0x1bb0] sm:$0xff]
        %v1265 = vld [vmem:[#allocation2 + $0x1bb8] sm:$0xff]
        %v1266 = vld [vmem:[#allocation2 + $0x1bc0] sm:$0xff]
        %v1267 = vld [vmem:[#allocation2 + $0x1bc8] sm:$0xff]
        %v1268 = vld [vmem:[#allocation2 + $0x1bd0] sm:$0xff]
        %v1269 = vld [vmem:[#allocation2 + $0x1bd8] sm:$0xff]
        %v1270 = vld [vmem:[#allocation2 + $0x1be0] sm:$0xff]
        %v1271 = vld [vmem:[#allocation2 + $0x1be8] sm:$0xff]
        %v1272 = vld [vmem:[#allocation2 + $0x1bf0] sm:$0xff]
        %v1273 = vld [vmem:[#allocation2 + $0x1bf8] sm:$0xff]
        %v1274 = vld [vmem:[#allocation2 + $0x1c00] sm:$0xff]
        %v1275 = vld [vmem:[#allocation2 + $0x1c08] sm:$0xff]
        %v1276 = vld [vmem:[#allocation2 + $0x1c10] sm:$0xff]
        %v1277 = vld [vmem:[#allocation2 + $0x1c18] sm:$0xff]
        %v1278 = vld [vmem:[#allocation2 + $0x1c20] sm:$0xff]
        %v1279 = vld [vmem:[#allocation2 + $0x1c28] sm:$0xff]
        %v1280 = vld [vmem:[#allocation2 + $0x1c30] sm:$0xff]
        %v1281 = vld [vmem:[#allocation2 + $0x1c38] sm:$0xff]
        %v1282 = vld [vmem:[#allocation2 + $0x1c40] sm:$0xff]
        %v1283 = vld [vmem:[#allocation2 + $0x1c48] sm:$0xff]
        %v1284 = vld [vmem:[#allocation2 + $0x1c50] sm:$0xff]
        %v1285 = vld [vmem:[#allocation2 + $0x1c58] sm:$0xff]
        %v1286 = vld [vmem:[#allocation2 + $0x1c60] sm:$0xff]
        %v1287 = vld [vmem:[#allocation2 + $0x1c68] sm:$0xff]
        %v1288 = vld [vmem:[#allocation2 + $0x1c70] sm:$0xff]
        %v1289 = vld [vmem:[#allocation2 + $0x1c78] sm:$0xff]
        %v1290 = vld [vmem:[#allocation2 + $0x1c80] sm:$0xff]
        %v1291 = vld [vmem:[#allocation2 + $0x1c88] sm:$0xff]
        %v1292 = vld [vmem:[#allocation2 + $0x1c90] sm:$0xff]
        %v1293 = vld [vmem:[#allocation2 + $0x1c98] sm:$0xff]
        %v1294 = vld [vmem:[#allocation2 + $0x1ca0] sm:$0xff]
        %v1295 = vld [vmem:[#allocation2 + $0x1ca8] sm:$0xff]
        %v1296 = vld [vmem:[#allocation2 + $0x1cb0] sm:$0xff]
        %v1297 = vld [vmem:[#allocation2 + $0x1cb8] sm:$0xff]
        %v1298 = vld [vmem:[#allocation2 + $0x1cc0] sm:$0xff]
        %v1299 = vld [vmem:[#allocation2 + $0x1cc8] sm:$0xff]
        %v1300 = vld [vmem:[#allocation2 + $0x1cd0] sm:$0xff]
        %v1301 = vld [vmem:[#allocation2 + $0x1cd8] sm:$0xff]
        %v1302 = vld [vmem:[#allocation2 + $0x1ce0] sm:$0xff]
        %v1303 = vld [vmem:[#allocation2 + $0x1ce8] sm:$0xff]
        %v1304 = vld [vmem:[#allocation2 + $0x1cf0] sm:$0xff]
        %v1305 = vld [vmem:[#allocation2 + $0x1cf8] sm:$0xff]
        %v1306 = vld [vmem:[#allocation2 + $0x1d00] sm:$0xff]
        %v1307 = vld [vmem:[#allocation2 + $0x1d08] sm:$0xff]
        %v1308 = vld [vmem:[#allocation2 + $0x1d10] sm:$0xff]
        %v1309 = vld [vmem:[#allocation2 + $0x1d18] sm:$0xff]
        %v1310 = vld [vmem:[#allocation2 + $0x1d20] sm:$0xff]
        %v1311 = vld [vmem:[#allocation2 + $0x1d28] sm:$0xff]
        %v1312 = vld [vmem:[#allocation2 + $0x1d30] sm:$0xff]
        %v1313 = vld [vmem:[#allocation2 + $0x1d38] sm:$0xff]
        %v1314 = vld [vmem:[#allocation2 + $0x1d40] sm:$0xff]
        %v1315 = vld [vmem:[#allocation2 + $0x1d48] sm:$0xff]
        %v1316 = vld [vmem:[#allocation2 + $0x1d50] sm:$0xff]
        %v1317 = vld [vmem:[#allocation2 + $0x1d58] sm:$0xff]
        %v1318 = vld [vmem:[#allocation2 + $0x1d60] sm:$0xff]
        %v1319 = vld [vmem:[#allocation2 + $0x1d68] sm:$0xff]
        %v1320 = vld [vmem:[#allocation2 + $0x1d70] sm:$0xff]
        %v1321 = vld [vmem:[#allocation2 + $0x1d78] sm:$0xff]
        %v1322 = vld [vmem:[#allocation2 + $0x1d80] sm:$0xff]
        %v1323 = vld [vmem:[#allocation2 + $0x1d88] sm:$0xff]
        %v1324 = vld [vmem:[#allocation2 + $0x1d90] sm:$0xff]
        %v1325 = vld [vmem:[#allocation2 + $0x1d98] sm:$0xff]
        %v1326 = vld [vmem:[#allocation2 + $0x1da0] sm:$0xff]
        %v1327 = vld [vmem:[#allocation2 + $0x1da8] sm:$0xff]
        %v1328 = vld [vmem:[#allocation2 + $0x1db0] sm:$0xff]
        %v1329 = vld [vmem:[#allocation2 + $0x1db8] sm:$0xff]
        %v1330 = vld [vmem:[#allocation2 + $0x1dc0] sm:$0xff]
        %v1331 = vld [vmem:[#allocation2 + $0x1dc8] sm:$0xff]
        %v1332 = vld [vmem:[#allocation2 + $0x1dd0] sm:$0xff]
        %v1333 = vld [vmem:[#allocation2 + $0x1dd8] sm:$0xff]
        %v1334 = vld [vmem:[#allocation2 + $0x1de0] sm:$0xff]
        %v1335 = vld [vmem:[#allocation2 + $0x1de8] sm:$0xff]
        %v1336 = vld [vmem:[#allocation2 + $0x1df0] sm:$0xff]
        %v1337 = vld [vmem:[#allocation2 + $0x1df8] sm:$0xff]
        %v1338 = vld [vmem:[#allocation2 + $0x1e00] sm:$0xff]
        %v1339 = vld [vmem:[#allocation2 + $0x1e08] sm:$0xff]
        %v1340 = vld [vmem:[#allocation2 + $0x1e10] sm:$0xff]
        %v1341 = vld [vmem:[#allocation2 + $0x1e18] sm:$0xff]
        %v1342 = vld [vmem:[#allocation2 + $0x1e20] sm:$0xff]
        %v1343 = vld [vmem:[#allocation2 + $0x1e28] sm:$0xff]
        %v1344 = vld [vmem:[#allocation2 + $0x1e30] sm:$0xff]
        %v1345 = vld [vmem:[#allocation2 + $0x1e38] sm:$0xff]
        %v1346 = vld [vmem:[#allocation2 + $0x1e40] sm:$0xff]
        %v1347 = vld [vmem:[#allocation2 + $0x1e48] sm:$0xff]
        %v1348 = vld [vmem:[#allocation2 + $0x1e50] sm:$0xff]
        %v1349 = vld [vmem:[#allocation2 + $0x1e58] sm:$0xff]
        %v1350 = vld [vmem:[#allocation2 + $0x1e60] sm:$0xff]
        %v1351 = vld [vmem:[#allocation2 + $0x1e68] sm:$0xff]
        %v1352 = vld [vmem:[#allocation2 + $0x1e70] sm:$0xff]
        %v1353 = vld [vmem:[#allocation2 + $0x1e78] sm:$0xff]
        %v1354 = vld [vmem:[#allocation2 + $0x1e80] sm:$0xff]
        %v1355 = vld [vmem:[#allocation2 + $0x1e88] sm:$0xff]
        %v1356 = vld [vmem:[#allocation2 + $0x1e90] sm:$0xff]
        %v1357 = vld [vmem:[#allocation2 + $0x1e98] sm:$0xff]
        %v1358 = vld [vmem:[#allocation2 + $0x1ea0] sm:$0xff]
        %v1359 = vld [vmem:[#allocation2 + $0x1ea8] sm:$0xff]
        %v1360 = vld [vmem:[#allocation2 + $0x1eb0] sm:$0xff]
        %v1361 = vld [vmem:[#allocation2 + $0x1eb8] sm:$0xff]
        %v1362 = vld [vmem:[#allocation2 + $0x1ec0] sm:$0xff]
        %v1363 = vld [vmem:[#allocation2 + $0x1ec8] sm:$0xff]
        %v1364 = vld [vmem:[#allocation2 + $0x1ed0] sm:$0xff]
        %v1365 = vld [vmem:[#allocation2 + $0x1ed8] sm:$0xff]
        %v1366 = vld [vmem:[#allocation2 + $0x1ee0] sm:$0xff]
        %v1367 = vld [vmem:[#allocation2 + $0x1ee8] sm:$0xff]
        %v1368 = vld [vmem:[#allocation2 + $0x1ef0] sm:$0xff]
        %v1369 = vld [vmem:[#allocation2 + $0x1ef8] sm:$0xff]
        %v1370 = vld [vmem:[#allocation2 + $0x1f00] sm:$0xff]
        %v1371 = vld [vmem:[#allocation2 + $0x1f08] sm:$0xff]
        %v1372 = vld [vmem:[#allocation2 + $0x1f10] sm:$0xff]
        %v1373 = vld [vmem:[#allocation2 + $0x1f18] sm:$0xff]
        %v1374 = vld [vmem:[#allocation2 + $0x1f20] sm:$0xff]
        %v1375 = vld [vmem:[#allocation2 + $0x1f28] sm:$0xff]
        %v1376 = vld [vmem:[#allocation2 + $0x1f30] sm:$0xff]
        %v1377 = vld [vmem:[#allocation2 + $0x1f38] sm:$0xff]
        %v1378 = vld [vmem:[#allocation2 + $0x1f40] sm:$0xff]
        %v1379 = vld [vmem:[#allocation2 + $0x1f48] sm:$0xff]
        %v1380 = vld [vmem:[#allocation2 + $0x1f50] sm:$0xff]
        %v1381 = vld [vmem:[#allocation2 + $0x1f58] sm:$0xff]
        %v1382 = vld [vmem:[#allocation2 + $0x1f60] sm:$0xff]
        %v1383 = vld [vmem:[#allocation2 + $0x1f68] sm:$0xff]
        %v1384 = vld [vmem:[#allocation2 + $0x1f70] sm:$0xff]
        %v1385 = vld [vmem:[#allocation2 + $0x1f78] sm:$0xff]
        %v1386 = vld [vmem:[#allocation2 + $0x1f80] sm:$0xff]
        %v1387 = vld [vmem:[#allocation2 + $0x1f88] sm:$0xff]
        %v1388 = vld [vmem:[#allocation2 + $0x1f90] sm:$0xff]
        %v1389 = vld [vmem:[#allocation2 + $0x1f98] sm:$0xff]
        %v1390 = vld [vmem:[#allocation2 + $0x1fa0] sm:$0xff]
        %v1391 = vld [vmem:[#allocation2 + $0x1fa8] sm:$0xff]
        %v1392 = vld [vmem:[#allocation2 + $0x1fb0] sm:$0xff]
        %v1393 = vld [vmem:[#allocation2 + $0x1fb8] sm:$0xff]
        %v1394 = vld [vmem:[#allocation2 + $0x1fc0] sm:$0xff]
        %v1395 = vld [vmem:[#allocation2 + $0x1fc8] sm:$0xff]
        %v1396 = vld [vmem:[#allocation2 + $0x1fd0] sm:$0xff]
        %v1397 = vld [vmem:[#allocation2 + $0x1fd8] sm:$0xff]
        %v1398 = vld [vmem:[#allocation2 + $0x1fe0] sm:$0xff]
        %v1399 = vld [vmem:[#allocation2 + $0x1fe8] sm:$0xff]
        %v1400 = vld [vmem:[#allocation2 + $0x1ff0] sm:$0xff]
        %v1401 = vld [vmem:[#allocation2 + $0x1ff8] sm:$0xff]
        %v1402 = vld [vmem:[#allocation4] sm:$0xf]
        %v1404 = vperm.slane %v1402, 0
        %v1405 = vperm.slane %v1402, 1
        %v1406 = vperm.slane %v1402, 2
        %v1407 = vperm.slane %v1402, 3
        %1412 = vmatpush.msra.mxu0 %v438
        %1413 = vmatpush.msra.mxu0 %v434
        %1414 = vmatpush.msra.mxu0 %v430
        %1415 = vmatpush.msra.mxu0 %v426
        %1416 = vmatpush.msra.mxu0 %v422
        %1417 = vmatpush.msra.mxu0 %v418
        %1418 = vmatpush.msra.mxu0 %v414
        %1419 = vmatpush.msra.mxu0 %v410
        %1420 = vmatpush.msra.mxu0 %v406
        %1421 = vmatpush.msra.mxu0 %v402
        %1422 = vmatpush.msra.mxu0 %v398
        %1423 = vmatpush.msra.mxu0 %v394
        %1424 = vmatpush.msra.mxu0 %v390
        %1425 = vmatpush.msra.mxu0 %v386
        %1426 = vmatpush.msra.mxu0 %v382
        %1427 = vmatpush.msra.mxu0 %v378
        %1428 = vmatmul.f32.gmra.mxu0 %v346
        %v1429 = vpop.f32.mrf.mxu0
        %v1430 = vadd.f32 %v1404, %v1429
        %1431 = vmatmul.f32.gmra.mxu0 %v362
        %v1432 = vpop.f32.mrf.mxu0
        %v1433 = vadd.f32 %v1404, %v1432
        %1434 = vdwg.mxu0
        %1435 = vmatpush.msra.mxu0 %v502
        %1436 = vmatpush.msra.mxu0 %v498
        %1437 = vmatpush.msra.mxu0 %v494
        %1438 = vmatpush.msra.mxu0 %v490
        %1439 = vmatpush.msra.mxu0 %v486
        %1440 = vmatpush.msra.mxu0 %v482
        %1441 = vmatpush.msra.mxu0 %v478
        %1442 = vmatpush.msra.mxu0 %v474
        %1443 = vmatpush.msra.mxu0 %v470
        %1444 = vmatpush.msra.mxu0 %v466
        %1445 = vmatpush.msra.mxu0 %v462
        %1446 = vmatpush.msra.mxu0 %v458
        %1447 = vmatpush.msra.mxu0 %v454
        %1448 = vmatpush.msra.mxu0 %v450
        %1449 = vmatpush.msra.mxu0 %v446
        %1450 = vmatpush.msra.mxu0 %v442
        %1451 = vmatmul.f32.gmra.mxu0 %v347
        %v1452 = vpop.f32.mrf.mxu0
        %v1453 = vadd.f32 %v1430, %v1452
        %1454 = vmatmul.f32.gmra.mxu0 %v363
        %v1455 = vpop.f32.mrf.mxu0
        %v1456 = vadd.f32 %v1433, %v1455
        %1457 = vdwg.mxu0
        %1458 = vmatpush.msra.mxu0 %v566
        %1459 = vmatpush.msra.mxu0 %v562
        %1460 = vmatpush.msra.mxu0 %v558
        %1461 = vmatpush.msra.mxu0 %v554
        %1462 = vmatpush.msra.mxu0 %v550
        %1463 = vmatpush.msra.mxu0 %v546
        %1464 = vmatpush.msra.mxu0 %v542
        %1465 = vmatpush.msra.mxu0 %v538
        %1466 = vmatpush.msra.mxu0 %v534
        %1467 = vmatpush.msra.mxu0 %v530
        %1468 = vmatpush.msra.mxu0 %v526
        %1469 = vmatpush.msra.mxu0 %v522
        %1470 = vmatpush.msra.mxu0 %v518
        %1471 = vmatpush.msra.mxu0 %v514
        %1472 = vmatpush.msra.mxu0 %v510
        %1473 = vmatpush.msra.mxu0 %v506
        %1474 = vmatmul.f32.gmra.mxu0 %v348
        %v1475 = vpop.f32.mrf.mxu0
        %v1476 = vadd.f32 %v1453, %v1475
        %1477 = vmatmul.f32.gmra.mxu0 %v364
        %v1478 = vpop.f32.mrf.mxu0
        %v1479 = vadd.f32 %v1456, %v1478
        %1480 = vdwg.mxu0
        %1481 = vmatpush.msra.mxu0 %v630
        %1482 = vmatpush.msra.mxu0 %v626
        %1483 = vmatpush.msra.mxu0 %v622
        %1484 = vmatpush.msra.mxu0 %v618
        %1485 = vmatpush.msra.mxu0 %v614
        %1486 = vmatpush.msra.mxu0 %v610
        %1487 = vmatpush.msra.mxu0 %v606
        %1488 = vmatpush.msra.mxu0 %v602
        %1489 = vmatpush.msra.mxu0 %v598
        %1490 = vmatpush.msra.mxu0 %v594
        %1491 = vmatpush.msra.mxu0 %v590
        %1492 = vmatpush.msra.mxu0 %v586
        %1493 = vmatpush.msra.mxu0 %v582
        %1494 = vmatpush.msra.mxu0 %v578
        %1495 = vmatpush.msra.mxu0 %v574
        %1496 = vmatpush.msra.mxu0 %v570
        %1497 = vmatmul.f32.gmra.mxu0 %v349
        %v1498 = vpop.f32.mrf.mxu0
        %v1499 = vadd.f32 %v1476, %v1498
        %1500 = vmatmul.f32.gmra.mxu0 %v365
        %v1501 = vpop.f32.mrf.mxu0
        %v1502 = vadd.f32 %v1479, %v1501
        %1503 = vdwg.mxu0
        %1504 = vmatpush.msra.mxu0 %v694
        %1505 = vmatpush.msra.mxu0 %v690
        %1506 = vmatpush.msra.mxu0 %v686
        %1507 = vmatpush.msra.mxu0 %v682
        %1508 = vmatpush.msra.mxu0 %v678
        %1509 = vmatpush.msra.mxu0 %v674
        %1510 = vmatpush.msra.mxu0 %v670
        %1511 = vmatpush.msra.mxu0 %v666
        %1512 = vmatpush.msra.mxu0 %v662
        %1513 = vmatpush.msra.mxu0 %v658
        %1514 = vmatpush.msra.mxu0 %v654
        %1515 = vmatpush.msra.mxu0 %v650
        %1516 = vmatpush.msra.mxu0 %v646
        %1517 = vmatpush.msra.mxu0 %v642
        %1518 = vmatpush.msra.mxu0 %v638
        %1519 = vmatpush.msra.mxu0 %v634
        %1520 = vmatmul.f32.gmra.mxu0 %v350
        %v1521 = vpop.f32.mrf.mxu0
        %v1522 = vadd.f32 %v1499, %v1521
        %1523 = vmatmul.f32.gmra.mxu0 %v366
        %v1524 = vpop.f32.mrf.mxu0
        %v1525 = vadd.f32 %v1502, %v1524
        %1526 = vdwg.mxu0
        %1527 = vmatpush.msra.mxu0 %v758
        %1528 = vmatpush.msra.mxu0 %v754
        %1529 = vmatpush.msra.mxu0 %v750
        %1530 = vmatpush.msra.mxu0 %v746
        %1531 = vmatpush.msra.mxu0 %v742
        %1532 = vmatpush.msra.mxu0 %v738
        %1533 = vmatpush.msra.mxu0 %v734
        %1534 = vmatpush.msra.mxu0 %v730
        %1535 = vmatpush.msra.mxu0 %v726
        %1536 = vmatpush.msra.mxu0 %v722
        %1537 = vmatpush.msra.mxu0 %v718
        %1538 = vmatpush.msra.mxu0 %v714
        %1539 = vmatpush.msra.mxu0 %v710
        %1540 = vmatpush.msra.mxu0 %v706
        %1541 = vmatpush.msra.mxu0 %v702
        %1542 = vmatpush.msra.mxu0 %v698
        %1543 = vmatmul.f32.gmra.mxu0 %v351
        %v1544 = vpop.f32.mrf.mxu0
        %v1545 = vadd.f32 %v1522, %v1544
        %1546 = vmatmul.f32.gmra.mxu0 %v367
        %v1547 = vpop.f32.mrf.mxu0
        %v1548 = vadd.f32 %v1525, %v1547
        %1549 = vdwg.mxu0
        %1550 = vmatpush.msra.mxu0 %v822
        %1551 = vmatpush.msra.mxu0 %v818
        %1552 = vmatpush.msra.mxu0 %v814
        %1553 = vmatpush.msra.mxu0 %v810
        %1554 = vmatpush.msra.mxu0 %v806
        %1555 = vmatpush.msra.mxu0 %v802
        %1556 = vmatpush.msra.mxu0 %v798
        %1557 = vmatpush.msra.mxu0 %v794
        %1558 = vmatpush.msra.mxu0 %v790
        %1559 = vmatpush.msra.mxu0 %v786
        %1560 = vmatpush.msra.mxu0 %v782
        %1561 = vmatpush.msra.mxu0 %v778
        %1562 = vmatpush.msra.mxu0 %v774
        %1563 = vmatpush.msra.mxu0 %v770
        %1564 = vmatpush.msra.mxu0 %v766
        %1565 = vmatpush.msra.mxu0 %v762
        %1566 = vmatmul.f32.gmra.mxu0 %v352
        %v1567 = vpop.f32.mrf.mxu0
        %v1568 = vadd.f32 %v1545, %v1567
        %1569 = vmatmul.f32.gmra.mxu0 %v368
        %v1570 = vpop.f32.mrf.mxu0
        %v1571 = vadd.f32 %v1548, %v1570
        %1572 = vdwg.mxu0
        %1573 = vmatpush.msra.mxu0 %v886
        %1574 = vmatpush.msra.mxu0 %v882
        %1575 = vmatpush.msra.mxu0 %v878
        %1576 = vmatpush.msra.mxu0 %v874
        %1577 = vmatpush.msra.mxu0 %v870
        %1578 = vmatpush.msra.mxu0 %v866
        %1579 = vmatpush.msra.mxu0 %v862
        %1580 = vmatpush.msra.mxu0 %v858
        %1581 = vmatpush.msra.mxu0 %v854
        %1582 = vmatpush.msra.mxu0 %v850
        %1583 = vmatpush.msra.mxu0 %v846
        %1584 = vmatpush.msra.mxu0 %v842
        %1585 = vmatpush.msra.mxu0 %v838
        %1586 = vmatpush.msra.mxu0 %v834
        %1587 = vmatpush.msra.mxu0 %v830
        %1588 = vmatpush.msra.mxu0 %v826
        %1589 = vmatmul.f32.gmra.mxu0 %v353
        %v1590 = vpop.f32.mrf.mxu0
        %v1591 = vadd.f32 %v1568, %v1590
        %1592 = vmatmul.f32.gmra.mxu0 %v369
        %v1593 = vpop.f32.mrf.mxu0
        %v1594 = vadd.f32 %v1571, %v1593
        %1595 = vdwg.mxu0
        %1596 = vmatpush.msra.mxu0 %v950
        %1597 = vmatpush.msra.mxu0 %v946
        %1598 = vmatpush.msra.mxu0 %v942
        %1599 = vmatpush.msra.mxu0 %v938
        %1600 = vmatpush.msra.mxu0 %v934
        %1601 = vmatpush.msra.mxu0 %v930
        %1602 = vmatpush.msra.mxu0 %v926
        %1603 = vmatpush.msra.mxu0 %v922
        %1604 = vmatpush.msra.mxu0 %v918
        %1605 = vmatpush.msra.mxu0 %v914
        %1606 = vmatpush.msra.mxu0 %v910
        %1607 = vmatpush.msra.mxu0 %v906
        %1608 = vmatpush.msra.mxu0 %v902
        %1609 = vmatpush.msra.mxu0 %v898
        %1610 = vmatpush.msra.mxu0 %v894
        %1611 = vmatpush.msra.mxu0 %v890
        %1612 = vmatmul.f32.gmra.mxu0 %v354
        %v1613 = vpop.f32.mrf.mxu0
        %v1614 = vadd.f32 %v1591, %v1613
        %1615 = vmatmul.f32.gmra.mxu0 %v370
        %v1616 = vpop.f32.mrf.mxu0
        %v1617 = vadd.f32 %v1594, %v1616
        %1618 = vdwg.mxu0
        %1619 = vmatpush.msra.mxu0 %v1014
        %1620 = vmatpush.msra.mxu0 %v1010
        %1621 = vmatpush.msra.mxu0 %v1006
        %1622 = vmatpush.msra.mxu0 %v1002
        %1623 = vmatpush.msra.mxu0 %v998
        %1624 = vmatpush.msra.mxu0 %v994
        %1625 = vmatpush.msra.mxu0 %v990
        %1626 = vmatpush.msra.mxu0 %v986
        %1627 = vmatpush.msra.mxu0 %v982
        %1628 = vmatpush.msra.mxu0 %v978
        %1629 = vmatpush.msra.mxu0 %v974
        %1630 = vmatpush.msra.mxu0 %v970
        %1631 = vmatpush.msra.mxu0 %v966
        %1632 = vmatpush.msra.mxu0 %v962
        %1633 = vmatpush.msra.mxu0 %v958
        %1634 = vmatpush.msra.mxu0 %v954
        %1635 = vmatmul.f32.gmra.mxu0 %v355
        %v1636 = vpop.f32.mrf.mxu0
        %v1637 = vadd.f32 %v1614, %v1636
        %1638 = vmatmul.f32.gmra.mxu0 %v371
        %v1639 = vpop.f32.mrf.mxu0
        %v1640 = vadd.f32 %v1617, %v1639
        %1641 = vdwg.mxu0
        %1642 = vmatpush.msra.mxu0 %v1078
        %1643 = vmatpush.msra.mxu0 %v1074
        %1644 = vmatpush.msra.mxu0 %v1070
        %1645 = vmatpush.msra.mxu0 %v1066
        %1646 = vmatpush.msra.mxu0 %v1062
        %1647 = vmatpush.msra.mxu0 %v1058
        %1648 = vmatpush.msra.mxu0 %v1054
        %1649 = vmatpush.msra.mxu0 %v1050
        %1650 = vmatpush.msra.mxu0 %v1046
        %1651 = vmatpush.msra.mxu0 %v1042
        %1652 = vmatpush.msra.mxu0 %v1038
        %1653 = vmatpush.msra.mxu0 %v1034
        %1654 = vmatpush.msra.mxu0 %v1030
        %1655 = vmatpush.msra.mxu0 %v1026
        %1656 = vmatpush.msra.mxu0 %v1022
        %1657 = vmatpush.msra.mxu0 %v1018
        %1658 = vmatmul.f32.gmra.mxu0 %v356
        %v1659 = vpop.f32.mrf.mxu0
        %v1660 = vadd.f32 %v1637, %v1659
        %1661 = vmatmul.f32.gmra.mxu0 %v372
        %v1662 = vpop.f32.mrf.mxu0
        %v1663 = vadd.f32 %v1640, %v1662
        %1664 = vdwg.mxu0
        %1665 = vmatpush.msra.mxu0 %v1142
        %1666 = vmatpush.msra.mxu0 %v1138
        %1667 = vmatpush.msra.mxu0 %v1134
        %1668 = vmatpush.msra.mxu0 %v1130
        %1669 = vmatpush.msra.mxu0 %v1126
        %1670 = vmatpush.msra.mxu0 %v1122
        %1671 = vmatpush.msra.mxu0 %v1118
        %1672 = vmatpush.msra.mxu0 %v1114
        %1673 = vmatpush.msra.mxu0 %v1110
        %1674 = vmatpush.msra.mxu0 %v1106
        %1675 = vmatpush.msra.mxu0 %v1102
        %1676 = vmatpush.msra.mxu0 %v1098
        %1677 = vmatpush.msra.mxu0 %v1094
        %1678 = vmatpush.msra.mxu0 %v1090
        %1679 = vmatpush.msra.mxu0 %v1086
        %1680 = vmatpush.msra.mxu0 %v1082
        %1681 = vmatmul.f32.gmra.mxu0 %v357
        %v1682 = vpop.f32.mrf.mxu0
        %v1683 = vadd.f32 %v1660, %v1682
        %1684 = vmatmul.f32.gmra.mxu0 %v373
        %v1685 = vpop.f32.mrf.mxu0
        %v1686 = vadd.f32 %v1663, %v1685
        %1687 = vdwg.mxu0
        %1688 = vmatpush.msra.mxu0 %v1206
        %1689 = vmatpush.msra.mxu0 %v1202
        %1690 = vmatpush.msra.mxu0 %v1198
        %1691 = vmatpush.msra.mxu0 %v1194
        %1692 = vmatpush.msra.mxu0 %v1190
        %1693 = vmatpush.msra.mxu0 %v1186
        %1694 = vmatpush.msra.mxu0 %v1182
        %1695 = vmatpush.msra.mxu0 %v1178
        %1696 = vmatpush.msra.mxu0 %v1174
        %1697 = vmatpush.msra.mxu0 %v1170
        %1698 = vmatpush.msra.mxu0 %v1166
        %1699 = vmatpush.msra.mxu0 %v1162
        %1700 = vmatpush.msra.mxu0 %v1158
        %1701 = vmatpush.msra.mxu0 %v1154
        %1702 = vmatpush.msra.mxu0 %v1150
        %1703 = vmatpush.msra.mxu0 %v1146
        %1704 = vmatmul.f32.gmra.mxu0 %v358
        %v1705 = vpop.f32.mrf.mxu0
        %v1706 = vadd.f32 %v1683, %v1705
        %1707 = vmatmul.f32.gmra.mxu0 %v374
        %v1708 = vpop.f32.mrf.mxu0
        %v1709 = vadd.f32 %v1686, %v1708
        %1710 = vdwg.mxu0
        %1711 = vmatpush.msra.mxu0 %v1270
        %1712 = vmatpush.msra.mxu0 %v1266
        %1713 = vmatpush.msra.mxu0 %v1262
        %1714 = vmatpush.msra.mxu0 %v1258
        %1715 = vmatpush.msra.mxu0 %v1254
        %1716 = vmatpush.msra.mxu0 %v1250
        %1717 = vmatpush.msra.mxu0 %v1246
        %1718 = vmatpush.msra.mxu0 %v1242
        %1719 = vmatpush.msra.mxu0 %v1238
        %1720 = vmatpush.msra.mxu0 %v1234
        %1721 = vmatpush.msra.mxu0 %v1230
        %1722 = vmatpush.msra.mxu0 %v1226
        %1723 = vmatpush.msra.mxu0 %v1222
        %1724 = vmatpush.msra.mxu0 %v1218
        %1725 = vmatpush.msra.mxu0 %v1214
        %1726 = vmatpush.msra.mxu0 %v1210
        %1727 = vmatmul.f32.gmra.mxu0 %v359
        %v1728 = vpop.f32.mrf.mxu0
        %v1729 = vadd.f32 %v1706, %v1728
        %1730 = vmatmul.f32.gmra.mxu0 %v375
        %v1731 = vpop.f32.mrf.mxu0
        %v1732 = vadd.f32 %v1709, %v1731
        %1733 = vdwg.mxu0
        %1734 = vmatpush.msra.mxu0 %v1334
        %1735 = vmatpush.msra.mxu0 %v1330
        %1736 = vmatpush.msra.mxu0 %v1326
        %1737 = vmatpush.msra.mxu0 %v1322
        %1738 = vmatpush.msra.mxu0 %v1318
        %1739 = vmatpush.msra.mxu0 %v1314
        %1740 = vmatpush.msra.mxu0 %v1310
        %1741 = vmatpush.msra.mxu0 %v1306
        %1742 = vmatpush.msra.mxu0 %v1302
        %1743 = vmatpush.msra.mxu0 %v1298
        %1744 = vmatpush.msra.mxu0 %v1294
        %1745 = vmatpush.msra.mxu0 %v1290
        %1746 = vmatpush.msra.mxu0 %v1286
        %1747 = vmatpush.msra.mxu0 %v1282
        %1748 = vmatpush.msra.mxu0 %v1278
        %1749 = vmatpush.msra.mxu0 %v1274
        %1750 = vmatmul.f32.gmra.mxu0 %v360
        %v1751 = vpop.f32.mrf.mxu0
        %v1752 = vadd.f32 %v1729, %v1751
        %1753 = vmatmul.f32.gmra.mxu0 %v376
        %v1754 = vpop.f32.mrf.mxu0
        %v1755 = vadd.f32 %v1732, %v1754
        %1756 = vdwg.mxu0
        %1757 = vmatpush.msra.mxu0 %v1398
        %1758 = vmatpush.msra.mxu0 %v1394
        %1759 = vmatpush.msra.mxu0 %v1390
        %1760 = vmatpush.msra.mxu0 %v1386
        %1761 = vmatpush.msra.mxu0 %v1382
        %1762 = vmatpush.msra.mxu0 %v1378
        %1763 = vmatpush.msra.mxu0 %v1374
        %1764 = vmatpush.msra.mxu0 %v1370
        %1765 = vmatpush.msra.mxu0 %v1366
        %1766 = vmatpush.msra.mxu0 %v1362
        %1767 = vmatpush.msra.mxu0 %v1358
        %1768 = vmatpush.msra.mxu0 %v1354
        %1769 = vmatpush.msra.mxu0 %v1350
        %1770 = vmatpush.msra.mxu0 %v1346
        %1771 = vmatpush.msra.mxu0 %v1342
        %1772 = vmatpush.msra.mxu0 %v1338
        %1773 = vmatmul.f32.gmra.mxu0 %v361
        %v1774 = vpop.f32.mrf.mxu0
        %v1775 = vadd.f32 %v1752, %v1774
        %1776 = vmatmul.f32.gmra.mxu0 %v377
        %v1777 = vpop.f32.mrf.mxu0
        %v1778 = vadd.f32 %v1755, %v1777
        %1779 = vdwg.mxu0
        %1780 = vmatpush.msra.mxu0 %v439
        %1781 = vmatpush.msra.mxu0 %v435
        %1782 = vmatpush.msra.mxu0 %v431
        %1783 = vmatpush.msra.mxu0 %v427
        %1784 = vmatpush.msra.mxu0 %v423
        %1785 = vmatpush.msra.mxu0 %v419
        %1786 = vmatpush.msra.mxu0 %v415
        %1787 = vmatpush.msra.mxu0 %v411
        %1788 = vmatpush.msra.mxu0 %v407
        %1789 = vmatpush.msra.mxu0 %v403
        %1790 = vmatpush.msra.mxu0 %v399
        %1791 = vmatpush.msra.mxu0 %v395
        %1792 = vmatpush.msra.mxu0 %v391
        %1793 = vmatpush.msra.mxu0 %v387
        %1794 = vmatpush.msra.mxu0 %v383
        %1795 = vmatpush.msra.mxu0 %v379
        %1796 = vmatmul.f32.gmra.mxu0 %v346
        %v1797 = vpop.f32.mrf.mxu0
        %v1798 = vadd.f32 %v1405, %v1797
        %1799 = vmatmul.f32.gmra.mxu0 %v362
        %v1800 = vpop.f32.mrf.mxu0
        %v1801 = vadd.f32 %v1405, %v1800
        %1802 = vdwg.mxu0
        %1803 = vmatpush.msra.mxu0 %v503
        %1804 = vmatpush.msra.mxu0 %v499
        %1805 = vmatpush.msra.mxu0 %v495
        %1806 = vmatpush.msra.mxu0 %v491
        %1807 = vmatpush.msra.mxu0 %v487
        %1808 = vmatpush.msra.mxu0 %v483
        %1809 = vmatpush.msra.mxu0 %v479
        %1810 = vmatpush.msra.mxu0 %v475
        %1811 = vmatpush.msra.mxu0 %v471
        %1812 = vmatpush.msra.mxu0 %v467
        %1813 = vmatpush.msra.mxu0 %v463
        %1814 = vmatpush.msra.mxu0 %v459
        %1815 = vmatpush.msra.mxu0 %v455
        %1816 = vmatpush.msra.mxu0 %v451
        %1817 = vmatpush.msra.mxu0 %v447
        %1818 = vmatpush.msra.mxu0 %v443
        %1819 = vmatmul.f32.gmra.mxu0 %v347
        %v1820 = vpop.f32.mrf.mxu0
        %v1821 = vadd.f32 %v1798, %v1820
        %1822 = vmatmul.f32.gmra.mxu0 %v363
        %v1823 = vpop.f32.mrf.mxu0
        %v1824 = vadd.f32 %v1801, %v1823
        %1825 = vdwg.mxu0
        %1826 = vmatpush.msra.mxu0 %v567
        %1827 = vmatpush.msra.mxu0 %v563
        %1828 = vmatpush.msra.mxu0 %v559
        %1829 = vmatpush.msra.mxu0 %v555
        %1830 = vmatpush.msra.mxu0 %v551
        %1831 = vmatpush.msra.mxu0 %v547
        %1832 = vmatpush.msra.mxu0 %v543
        %1833 = vmatpush.msra.mxu0 %v539
        %1834 = vmatpush.msra.mxu0 %v535
        %1835 = vmatpush.msra.mxu0 %v531
        %1836 = vmatpush.msra.mxu0 %v527
        %1837 = vmatpush.msra.mxu0 %v523
        %1838 = vmatpush.msra.mxu0 %v519
        %1839 = vmatpush.msra.mxu0 %v515
        %1840 = vmatpush.msra.mxu0 %v511
        %1841 = vmatpush.msra.mxu0 %v507
        %1842 = vmatmul.f32.gmra.mxu0 %v348
        %v1843 = vpop.f32.mrf.mxu0
        %v1844 = vadd.f32 %v1821, %v1843
        %1845 = vmatmul.f32.gmra.mxu0 %v364
        %v1846 = vpop.f32.mrf.mxu0
        %v1847 = vadd.f32 %v1824, %v1846
        %1848 = vdwg.mxu0
        %1849 = vmatpush.msra.mxu0 %v631
        %1850 = vmatpush.msra.mxu0 %v627
        %1851 = vmatpush.msra.mxu0 %v623
        %1852 = vmatpush.msra.mxu0 %v619
        %1853 = vmatpush.msra.mxu0 %v615
        %1854 = vmatpush.msra.mxu0 %v611
        %1855 = vmatpush.msra.mxu0 %v607
        %1856 = vmatpush.msra.mxu0 %v603
        %1857 = vmatpush.msra.mxu0 %v599
        %1858 = vmatpush.msra.mxu0 %v595
        %1859 = vmatpush.msra.mxu0 %v591
        %1860 = vmatpush.msra.mxu0 %v587
        %1861 = vmatpush.msra.mxu0 %v583
        %1862 = vmatpush.msra.mxu0 %v579
        %1863 = vmatpush.msra.mxu0 %v575
        %1864 = vmatpush.msra.mxu0 %v571
        %1865 = vmatmul.f32.gmra.mxu0 %v349
        %v1866 = vpop.f32.mrf.mxu0
        %v1867 = vadd.f32 %v1844, %v1866
        %1868 = vmatmul.f32.gmra.mxu0 %v365
        %v1869 = vpop.f32.mrf.mxu0
        %v1870 = vadd.f32 %v1847, %v1869
        %1871 = vdwg.mxu0
        %1872 = vmatpush.msra.mxu0 %v695
        %1873 = vmatpush.msra.mxu0 %v691
        %1874 = vmatpush.msra.mxu0 %v687
        %1875 = vmatpush.msra.mxu0 %v683
        %1876 = vmatpush.msra.mxu0 %v679
        %1877 = vmatpush.msra.mxu0 %v675
        %1878 = vmatpush.msra.mxu0 %v671
        %1879 = vmatpush.msra.mxu0 %v667
        %1880 = vmatpush.msra.mxu0 %v663
        %1881 = vmatpush.msra.mxu0 %v659
        %1882 = vmatpush.msra.mxu0 %v655
        %1883 = vmatpush.msra.mxu0 %v651
        %1884 = vmatpush.msra.mxu0 %v647
        %1885 = vmatpush.msra.mxu0 %v643
        %1886 = vmatpush.msra.mxu0 %v639
        %1887 = vmatpush.msra.mxu0 %v635
        %1888 = vmatmul.f32.gmra.mxu0 %v350
        %v1889 = vpop.f32.mrf.mxu0
        %v1890 = vadd.f32 %v1867, %v1889
        %1891 = vmatmul.f32.gmra.mxu0 %v366
        %v1892 = vpop.f32.mrf.mxu0
        %v1893 = vadd.f32 %v1870, %v1892
        %1894 = vdwg.mxu0
        %1895 = vmatpush.msra.mxu0 %v759
        %1896 = vmatpush.msra.mxu0 %v755
        %1897 = vmatpush.msra.mxu0 %v751
        %1898 = vmatpush.msra.mxu0 %v747
        %1899 = vmatpush.msra.mxu0 %v743
        %1900 = vmatpush.msra.mxu0 %v739
        %1901 = vmatpush.msra.mxu0 %v735
        %1902 = vmatpush.msra.mxu0 %v731
        %1903 = vmatpush.msra.mxu0 %v727
        %1904 = vmatpush.msra.mxu0 %v723
        %1905 = vmatpush.msra.mxu0 %v719
        %1906 = vmatpush.msra.mxu0 %v715
        %1907 = vmatpush.msra.mxu0 %v711
        %1908 = vmatpush.msra.mxu0 %v707
        %1909 = vmatpush.msra.mxu0 %v703
        %1910 = vmatpush.msra.mxu0 %v699
        %1911 = vmatmul.f32.gmra.mxu0 %v351
        %v1912 = vpop.f32.mrf.mxu0
        %v1913 = vadd.f32 %v1890, %v1912
        %1914 = vmatmul.f32.gmra.mxu0 %v367
        %v1915 = vpop.f32.mrf.mxu0
        %v1916 = vadd.f32 %v1893, %v1915
        %1917 = vdwg.mxu0
        %1918 = vmatpush.msra.mxu0 %v823
        %1919 = vmatpush.msra.mxu0 %v819
        %1920 = vmatpush.msra.mxu0 %v815
        %1921 = vmatpush.msra.mxu0 %v811
        %1922 = vmatpush.msra.mxu0 %v807
        %1923 = vmatpush.msra.mxu0 %v803
        %1924 = vmatpush.msra.mxu0 %v799
        %1925 = vmatpush.msra.mxu0 %v795
        %1926 = vmatpush.msra.mxu0 %v791
        %1927 = vmatpush.msra.mxu0 %v787
        %1928 = vmatpush.msra.mxu0 %v783
        %1929 = vmatpush.msra.mxu0 %v779
        %1930 = vmatpush.msra.mxu0 %v775
        %1931 = vmatpush.msra.mxu0 %v771
        %1932 = vmatpush.msra.mxu0 %v767
        %1933 = vmatpush.msra.mxu0 %v763
        %1934 = vmatmul.f32.gmra.mxu0 %v352
        %v1935 = vpop.f32.mrf.mxu0
        %v1936 = vadd.f32 %v1913, %v1935
        %1937 = vmatmul.f32.gmra.mxu0 %v368
        %v1938 = vpop.f32.mrf.mxu0
        %v1939 = vadd.f32 %v1916, %v1938
        %1940 = vdwg.mxu0
        %1941 = vmatpush.msra.mxu0 %v887
        %1942 = vmatpush.msra.mxu0 %v883
        %1943 = vmatpush.msra.mxu0 %v879
        %1944 = vmatpush.msra.mxu0 %v875
        %1945 = vmatpush.msra.mxu0 %v871
        %1946 = vmatpush.msra.mxu0 %v867
        %1947 = vmatpush.msra.mxu0 %v863
        %1948 = vmatpush.msra.mxu0 %v859
        %1949 = vmatpush.msra.mxu0 %v855
        %1950 = vmatpush.msra.mxu0 %v851
        %1951 = vmatpush.msra.mxu0 %v847
        %1952 = vmatpush.msra.mxu0 %v843
        %1953 = vmatpush.msra.mxu0 %v839
        %1954 = vmatpush.msra.mxu0 %v835
        %1955 = vmatpush.msra.mxu0 %v831
        %1956 = vmatpush.msra.mxu0 %v827
        %1957 = vmatmul.f32.gmra.mxu0 %v353
        %v1958 = vpop.f32.mrf.mxu0
        %v1959 = vadd.f32 %v1936, %v1958
        %1960 = vmatmul.f32.gmra.mxu0 %v369
        %v1961 = vpop.f32.mrf.mxu0
        %v1962 = vadd.f32 %v1939, %v1961
        %1963 = vdwg.mxu0
        %1964 = vmatpush.msra.mxu0 %v951
        %1965 = vmatpush.msra.mxu0 %v947
        %1966 = vmatpush.msra.mxu0 %v943
        %1967 = vmatpush.msra.mxu0 %v939
        %1968 = vmatpush.msra.mxu0 %v935
        %1969 = vmatpush.msra.mxu0 %v931
        %1970 = vmatpush.msra.mxu0 %v927
        %1971 = vmatpush.msra.mxu0 %v923
        %1972 = vmatpush.msra.mxu0 %v919
        %1973 = vmatpush.msra.mxu0 %v915
        %1974 = vmatpush.msra.mxu0 %v911
        %1975 = vmatpush.msra.mxu0 %v907
        %1976 = vmatpush.msra.mxu0 %v903
        %1977 = vmatpush.msra.mxu0 %v899
        %1978 = vmatpush.msra.mxu0 %v895
        %1979 = vmatpush.msra.mxu0 %v891
        %1980 = vmatmul.f32.gmra.mxu0 %v354
        %v1981 = vpop.f32.mrf.mxu0
        %v1982 = vadd.f32 %v1959, %v1981
        %1983 = vmatmul.f32.gmra.mxu0 %v370
        %v1984 = vpop.f32.mrf.mxu0
        %v1985 = vadd.f32 %v1962, %v1984
        %1986 = vdwg.mxu0
        %1987 = vmatpush.msra.mxu0 %v1015
        %1988 = vmatpush.msra.mxu0 %v1011
        %1989 = vmatpush.msra.mxu0 %v1007
        %1990 = vmatpush.msra.mxu0 %v1003
        %1991 = vmatpush.msra.mxu0 %v999
        %1992 = vmatpush.msra.mxu0 %v995
        %1993 = vmatpush.msra.mxu0 %v991
        %1994 = vmatpush.msra.mxu0 %v987
        %1995 = vmatpush.msra.mxu0 %v983
        %1996 = vmatpush.msra.mxu0 %v979
        %1997 = vmatpush.msra.mxu0 %v975
        %1998 = vmatpush.msra.mxu0 %v971
        %1999 = vmatpush.msra.mxu0 %v967
        %2000 = vmatpush.msra.mxu0 %v963
        %2001 = vmatpush.msra.mxu0 %v959
        %2002 = vmatpush.msra.mxu0 %v955
        %2003 = vmatmul.f32.gmra.mxu0 %v355
        %v2004 = vpop.f32.mrf.mxu0
        %v2005 = vadd.f32 %v1982, %v2004
        %2006 = vmatmul.f32.gmra.mxu0 %v371
        %v2007 = vpop.f32.mrf.mxu0
        %v2008 = vadd.f32 %v1985, %v2007
        %2009 = vdwg.mxu0
        %2010 = vmatpush.msra.mxu0 %v1079
        %2011 = vmatpush.msra.mxu0 %v1075
        %2012 = vmatpush.msra.mxu0 %v1071
        %2013 = vmatpush.msra.mxu0 %v1067
        %2014 = vmatpush.msra.mxu0 %v1063
        %2015 = vmatpush.msra.mxu0 %v1059
        %2016 = vmatpush.msra.mxu0 %v1055
        %2017 = vmatpush.msra.mxu0 %v1051
        %2018 = vmatpush.msra.mxu0 %v1047
        %2019 = vmatpush.msra.mxu0 %v1043
        %2020 = vmatpush.msra.mxu0 %v1039
        %2021 = vmatpush.msra.mxu0 %v1035
        %2022 = vmatpush.msra.mxu0 %v1031
        %2023 = vmatpush.msra.mxu0 %v1027
        %2024 = vmatpush.msra.mxu0 %v1023
        %2025 = vmatpush.msra.mxu0 %v1019
        %2026 = vmatmul.f32.gmra.mxu0 %v356
        %v2027 = vpop.f32.mrf.mxu0
        %v2028 = vadd.f32 %v2005, %v2027
        %2029 = vmatmul.f32.gmra.mxu0 %v372
        %v2030 = vpop.f32.mrf.mxu0
        %v2031 = vadd.f32 %v2008, %v2030
        %2032 = vdwg.mxu0
        %2033 = vmatpush.msra.mxu0 %v1143
        %2034 = vmatpush.msra.mxu0 %v1139
        %2035 = vmatpush.msra.mxu0 %v1135
        %2036 = vmatpush.msra.mxu0 %v1131
        %2037 = vmatpush.msra.mxu0 %v1127
        %2038 = vmatpush.msra.mxu0 %v1123
        %2039 = vmatpush.msra.mxu0 %v1119
        %2040 = vmatpush.msra.mxu0 %v1115
        %2041 = vmatpush.msra.mxu0 %v1111
        %2042 = vmatpush.msra.mxu0 %v1107
        %2043 = vmatpush.msra.mxu0 %v1103
        %2044 = vmatpush.msra.mxu0 %v1099
        %2045 = vmatpush.msra.mxu0 %v1095
        %2046 = vmatpush.msra.mxu0 %v1091
        %2047 = vmatpush.msra.mxu0 %v1087
        %2048 = vmatpush.msra.mxu0 %v1083
        %2049 = vmatmul.f32.gmra.mxu0 %v357
        %v2050 = vpop.f32.mrf.mxu0
        %v2051 = vadd.f32 %v2028, %v2050
        %2052 = vmatmul.f32.gmra.mxu0 %v373
        %v2053 = vpop.f32.mrf.mxu0
        %v2054 = vadd.f32 %v2031, %v2053
        %2055 = vdwg.mxu0
        %2056 = vmatpush.msra.mxu0 %v1207
        %2057 = vmatpush.msra.mxu0 %v1203
        %2058 = vmatpush.msra.mxu0 %v1199
        %2059 = vmatpush.msra.mxu0 %v1195
        %2060 = vmatpush.msra.mxu0 %v1191
        %2061 = vmatpush.msra.mxu0 %v1187
        %2062 = vmatpush.msra.mxu0 %v1183
        %2063 = vmatpush.msra.mxu0 %v1179
        %2064 = vmatpush.msra.mxu0 %v1175
        %2065 = vmatpush.msra.mxu0 %v1171
        %2066 = vmatpush.msra.mxu0 %v1167
        %2067 = vmatpush.msra.mxu0 %v1163
        %2068 = vmatpush.msra.mxu0 %v1159
        %2069 = vmatpush.msra.mxu0 %v1155
        %2070 = vmatpush.msra.mxu0 %v1151
        %2071 = vmatpush.msra.mxu0 %v1147
        %2072 = vmatmul.f32.gmra.mxu0 %v358
        %v2073 = vpop.f32.mrf.mxu0
        %v2074 = vadd.f32 %v2051, %v2073
        %2075 = vmatmul.f32.gmra.mxu0 %v374
        %v2076 = vpop.f32.mrf.mxu0
        %v2077 = vadd.f32 %v2054, %v2076
        %2078 = vdwg.mxu0
        %2079 = vmatpush.msra.mxu0 %v1271
        %2080 = vmatpush.msra.mxu0 %v1267
        %2081 = vmatpush.msra.mxu0 %v1263
        %2082 = vmatpush.msra.mxu0 %v1259
        %2083 = vmatpush.msra.mxu0 %v1255
        %2084 = vmatpush.msra.mxu0 %v1251
        %2085 = vmatpush.msra.mxu0 %v1247
        %2086 = vmatpush.msra.mxu0 %v1243
        %2087 = vmatpush.msra.mxu0 %v1239
        %2088 = vmatpush.msra.mxu0 %v1235
        %2089 = vmatpush.msra.mxu0 %v1231
        %2090 = vmatpush.msra.mxu0 %v1227
        %2091 = vmatpush.msra.mxu0 %v1223
        %2092 = vmatpush.msra.mxu0 %v1219
        %2093 = vmatpush.msra.mxu0 %v1215
        %2094 = vmatpush.msra.mxu0 %v1211
        %2095 = vmatmul.f32.gmra.mxu0 %v359
        %v2096 = vpop.f32.mrf.mxu0
        %v2097 = vadd.f32 %v2074, %v2096
        %2098 = vmatmul.f32.gmra.mxu0 %v375
        %v2099 = vpop.f32.mrf.mxu0
        %v2100 = vadd.f32 %v2077, %v2099
        %2101 = vdwg.mxu0
        %2102 = vmatpush.msra.mxu0 %v1335
        %2103 = vmatpush.msra.mxu0 %v1331
        %2104 = vmatpush.msra.mxu0 %v1327
        %2105 = vmatpush.msra.mxu0 %v1323
        %2106 = vmatpush.msra.mxu0 %v1319
        %2107 = vmatpush.msra.mxu0 %v1315
        %2108 = vmatpush.msra.mxu0 %v1311
        %2109 = vmatpush.msra.mxu0 %v1307
        %2110 = vmatpush.msra.mxu0 %v1303
        %2111 = vmatpush.msra.mxu0 %v1299
        %2112 = vmatpush.msra.mxu0 %v1295
        %2113 = vmatpush.msra.mxu0 %v1291
        %2114 = vmatpush.msra.mxu0 %v1287
        %2115 = vmatpush.msra.mxu0 %v1283
        %2116 = vmatpush.msra.mxu0 %v1279
        %2117 = vmatpush.msra.mxu0 %v1275
        %2118 = vmatmul.f32.gmra.mxu0 %v360
        %v2119 = vpop.f32.mrf.mxu0
        %v2120 = vadd.f32 %v2097, %v2119
        %2121 = vmatmul.f32.gmra.mxu0 %v376
        %v2122 = vpop.f32.mrf.mxu0
        %v2123 = vadd.f32 %v2100, %v2122
        %2124 = vdwg.mxu0
        %2125 = vmatpush.msra.mxu0 %v1399
        %2126 = vmatpush.msra.mxu0 %v1395
        %2127 = vmatpush.msra.mxu0 %v1391
        %2128 = vmatpush.msra.mxu0 %v1387
        %2129 = vmatpush.msra.mxu0 %v1383
        %2130 = vmatpush.msra.mxu0 %v1379
        %2131 = vmatpush.msra.mxu0 %v1375
        %2132 = vmatpush.msra.mxu0 %v1371
        %2133 = vmatpush.msra.mxu0 %v1367
        %2134 = vmatpush.msra.mxu0 %v1363
        %2135 = vmatpush.msra.mxu0 %v1359
        %2136 = vmatpush.msra.mxu0 %v1355
        %2137 = vmatpush.msra.mxu0 %v1351
        %2138 = vmatpush.msra.mxu0 %v1347
        %2139 = vmatpush.msra.mxu0 %v1343
        %2140 = vmatpush.msra.mxu0 %v1339
        %2141 = vmatmul.f32.gmra.mxu0 %v361
        %v2142 = vpop.f32.mrf.mxu0
        %v2143 = vadd.f32 %v2120, %v2142
        %2144 = vmatmul.f32.gmra.mxu0 %v377
        %v2145 = vpop.f32.mrf.mxu0
        %v2146 = vadd.f32 %v2123, %v2145
        %2147 = vdwg.mxu0
        %2148 = vmatpush.msra.mxu0 %v440
        %2149 = vmatpush.msra.mxu0 %v436
        %2150 = vmatpush.msra.mxu0 %v432
        %2151 = vmatpush.msra.mxu0 %v428
        %2152 = vmatpush.msra.mxu0 %v424
        %2153 = vmatpush.msra.mxu0 %v420
        %2154 = vmatpush.msra.mxu0 %v416
        %2155 = vmatpush.msra.mxu0 %v412
        %2156 = vmatpush.msra.mxu0 %v408
        %2157 = vmatpush.msra.mxu0 %v404
        %2158 = vmatpush.msra.mxu0 %v400
        %2159 = vmatpush.msra.mxu0 %v396
        %2160 = vmatpush.msra.mxu0 %v392
        %2161 = vmatpush.msra.mxu0 %v388
        %2162 = vmatpush.msra.mxu0 %v384
        %2163 = vmatpush.msra.mxu0 %v380
        %2164 = vmatmul.f32.gmra.mxu0 %v346
        %v2165 = vpop.f32.mrf.mxu0
        %v2166 = vadd.f32 %v1406, %v2165
        %2167 = vmatmul.f32.gmra.mxu0 %v362
        %v2168 = vpop.f32.mrf.mxu0
        %v2169 = vadd.f32 %v1406, %v2168
        %2170 = vdwg.mxu0
        %2171 = vmatpush.msra.mxu0 %v504
        %2172 = vmatpush.msra.mxu0 %v500
        %2173 = vmatpush.msra.mxu0 %v496
        %2174 = vmatpush.msra.mxu0 %v492
        %2175 = vmatpush.msra.mxu0 %v488
        %2176 = vmatpush.msra.mxu0 %v484
        %2177 = vmatpush.msra.mxu0 %v480
        %2178 = vmatpush.msra.mxu0 %v476
        %2179 = vmatpush.msra.mxu0 %v472
        %2180 = vmatpush.msra.mxu0 %v468
        %2181 = vmatpush.msra.mxu0 %v464
        %2182 = vmatpush.msra.mxu0 %v460
        %2183 = vmatpush.msra.mxu0 %v456
        %2184 = vmatpush.msra.mxu0 %v452
        %2185 = vmatpush.msra.mxu0 %v448
        %2186 = vmatpush.msra.mxu0 %v444
        %2187 = vmatmul.f32.gmra.mxu0 %v347
        %v2188 = vpop.f32.mrf.mxu0
        %v2189 = vadd.f32 %v2166, %v2188
        %2190 = vmatmul.f32.gmra.mxu0 %v363
        %v2191 = vpop.f32.mrf.mxu0
        %v2192 = vadd.f32 %v2169, %v2191
        %2193 = vdwg.mxu0
        %2194 = vmatpush.msra.mxu0 %v568
        %2195 = vmatpush.msra.mxu0 %v564
        %2196 = vmatpush.msra.mxu0 %v560
        %2197 = vmatpush.msra.mxu0 %v556
        %2198 = vmatpush.msra.mxu0 %v552
        %2199 = vmatpush.msra.mxu0 %v548
        %2200 = vmatpush.msra.mxu0 %v544
        %2201 = vmatpush.msra.mxu0 %v540
        %2202 = vmatpush.msra.mxu0 %v536
        %2203 = vmatpush.msra.mxu0 %v532
        %2204 = vmatpush.msra.mxu0 %v528
        %2205 = vmatpush.msra.mxu0 %v524
        %2206 = vmatpush.msra.mxu0 %v520
        %2207 = vmatpush.msra.mxu0 %v516
        %2208 = vmatpush.msra.mxu0 %v512
        %2209 = vmatpush.msra.mxu0 %v508
        %2210 = vmatmul.f32.gmra.mxu0 %v348
        %v2211 = vpop.f32.mrf.mxu0
        %v2212 = vadd.f32 %v2189, %v2211
        %2213 = vmatmul.f32.gmra.mxu0 %v364
        %v2214 = vpop.f32.mrf.mxu0
        %v2215 = vadd.f32 %v2192, %v2214
        %2216 = vdwg.mxu0
        %2217 = vmatpush.msra.mxu0 %v632
        %2218 = vmatpush.msra.mxu0 %v628
        %2219 = vmatpush.msra.mxu0 %v624
        %2220 = vmatpush.msra.mxu0 %v620
        %2221 = vmatpush.msra.mxu0 %v616
        %2222 = vmatpush.msra.mxu0 %v612
        %2223 = vmatpush.msra.mxu0 %v608
        %2224 = vmatpush.msra.mxu0 %v604
        %2225 = vmatpush.msra.mxu0 %v600
        %2226 = vmatpush.msra.mxu0 %v596
        %2227 = vmatpush.msra.mxu0 %v592
        %2228 = vmatpush.msra.mxu0 %v588
        %2229 = vmatpush.msra.mxu0 %v584
        %2230 = vmatpush.msra.mxu0 %v580
        %2231 = vmatpush.msra.mxu0 %v576
        %2232 = vmatpush.msra.mxu0 %v572
        %2233 = vmatmul.f32.gmra.mxu0 %v349
        %v2234 = vpop.f32.mrf.mxu0
        %v2235 = vadd.f32 %v2212, %v2234
        %2236 = vmatmul.f32.gmra.mxu0 %v365
        %v2237 = vpop.f32.mrf.mxu0
        %v2238 = vadd.f32 %v2215, %v2237
        %2239 = vdwg.mxu0
        %2240 = vmatpush.msra.mxu0 %v696
        %2241 = vmatpush.msra.mxu0 %v692
        %2242 = vmatpush.msra.mxu0 %v688
        %2243 = vmatpush.msra.mxu0 %v684
        %2244 = vmatpush.msra.mxu0 %v680
        %2245 = vmatpush.msra.mxu0 %v676
        %2246 = vmatpush.msra.mxu0 %v672
        %2247 = vmatpush.msra.mxu0 %v668
        %2248 = vmatpush.msra.mxu0 %v664
        %2249 = vmatpush.msra.mxu0 %v660
        %2250 = vmatpush.msra.mxu0 %v656
        %2251 = vmatpush.msra.mxu0 %v652
        %2252 = vmatpush.msra.mxu0 %v648
        %2253 = vmatpush.msra.mxu0 %v644
        %2254 = vmatpush.msra.mxu0 %v640
        %2255 = vmatpush.msra.mxu0 %v636
        %2256 = vmatmul.f32.gmra.mxu0 %v350
        %v2257 = vpop.f32.mrf.mxu0
        %v2258 = vadd.f32 %v2235, %v2257
        %2259 = vmatmul.f32.gmra.mxu0 %v366
        %v2260 = vpop.f32.mrf.mxu0
        %v2261 = vadd.f32 %v2238, %v2260
        %2262 = vdwg.mxu0
        %2263 = vmatpush.msra.mxu0 %v760
        %2264 = vmatpush.msra.mxu0 %v756
        %2265 = vmatpush.msra.mxu0 %v752
        %2266 = vmatpush.msra.mxu0 %v748
        %2267 = vmatpush.msra.mxu0 %v744
        %2268 = vmatpush.msra.mxu0 %v740
        %2269 = vmatpush.msra.mxu0 %v736
        %2270 = vmatpush.msra.mxu0 %v732
        %2271 = vmatpush.msra.mxu0 %v728
        %2272 = vmatpush.msra.mxu0 %v724
        %2273 = vmatpush.msra.mxu0 %v720
        %2274 = vmatpush.msra.mxu0 %v716
        %2275 = vmatpush.msra.mxu0 %v712
        %2276 = vmatpush.msra.mxu0 %v708
        %2277 = vmatpush.msra.mxu0 %v704
        %2278 = vmatpush.msra.mxu0 %v700
        %2279 = vmatmul.f32.gmra.mxu0 %v351
        %v2280 = vpop.f32.mrf.mxu0
        %v2281 = vadd.f32 %v2258, %v2280
        %2282 = vmatmul.f32.gmra.mxu0 %v367
        %v2283 = vpop.f32.mrf.mxu0
        %v2284 = vadd.f32 %v2261, %v2283
        %2285 = vdwg.mxu0
        %2286 = vmatpush.msra.mxu0 %v824
        %2287 = vmatpush.msra.mxu0 %v820
        %2288 = vmatpush.msra.mxu0 %v816
        %2289 = vmatpush.msra.mxu0 %v812
        %2290 = vmatpush.msra.mxu0 %v808
        %2291 = vmatpush.msra.mxu0 %v804
        %2292 = vmatpush.msra.mxu0 %v800
        %2293 = vmatpush.msra.mxu0 %v796
        %2294 = vmatpush.msra.mxu0 %v792
        %2295 = vmatpush.msra.mxu0 %v788
        %2296 = vmatpush.msra.mxu0 %v784
        %2297 = vmatpush.msra.mxu0 %v780
        %2298 = vmatpush.msra.mxu0 %v776
        %2299 = vmatpush.msra.mxu0 %v772
        %2300 = vmatpush.msra.mxu0 %v768
        %2301 = vmatpush.msra.mxu0 %v764
        %2302 = vmatmul.f32.gmra.mxu0 %v352
        %v2303 = vpop.f32.mrf.mxu0
        %v2304 = vadd.f32 %v2281, %v2303
        %2305 = vmatmul.f32.gmra.mxu0 %v368
        %v2306 = vpop.f32.mrf.mxu0
        %v2307 = vadd.f32 %v2284, %v2306
        %2308 = vdwg.mxu0
        %2309 = vmatpush.msra.mxu0 %v888
        %2310 = vmatpush.msra.mxu0 %v884
        %2311 = vmatpush.msra.mxu0 %v880
        %2312 = vmatpush.msra.mxu0 %v876
        %2313 = vmatpush.msra.mxu0 %v872
        %2314 = vmatpush.msra.mxu0 %v868
        %2315 = vmatpush.msra.mxu0 %v864
        %2316 = vmatpush.msra.mxu0 %v860
        %2317 = vmatpush.msra.mxu0 %v856
        %2318 = vmatpush.msra.mxu0 %v852
        %2319 = vmatpush.msra.mxu0 %v848
        %2320 = vmatpush.msra.mxu0 %v844
        %2321 = vmatpush.msra.mxu0 %v840
        %2322 = vmatpush.msra.mxu0 %v836
        %2323 = vmatpush.msra.mxu0 %v832
        %2324 = vmatpush.msra.mxu0 %v828
        %2325 = vmatmul.f32.gmra.mxu0 %v353
        %v2326 = vpop.f32.mrf.mxu0
        %v2327 = vadd.f32 %v2304, %v2326
        %2328 = vmatmul.f32.gmra.mxu0 %v369
        %v2329 = vpop.f32.mrf.mxu0
        %v2330 = vadd.f32 %v2307, %v2329
        %2331 = vdwg.mxu0
        %2332 = vmatpush.msra.mxu0 %v952
        %2333 = vmatpush.msra.mxu0 %v948
        %2334 = vmatpush.msra.mxu0 %v944
        %2335 = vmatpush.msra.mxu0 %v940
        %2336 = vmatpush.msra.mxu0 %v936
        %2337 = vmatpush.msra.mxu0 %v932
        %2338 = vmatpush.msra.mxu0 %v928
        %2339 = vmatpush.msra.mxu0 %v924
        %2340 = vmatpush.msra.mxu0 %v920
        %2341 = vmatpush.msra.mxu0 %v916
        %2342 = vmatpush.msra.mxu0 %v912
        %2343 = vmatpush.msra.mxu0 %v908
        %2344 = vmatpush.msra.mxu0 %v904
        %2345 = vmatpush.msra.mxu0 %v900
        %2346 = vmatpush.msra.mxu0 %v896
        %2347 = vmatpush.msra.mxu0 %v892
        %2348 = vmatmul.f32.gmra.mxu0 %v354
        %v2349 = vpop.f32.mrf.mxu0
        %v2350 = vadd.f32 %v2327, %v2349
        %2351 = vmatmul.f32.gmra.mxu0 %v370
        %v2352 = vpop.f32.mrf.mxu0
        %v2353 = vadd.f32 %v2330, %v2352
        %2354 = vdwg.mxu0
        %2355 = vmatpush.msra.mxu0 %v1016
        %2356 = vmatpush.msra.mxu0 %v1012
        %2357 = vmatpush.msra.mxu0 %v1008
        %2358 = vmatpush.msra.mxu0 %v1004
        %2359 = vmatpush.msra.mxu0 %v1000
        %2360 = vmatpush.msra.mxu0 %v996
        %2361 = vmatpush.msra.mxu0 %v992
        %2362 = vmatpush.msra.mxu0 %v988
        %2363 = vmatpush.msra.mxu0 %v984
        %2364 = vmatpush.msra.mxu0 %v980
        %2365 = vmatpush.msra.mxu0 %v976
        %2366 = vmatpush.msra.mxu0 %v972
        %2367 = vmatpush.msra.mxu0 %v968
        %2368 = vmatpush.msra.mxu0 %v964
        %2369 = vmatpush.msra.mxu0 %v960
        %2370 = vmatpush.msra.mxu0 %v956
        %2371 = vmatmul.f32.gmra.mxu0 %v355
        %v2372 = vpop.f32.mrf.mxu0
        %v2373 = vadd.f32 %v2350, %v2372
        %2374 = vmatmul.f32.gmra.mxu0 %v371
        %v2375 = vpop.f32.mrf.mxu0
        %v2376 = vadd.f32 %v2353, %v2375
        %2377 = vdwg.mxu0
        %2378 = vmatpush.msra.mxu0 %v1080
        %2379 = vmatpush.msra.mxu0 %v1076
        %2380 = vmatpush.msra.mxu0 %v1072
        %2381 = vmatpush.msra.mxu0 %v1068
        %2382 = vmatpush.msra.mxu0 %v1064
        %2383 = vmatpush.msra.mxu0 %v1060
        %2384 = vmatpush.msra.mxu0 %v1056
        %2385 = vmatpush.msra.mxu0 %v1052
        %2386 = vmatpush.msra.mxu0 %v1048
        %2387 = vmatpush.msra.mxu0 %v1044
        %2388 = vmatpush.msra.mxu0 %v1040
        %2389 = vmatpush.msra.mxu0 %v1036
        %2390 = vmatpush.msra.mxu0 %v1032
        %2391 = vmatpush.msra.mxu0 %v1028
        %2392 = vmatpush.msra.mxu0 %v1024
        %2393 = vmatpush.msra.mxu0 %v1020
        %2394 = vmatmul.f32.gmra.mxu0 %v356
        %v2395 = vpop.f32.mrf.mxu0
        %v2396 = vadd.f32 %v2373, %v2395
        %2397 = vmatmul.f32.gmra.mxu0 %v372
        %v2398 = vpop.f32.mrf.mxu0
        %v2399 = vadd.f32 %v2376, %v2398
        %2400 = vdwg.mxu0
        %2401 = vmatpush.msra.mxu0 %v1144
        %2402 = vmatpush.msra.mxu0 %v1140
        %2403 = vmatpush.msra.mxu0 %v1136
        %2404 = vmatpush.msra.mxu0 %v1132
        %2405 = vmatpush.msra.mxu0 %v1128
        %2406 = vmatpush.msra.mxu0 %v1124
        %2407 = vmatpush.msra.mxu0 %v1120
        %2408 = vmatpush.msra.mxu0 %v1116
        %2409 = vmatpush.msra.mxu0 %v1112
        %2410 = vmatpush.msra.mxu0 %v1108
        %2411 = vmatpush.msra.mxu0 %v1104
        %2412 = vmatpush.msra.mxu0 %v1100
        %2413 = vmatpush.msra.mxu0 %v1096
        %2414 = vmatpush.msra.mxu0 %v1092
        %2415 = vmatpush.msra.mxu0 %v1088
        %2416 = vmatpush.msra.mxu0 %v1084
        %2417 = vmatmul.f32.gmra.mxu0 %v357
        %v2418 = vpop.f32.mrf.mxu0
        %v2419 = vadd.f32 %v2396, %v2418
        %2420 = vmatmul.f32.gmra.mxu0 %v373
        %v2421 = vpop.f32.mrf.mxu0
        %v2422 = vadd.f32 %v2399, %v2421
        %2423 = vdwg.mxu0
        %2424 = vmatpush.msra.mxu0 %v1208
        %2425 = vmatpush.msra.mxu0 %v1204
        %2426 = vmatpush.msra.mxu0 %v1200
        %2427 = vmatpush.msra.mxu0 %v1196
        %2428 = vmatpush.msra.mxu0 %v1192
        %2429 = vmatpush.msra.mxu0 %v1188
        %2430 = vmatpush.msra.mxu0 %v1184
        %2431 = vmatpush.msra.mxu0 %v1180
        %2432 = vmatpush.msra.mxu0 %v1176
        %2433 = vmatpush.msra.mxu0 %v1172
        %2434 = vmatpush.msra.mxu0 %v1168
        %2435 = vmatpush.msra.mxu0 %v1164
        %2436 = vmatpush.msra.mxu0 %v1160
        %2437 = vmatpush.msra.mxu0 %v1156
        %2438 = vmatpush.msra.mxu0 %v1152
        %2439 = vmatpush.msra.mxu0 %v1148
        %2440 = vmatmul.f32.gmra.mxu0 %v358
        %v2441 = vpop.f32.mrf.mxu0
        %v2442 = vadd.f32 %v2419, %v2441
        %2443 = vmatmul.f32.gmra.mxu0 %v374
        %v2444 = vpop.f32.mrf.mxu0
        %v2445 = vadd.f32 %v2422, %v2444
        %2446 = vdwg.mxu0
        %2447 = vmatpush.msra.mxu0 %v1272
        %2448 = vmatpush.msra.mxu0 %v1268
        %2449 = vmatpush.msra.mxu0 %v1264
        %2450 = vmatpush.msra.mxu0 %v1260
        %2451 = vmatpush.msra.mxu0 %v1256
        %2452 = vmatpush.msra.mxu0 %v1252
        %2453 = vmatpush.msra.mxu0 %v1248
        %2454 = vmatpush.msra.mxu0 %v1244
        %2455 = vmatpush.msra.mxu0 %v1240
        %2456 = vmatpush.msra.mxu0 %v1236
        %2457 = vmatpush.msra.mxu0 %v1232
        %2458 = vmatpush.msra.mxu0 %v1228
        %2459 = vmatpush.msra.mxu0 %v1224
        %2460 = vmatpush.msra.mxu0 %v1220
        %2461 = vmatpush.msra.mxu0 %v1216
        %2462 = vmatpush.msra.mxu0 %v1212
        %2463 = vmatmul.f32.gmra.mxu0 %v359
        %v2464 = vpop.f32.mrf.mxu0
        %v2465 = vadd.f32 %v2442, %v2464
        %2466 = vmatmul.f32.gmra.mxu0 %v375
        %v2467 = vpop.f32.mrf.mxu0
        %v2468 = vadd.f32 %v2445, %v2467
        %2469 = vdwg.mxu0
        %2470 = vmatpush.msra.mxu0 %v1336
        %2471 = vmatpush.msra.mxu0 %v1332
        %2472 = vmatpush.msra.mxu0 %v1328
        %2473 = vmatpush.msra.mxu0 %v1324
        %2474 = vmatpush.msra.mxu0 %v1320
        %2475 = vmatpush.msra.mxu0 %v1316
        %2476 = vmatpush.msra.mxu0 %v1312
        %2477 = vmatpush.msra.mxu0 %v1308
        %2478 = vmatpush.msra.mxu0 %v1304
        %2479 = vmatpush.msra.mxu0 %v1300
        %2480 = vmatpush.msra.mxu0 %v1296
        %2481 = vmatpush.msra.mxu0 %v1292
        %2482 = vmatpush.msra.mxu0 %v1288
        %2483 = vmatpush.msra.mxu0 %v1284
        %2484 = vmatpush.msra.mxu0 %v1280
        %2485 = vmatpush.msra.mxu0 %v1276
        %2486 = vmatmul.f32.gmra.mxu0 %v360
        %v2487 = vpop.f32.mrf.mxu0
        %v2488 = vadd.f32 %v2465, %v2487
        %2489 = vmatmul.f32.gmra.mxu0 %v376
        %v2490 = vpop.f32.mrf.mxu0
        %v2491 = vadd.f32 %v2468, %v2490
        %2492 = vdwg.mxu0
        %2493 = vmatpush.msra.mxu0 %v1400
        %2494 = vmatpush.msra.mxu0 %v1396
        %2495 = vmatpush.msra.mxu0 %v1392
        %2496 = vmatpush.msra.mxu0 %v1388
        %2497 = vmatpush.msra.mxu0 %v1384
        %2498 = vmatpush.msra.mxu0 %v1380
        %2499 = vmatpush.msra.mxu0 %v1376
        %2500 = vmatpush.msra.mxu0 %v1372
        %2501 = vmatpush.msra.mxu0 %v1368
        %2502 = vmatpush.msra.mxu0 %v1364
        %2503 = vmatpush.msra.mxu0 %v1360
        %2504 = vmatpush.msra.mxu0 %v1356
        %2505 = vmatpush.msra.mxu0 %v1352
        %2506 = vmatpush.msra.mxu0 %v1348
        %2507 = vmatpush.msra.mxu0 %v1344
        %2508 = vmatpush.msra.mxu0 %v1340
        %2509 = vmatmul.f32.gmra.mxu0 %v361
        %v2510 = vpop.f32.mrf.mxu0
        %v2511 = vadd.f32 %v2488, %v2510
        %2512 = vmatmul.f32.gmra.mxu0 %v377
        %v2513 = vpop.f32.mrf.mxu0
        %v2514 = vadd.f32 %v2491, %v2513
        %2515 = vdwg.mxu0
        %2516 = vmatpush.msra.mxu0 %v441
        %2517 = vmatpush.msra.mxu0 %v437
        %2518 = vmatpush.msra.mxu0 %v433
        %2519 = vmatpush.msra.mxu0 %v429
        %2520 = vmatpush.msra.mxu0 %v425
        %2521 = vmatpush.msra.mxu0 %v421
        %2522 = vmatpush.msra.mxu0 %v417
        %2523 = vmatpush.msra.mxu0 %v413
        %2524 = vmatpush.msra.mxu0 %v409
        %2525 = vmatpush.msra.mxu0 %v405
        %2526 = vmatpush.msra.mxu0 %v401
        %2527 = vmatpush.msra.mxu0 %v397
        %2528 = vmatpush.msra.mxu0 %v393
        %2529 = vmatpush.msra.mxu0 %v389
        %2530 = vmatpush.msra.mxu0 %v385
        %2531 = vmatpush.msra.mxu0 %v381
        %2532 = vmatmul.f32.gmra.mxu0 %v346
        %v2533 = vpop.f32.mrf.mxu0
        %v2534 = vadd.f32 %v1407, %v2533
        %2535 = vmatmul.f32.gmra.mxu0 %v362
        %v2536 = vpop.f32.mrf.mxu0
        %v2537 = vadd.f32 %v1407, %v2536
        %2538 = vdwg.mxu0
        %2539 = vmatpush.msra.mxu0 %v505
        %2540 = vmatpush.msra.mxu0 %v501
        %2541 = vmatpush.msra.mxu0 %v497
        %2542 = vmatpush.msra.mxu0 %v493
        %2543 = vmatpush.msra.mxu0 %v489
        %2544 = vmatpush.msra.mxu0 %v485
        %2545 = vmatpush.msra.mxu0 %v481
        %2546 = vmatpush.msra.mxu0 %v477
        %2547 = vmatpush.msra.mxu0 %v473
        %2548 = vmatpush.msra.mxu0 %v469
        %2549 = vmatpush.msra.mxu0 %v465
        %2550 = vmatpush.msra.mxu0 %v461
        %2551 = vmatpush.msra.mxu0 %v457
        %2552 = vmatpush.msra.mxu0 %v453
        %2553 = vmatpush.msra.mxu0 %v449
        %2554 = vmatpush.msra.mxu0 %v445
        %2555 = vmatmul.f32.gmra.mxu0 %v347
        %v2556 = vpop.f32.mrf.mxu0
        %v2557 = vadd.f32 %v2534, %v2556
        %2558 = vmatmul.f32.gmra.mxu0 %v363
        %v2559 = vpop.f32.mrf.mxu0
        %v2560 = vadd.f32 %v2537, %v2559
        %2561 = vdwg.mxu0
        %2562 = vmatpush.msra.mxu0 %v569
        %2563 = vmatpush.msra.mxu0 %v565
        %2564 = vmatpush.msra.mxu0 %v561
        %2565 = vmatpush.msra.mxu0 %v557
        %2566 = vmatpush.msra.mxu0 %v553
        %2567 = vmatpush.msra.mxu0 %v549
        %2568 = vmatpush.msra.mxu0 %v545
        %2569 = vmatpush.msra.mxu0 %v541
        %2570 = vmatpush.msra.mxu0 %v537
        %2571 = vmatpush.msra.mxu0 %v533
        %2572 = vmatpush.msra.mxu0 %v529
        %2573 = vmatpush.msra.mxu0 %v525
        %2574 = vmatpush.msra.mxu0 %v521
        %2575 = vmatpush.msra.mxu0 %v517
        %2576 = vmatpush.msra.mxu0 %v513
        %2577 = vmatpush.msra.mxu0 %v509
        %2578 = vmatmul.f32.gmra.mxu0 %v348
        %v2579 = vpop.f32.mrf.mxu0
        %v2580 = vadd.f32 %v2557, %v2579
        %2581 = vmatmul.f32.gmra.mxu0 %v364
        %v2582 = vpop.f32.mrf.mxu0
        %v2583 = vadd.f32 %v2560, %v2582
        %2584 = vdwg.mxu0
        %2585 = vmatpush.msra.mxu0 %v633
        %2586 = vmatpush.msra.mxu0 %v629
        %2587 = vmatpush.msra.mxu0 %v625
        %2588 = vmatpush.msra.mxu0 %v621
        %2589 = vmatpush.msra.mxu0 %v617
        %2590 = vmatpush.msra.mxu0 %v613
        %2591 = vmatpush.msra.mxu0 %v609
        %2592 = vmatpush.msra.mxu0 %v605
        %2593 = vmatpush.msra.mxu0 %v601
        %2594 = vmatpush.msra.mxu0 %v597
        %2595 = vmatpush.msra.mxu0 %v593
        %2596 = vmatpush.msra.mxu0 %v589
        %2597 = vmatpush.msra.mxu0 %v585
        %2598 = vmatpush.msra.mxu0 %v581
        %2599 = vmatpush.msra.mxu0 %v577
        %2600 = vmatpush.msra.mxu0 %v573
        %2601 = vmatmul.f32.gmra.mxu0 %v349
        %v2602 = vpop.f32.mrf.mxu0
        %v2603 = vadd.f32 %v2580, %v2602
        %2604 = vmatmul.f32.gmra.mxu0 %v365
        %v2605 = vpop.f32.mrf.mxu0
        %v2606 = vadd.f32 %v2583, %v2605
        %2607 = vdwg.mxu0
        %2608 = vmatpush.msra.mxu0 %v697
        %2609 = vmatpush.msra.mxu0 %v693
        %2610 = vmatpush.msra.mxu0 %v689
        %2611 = vmatpush.msra.mxu0 %v685
        %2612 = vmatpush.msra.mxu0 %v681
        %2613 = vmatpush.msra.mxu0 %v677
        %2614 = vmatpush.msra.mxu0 %v673
        %2615 = vmatpush.msra.mxu0 %v669
        %2616 = vmatpush.msra.mxu0 %v665
        %2617 = vmatpush.msra.mxu0 %v661
        %2618 = vmatpush.msra.mxu0 %v657
        %2619 = vmatpush.msra.mxu0 %v653
        %2620 = vmatpush.msra.mxu0 %v649
        %2621 = vmatpush.msra.mxu0 %v645
        %2622 = vmatpush.msra.mxu0 %v641
        %2623 = vmatpush.msra.mxu0 %v637
        %2624 = vmatmul.f32.gmra.mxu0 %v350
        %v2625 = vpop.f32.mrf.mxu0
        %v2626 = vadd.f32 %v2603, %v2625
        %2627 = vmatmul.f32.gmra.mxu0 %v366
        %v2628 = vpop.f32.mrf.mxu0
        %v2629 = vadd.f32 %v2606, %v2628
        %2630 = vdwg.mxu0
        %2631 = vmatpush.msra.mxu0 %v761
        %2632 = vmatpush.msra.mxu0 %v757
        %2633 = vmatpush.msra.mxu0 %v753
        %2634 = vmatpush.msra.mxu0 %v749
        %2635 = vmatpush.msra.mxu0 %v745
        %2636 = vmatpush.msra.mxu0 %v741
        %2637 = vmatpush.msra.mxu0 %v737
        %2638 = vmatpush.msra.mxu0 %v733
        %2639 = vmatpush.msra.mxu0 %v729
        %2640 = vmatpush.msra.mxu0 %v725
        %2641 = vmatpush.msra.mxu0 %v721
        %2642 = vmatpush.msra.mxu0 %v717
        %2643 = vmatpush.msra.mxu0 %v713
        %2644 = vmatpush.msra.mxu0 %v709
        %2645 = vmatpush.msra.mxu0 %v705
        %2646 = vmatpush.msra.mxu0 %v701
        %2647 = vmatmul.f32.gmra.mxu0 %v351
        %v2648 = vpop.f32.mrf.mxu0
        %v2649 = vadd.f32 %v2626, %v2648
        %2650 = vmatmul.f32.gmra.mxu0 %v367
        %v2651 = vpop.f32.mrf.mxu0
        %v2652 = vadd.f32 %v2629, %v2651
        %2653 = vdwg.mxu0
        %2654 = vmatpush.msra.mxu0 %v825
        %2655 = vmatpush.msra.mxu0 %v821
        %2656 = vmatpush.msra.mxu0 %v817
        %2657 = vmatpush.msra.mxu0 %v813
        %2658 = vmatpush.msra.mxu0 %v809
        %2659 = vmatpush.msra.mxu0 %v805
        %2660 = vmatpush.msra.mxu0 %v801
        %2661 = vmatpush.msra.mxu0 %v797
        %2662 = vmatpush.msra.mxu0 %v793
        %2663 = vmatpush.msra.mxu0 %v789
        %2664 = vmatpush.msra.mxu0 %v785
        %2665 = vmatpush.msra.mxu0 %v781
        %2666 = vmatpush.msra.mxu0 %v777
        %2667 = vmatpush.msra.mxu0 %v773
        %2668 = vmatpush.msra.mxu0 %v769
        %2669 = vmatpush.msra.mxu0 %v765
        %2670 = vmatmul.f32.gmra.mxu0 %v352
        %v2671 = vpop.f32.mrf.mxu0
        %v2672 = vadd.f32 %v2649, %v2671
        %2673 = vmatmul.f32.gmra.mxu0 %v368
        %v2674 = vpop.f32.mrf.mxu0
        %v2675 = vadd.f32 %v2652, %v2674
        %2676 = vdwg.mxu0
        %2677 = vmatpush.msra.mxu0 %v889
        %2678 = vmatpush.msra.mxu0 %v885
        %2679 = vmatpush.msra.mxu0 %v881
        %2680 = vmatpush.msra.mxu0 %v877
        %2681 = vmatpush.msra.mxu0 %v873
        %2682 = vmatpush.msra.mxu0 %v869
        %2683 = vmatpush.msra.mxu0 %v865
        %2684 = vmatpush.msra.mxu0 %v861
        %2685 = vmatpush.msra.mxu0 %v857
        %2686 = vmatpush.msra.mxu0 %v853
        %2687 = vmatpush.msra.mxu0 %v849
        %2688 = vmatpush.msra.mxu0 %v845
        %2689 = vmatpush.msra.mxu0 %v841
        %2690 = vmatpush.msra.mxu0 %v837
        %2691 = vmatpush.msra.mxu0 %v833
        %2692 = vmatpush.msra.mxu0 %v829
        %2693 = vmatmul.f32.gmra.mxu0 %v353
        %v2694 = vpop.f32.mrf.mxu0
        %v2695 = vadd.f32 %v2672, %v2694
        %2696 = vmatmul.f32.gmra.mxu0 %v369
        %v2697 = vpop.f32.mrf.mxu0
        %v2698 = vadd.f32 %v2675, %v2697
        %2699 = vdwg.mxu0
        %2700 = vmatpush.msra.mxu0 %v953
        %2701 = vmatpush.msra.mxu0 %v949
        %2702 = vmatpush.msra.mxu0 %v945
        %2703 = vmatpush.msra.mxu0 %v941
        %2704 = vmatpush.msra.mxu0 %v937
        %2705 = vmatpush.msra.mxu0 %v933
        %2706 = vmatpush.msra.mxu0 %v929
        %2707 = vmatpush.msra.mxu0 %v925
        %2708 = vmatpush.msra.mxu0 %v921
        %2709 = vmatpush.msra.mxu0 %v917
        %2710 = vmatpush.msra.mxu0 %v913
        %2711 = vmatpush.msra.mxu0 %v909
        %2712 = vmatpush.msra.mxu0 %v905
        %2713 = vmatpush.msra.mxu0 %v901
        %2714 = vmatpush.msra.mxu0 %v897
        %2715 = vmatpush.msra.mxu0 %v893
        %2716 = vmatmul.f32.gmra.mxu0 %v354
        %v2717 = vpop.f32.mrf.mxu0
        %v2718 = vadd.f32 %v2695, %v2717
        %2719 = vmatmul.f32.gmra.mxu0 %v370
        %v2720 = vpop.f32.mrf.mxu0
        %v2721 = vadd.f32 %v2698, %v2720
        %2722 = vdwg.mxu0
        %2723 = vmatpush.msra.mxu0 %v1017
        %2724 = vmatpush.msra.mxu0 %v1013
        %2725 = vmatpush.msra.mxu0 %v1009
        %2726 = vmatpush.msra.mxu0 %v1005
        %2727 = vmatpush.msra.mxu0 %v1001
        %2728 = vmatpush.msra.mxu0 %v997
        %2729 = vmatpush.msra.mxu0 %v993
        %2730 = vmatpush.msra.mxu0 %v989
        %2731 = vmatpush.msra.mxu0 %v985
        %2732 = vmatpush.msra.mxu0 %v981
        %2733 = vmatpush.msra.mxu0 %v977
        %2734 = vmatpush.msra.mxu0 %v973
        %2735 = vmatpush.msra.mxu0 %v969
        %2736 = vmatpush.msra.mxu0 %v965
        %2737 = vmatpush.msra.mxu0 %v961
        %2738 = vmatpush.msra.mxu0 %v957
        %2739 = vmatmul.f32.gmra.mxu0 %v355
        %v2740 = vpop.f32.mrf.mxu0
        %v2741 = vadd.f32 %v2718, %v2740
        %2742 = vmatmul.f32.gmra.mxu0 %v371
        %v2743 = vpop.f32.mrf.mxu0
        %v2744 = vadd.f32 %v2721, %v2743
        %2745 = vdwg.mxu0
        %2746 = vmatpush.msra.mxu0 %v1081
        %2747 = vmatpush.msra.mxu0 %v1077
        %2748 = vmatpush.msra.mxu0 %v1073
        %2749 = vmatpush.msra.mxu0 %v1069
        %2750 = vmatpush.msra.mxu0 %v1065
        %2751 = vmatpush.msra.mxu0 %v1061
        %2752 = vmatpush.msra.mxu0 %v1057
        %2753 = vmatpush.msra.mxu0 %v1053
        %2754 = vmatpush.msra.mxu0 %v1049
        %2755 = vmatpush.msra.mxu0 %v1045
        %2756 = vmatpush.msra.mxu0 %v1041
        %2757 = vmatpush.msra.mxu0 %v1037
        %2758 = vmatpush.msra.mxu0 %v1033
        %2759 = vmatpush.msra.mxu0 %v1029
        %2760 = vmatpush.msra.mxu0 %v1025
        %2761 = vmatpush.msra.mxu0 %v1021
        %2762 = vmatmul.f32.gmra.mxu0 %v356
        %v2763 = vpop.f32.mrf.mxu0
        %v2764 = vadd.f32 %v2741, %v2763
        %2765 = vmatmul.f32.gmra.mxu0 %v372
        %v2766 = vpop.f32.mrf.mxu0
        %v2767 = vadd.f32 %v2744, %v2766
        %2768 = vdwg.mxu0
        %2769 = vmatpush.msra.mxu0 %v1145
        %2770 = vmatpush.msra.mxu0 %v1141
        %2771 = vmatpush.msra.mxu0 %v1137
        %2772 = vmatpush.msra.mxu0 %v1133
        %2773 = vmatpush.msra.mxu0 %v1129
        %2774 = vmatpush.msra.mxu0 %v1125
        %2775 = vmatpush.msra.mxu0 %v1121
        %2776 = vmatpush.msra.mxu0 %v1117
        %2777 = vmatpush.msra.mxu0 %v1113
        %2778 = vmatpush.msra.mxu0 %v1109
        %2779 = vmatpush.msra.mxu0 %v1105
        %2780 = vmatpush.msra.mxu0 %v1101
        %2781 = vmatpush.msra.mxu0 %v1097
        %2782 = vmatpush.msra.mxu0 %v1093
        %2783 = vmatpush.msra.mxu0 %v1089
        %2784 = vmatpush.msra.mxu0 %v1085
        %2785 = vmatmul.f32.gmra.mxu0 %v357
        %v2786 = vpop.f32.mrf.mxu0
        %v2787 = vadd.f32 %v2764, %v2786
        %2788 = vmatmul.f32.gmra.mxu0 %v373
        %v2789 = vpop.f32.mrf.mxu0
        %v2790 = vadd.f32 %v2767, %v2789
        %2791 = vdwg.mxu0
        %2792 = vmatpush.msra.mxu0 %v1209
        %2793 = vmatpush.msra.mxu0 %v1205
        %2794 = vmatpush.msra.mxu0 %v1201
        %2795 = vmatpush.msra.mxu0 %v1197
        %2796 = vmatpush.msra.mxu0 %v1193
        %2797 = vmatpush.msra.mxu0 %v1189
        %2798 = vmatpush.msra.mxu0 %v1185
        %2799 = vmatpush.msra.mxu0 %v1181
        %2800 = vmatpush.msra.mxu0 %v1177
        %2801 = vmatpush.msra.mxu0 %v1173
        %2802 = vmatpush.msra.mxu0 %v1169
        %2803 = vmatpush.msra.mxu0 %v1165
        %2804 = vmatpush.msra.mxu0 %v1161
        %2805 = vmatpush.msra.mxu0 %v1157
        %2806 = vmatpush.msra.mxu0 %v1153
        %2807 = vmatpush.msra.mxu0 %v1149
        %2808 = vmatmul.f32.gmra.mxu0 %v358
        %v2809 = vpop.f32.mrf.mxu0
        %v2810 = vadd.f32 %v2787, %v2809
        %2811 = vmatmul.f32.gmra.mxu0 %v374
        %v2812 = vpop.f32.mrf.mxu0
        %v2813 = vadd.f32 %v2790, %v2812
        %2814 = vdwg.mxu0
        %2815 = vmatpush.msra.mxu0 %v1273
        %2816 = vmatpush.msra.mxu0 %v1269
        %2817 = vmatpush.msra.mxu0 %v1265
        %2818 = vmatpush.msra.mxu0 %v1261
        %2819 = vmatpush.msra.mxu0 %v1257
        %2820 = vmatpush.msra.mxu0 %v1253
        %2821 = vmatpush.msra.mxu0 %v1249
        %2822 = vmatpush.msra.mxu0 %v1245
        %2823 = vmatpush.msra.mxu0 %v1241
        %2824 = vmatpush.msra.mxu0 %v1237
        %2825 = vmatpush.msra.mxu0 %v1233
        %2826 = vmatpush.msra.mxu0 %v1229
        %2827 = vmatpush.msra.mxu0 %v1225
        %2828 = vmatpush.msra.mxu0 %v1221
        %2829 = vmatpush.msra.mxu0 %v1217
        %2830 = vmatpush.msra.mxu0 %v1213
        %2831 = vmatmul.f32.gmra.mxu0 %v359
        %v2832 = vpop.f32.mrf.mxu0
        %v2833 = vadd.f32 %v2810, %v2832
        %2834 = vmatmul.f32.gmra.mxu0 %v375
        %v2835 = vpop.f32.mrf.mxu0
        %v2836 = vadd.f32 %v2813, %v2835
        %2837 = vdwg.mxu0
        %2838 = vmatpush.msra.mxu0 %v1337
        %2839 = vmatpush.msra.mxu0 %v1333
        %2840 = vmatpush.msra.mxu0 %v1329
        %2841 = vmatpush.msra.mxu0 %v1325
        %2842 = vmatpush.msra.mxu0 %v1321
        %2843 = vmatpush.msra.mxu0 %v1317
        %2844 = vmatpush.msra.mxu0 %v1313
        %2845 = vmatpush.msra.mxu0 %v1309
        %2846 = vmatpush.msra.mxu0 %v1305
        %2847 = vmatpush.msra.mxu0 %v1301
        %2848 = vmatpush.msra.mxu0 %v1297
        %2849 = vmatpush.msra.mxu0 %v1293
        %2850 = vmatpush.msra.mxu0 %v1289
        %2851 = vmatpush.msra.mxu0 %v1285
        %2852 = vmatpush.msra.mxu0 %v1281
        %2853 = vmatpush.msra.mxu0 %v1277
        %2854 = vmatmul.f32.gmra.mxu0 %v360
        %v2855 = vpop.f32.mrf.mxu0
        %v2856 = vadd.f32 %v2833, %v2855
        %2857 = vmatmul.f32.gmra.mxu0 %v376
        %v2858 = vpop.f32.mrf.mxu0
        %v2859 = vadd.f32 %v2836, %v2858
        %2860 = vdwg.mxu0
        %2861 = vmatpush.msra.mxu0 %v1401
        %2862 = vmatpush.msra.mxu0 %v1397
        %2863 = vmatpush.msra.mxu0 %v1393
        %2864 = vmatpush.msra.mxu0 %v1389
        %2865 = vmatpush.msra.mxu0 %v1385
        %2866 = vmatpush.msra.mxu0 %v1381
        %2867 = vmatpush.msra.mxu0 %v1377
        %2868 = vmatpush.msra.mxu0 %v1373
        %2869 = vmatpush.msra.mxu0 %v1369
        %2870 = vmatpush.msra.mxu0 %v1365
        %2871 = vmatpush.msra.mxu0 %v1361
        %2872 = vmatpush.msra.mxu0 %v1357
        %2873 = vmatpush.msra.mxu0 %v1353
        %2874 = vmatpush.msra.mxu0 %v1349
        %2875 = vmatpush.msra.mxu0 %v1345
        %2876 = vmatpush.msra.mxu0 %v1341
        %2877 = vmatmul.f32.gmra.mxu0 %v361
        %v2878 = vpop.f32.mrf.mxu0
        %v2879 = vadd.f32 %v2856, %v2878
        %2880 = vmatmul.f32.gmra.mxu0 %v377
        %v2881 = vpop.f32.mrf.mxu0
        %v2882 = vadd.f32 %v2859, %v2881
        %2883 = vdwg.mxu0
        %v2884 = vmax.f32 %v1775, 0.0
        %v2885 = vmax.f32 %v2143, 0.0
        %v2886 = vmax.f32 %v2511, 0.0
        %v2887 = vmax.f32 %v2879, 0.0
        %v2888 = vmax.f32 %v1778, 0.0
        %v2889 = vmax.f32 %v2146, 0.0
        %v2890 = vmax.f32 %v2514, 0.0
        %v2891 = vmax.f32 %v2882, 0.0
        %v2892 = vld [vmem:[%s3] sm:$0xff]
        %v2893 = vld [vmem:[%s3 + $0x8] sm:$0xff]
        %v2894 = vld [vmem:[%s3 + $0x10] sm:$0xff]
        %v2895 = vld [vmem:[%s3 + $0x18] sm:$0xff]
        %v2896 = vld [vmem:[%s3 + $0x20] sm:$0xff]
        %v2897 = vld [vmem:[%s3 + $0x28] sm:$0xff]
        %v2898 = vld [vmem:[%s3 + $0x30] sm:$0xff]
        %v2899 = vld [vmem:[%s3 + $0x38] sm:$0xff]
        %v2900 = vld [vmem:[%s3 + $0x40] sm:$0xff]
        %v2901 = vld [vmem:[%s3 + $0x48] sm:$0xff]
        %v2902 = vld [vmem:[%s3 + $0x50] sm:$0xff]
        %v2903 = vld [vmem:[%s3 + $0x58] sm:$0xff]
        %v2904 = vld [vmem:[%s3 + $0x60] sm:$0xff]
        %v2905 = vld [vmem:[%s3 + $0x68] sm:$0xff]
        %v2906 = vld [vmem:[%s3 + $0x70] sm:$0xff]
        %v2907 = vld [vmem:[%s3 + $0x78] sm:$0xff]
        %v2908 = vld [vmem:[%s3 + $0x80] sm:$0xff]
        %v2909 = vld [vmem:[%s3 + $0x88] sm:$0xff]
        %v2910 = vld [vmem:[%s3 + $0x90] sm:$0xff]
        %v2911 = vld [vmem:[%s3 + $0x98] sm:$0xff]
        %v2912 = vld [vmem:[%s3 + $0xa0] sm:$0xff]
        %v2913 = vld [vmem:[%s3 + $0xa8] sm:$0xff]
        %v2914 = vld [vmem:[%s3 + $0xb0] sm:$0xff]
        %v2915 = vld [vmem:[%s3 + $0xb8] sm:$0xff]
        %v2916 = vld [vmem:[%s3 + $0xc0] sm:$0xff]
        %v2917 = vld [vmem:[%s3 + $0xc8] sm:$0xff]
        %v2918 = vld [vmem:[%s3 + $0xd0] sm:$0xff]
        %v2919 = vld [vmem:[%s3 + $0xd8] sm:$0xff]
        %v2920 = vld [vmem:[%s3 + $0xe0] sm:$0xff]
        %v2921 = vld [vmem:[%s3 + $0xe8] sm:$0xff]
        %v2922 = vld [vmem:[%s3 + $0xf0] sm:$0xff]
        %v2923 = vld [vmem:[%s3 + $0xf8] sm:$0xff]
        %v2924 = vld [vmem:[%s3 + $0x100] sm:$0xff]
        %v2925 = vld [vmem:[%s3 + $0x108] sm:$0xff]
        %v2926 = vld [vmem:[%s3 + $0x110] sm:$0xff]
        %v2927 = vld [vmem:[%s3 + $0x118] sm:$0xff]
        %v2928 = vld [vmem:[%s3 + $0x120] sm:$0xff]
        %v2929 = vld [vmem:[%s3 + $0x128] sm:$0xff]
        %v2930 = vld [vmem:[%s3 + $0x130] sm:$0xff]
        %v2931 = vld [vmem:[%s3 + $0x138] sm:$0xff]
        %v2932 = vld [vmem:[%s3 + $0x140] sm:$0xff]
        %v2933 = vld [vmem:[%s3 + $0x148] sm:$0xff]
        %v2934 = vld [vmem:[%s3 + $0x150] sm:$0xff]
        %v2935 = vld [vmem:[%s3 + $0x158] sm:$0xff]
        %v2936 = vld [vmem:[%s3 + $0x160] sm:$0xff]
        %v2937 = vld [vmem:[%s3 + $0x168] sm:$0xff]
        %v2938 = vld [vmem:[%s3 + $0x170] sm:$0xff]
        %v2939 = vld [vmem:[%s3 + $0x178] sm:$0xff]
        %v2940 = vld [vmem:[%s3 + $0x180] sm:$0xff]
        %v2941 = vld [vmem:[%s3 + $0x188] sm:$0xff]
        %v2942 = vld [vmem:[%s3 + $0x190] sm:$0xff]
        %v2943 = vld [vmem:[%s3 + $0x198] sm:$0xff]
        %v2944 = vld [vmem:[%s3 + $0x1a0] sm:$0xff]
        %v2945 = vld [vmem:[%s3 + $0x1a8] sm:$0xff]
        %v2946 = vld [vmem:[%s3 + $0x1b0] sm:$0xff]
        %v2947 = vld [vmem:[%s3 + $0x1b8] sm:$0xff]
        %v2948 = vld [vmem:[%s3 + $0x1c0] sm:$0xff]
        %v2949 = vld [vmem:[%s3 + $0x1c8] sm:$0xff]
        %v2950 = vld [vmem:[%s3 + $0x1d0] sm:$0xff]
        %v2951 = vld [vmem:[%s3 + $0x1d8] sm:$0xff]
        %v2952 = vld [vmem:[%s3 + $0x1e0] sm:$0xff]
        %v2953 = vld [vmem:[%s3 + $0x1e8] sm:$0xff]
        %v2954 = vld [vmem:[%s3 + $0x1f0] sm:$0xff]
        %v2955 = vld [vmem:[%s3 + $0x1f8] sm:$0xff]
        %v2956 = vld [vmem:[#allocation6] sm:$0x1]
        %v2958 = vperm.slane %v2956, 0
        %2960 = vmatpush.msra.mxu0 %v2907
        %2961 = vmatpush.msra.mxu0 %v2906
        %2962 = vmatpush.msra.mxu0 %v2905
        %2963 = vmatpush.msra.mxu0 %v2904
        %2964 = vmatpush.msra.mxu0 %v2903
        %2965 = vmatpush.msra.mxu0 %v2902
        %2966 = vmatpush.msra.mxu0 %v2901
        %2967 = vmatpush.msra.mxu0 %v2900
        %2968 = vmatpush.msra.mxu0 %v2899
        %2969 = vmatpush.msra.mxu0 %v2898
        %2970 = vmatpush.msra.mxu0 %v2897
        %2971 = vmatpush.msra.mxu0 %v2896
        %2972 = vmatpush.msra.mxu0 %v2895
        %2973 = vmatpush.msra.mxu0 %v2894
        %2974 = vmatpush.msra.mxu0 %v2893
        %2975 = vmatpush.msra.mxu0 %v2892
        %2976 = vmatmul.f32.gmra.mxu0 %v2884
        %v2977 = vpop.f32.mrf.mxu0
        %v2978 = vadd.f32 %v2958, %v2977
        %2979 = vmatmul.f32.gmra.mxu0 %v2888
        %v2980 = vpop.f32.mrf.mxu0
        %v2981 = vadd.f32 %v2958, %v2980
        %2982 = vdwg.mxu0
        %2983 = vmatpush.msra.mxu0 %v2923
        %2984 = vmatpush.msra.mxu0 %v2922
        %2985 = vmatpush.msra.mxu0 %v2921
        %2986 = vmatpush.msra.mxu0 %v2920
        %2987 = vmatpush.msra.mxu0 %v2919
        %2988 = vmatpush.msra.mxu0 %v2918
        %2989 = vmatpush.msra.mxu0 %v2917
        %2990 = vmatpush.msra.mxu0 %v2916
        %2991 = vmatpush.msra.mxu0 %v2915
        %2992 = vmatpush.msra.mxu0 %v2914
        %2993 = vmatpush.msra.mxu0 %v2913
        %2994 = vmatpush.msra.mxu0 %v2912
        %2995 = vmatpush.msra.mxu0 %v2911
        %2996 = vmatpush.msra.mxu0 %v2910
        %2997 = vmatpush.msra.mxu0 %v2909
        %2998 = vmatpush.msra.mxu0 %v2908
        %2999 = vmatmul.f32.gmra.mxu0 %v2885
        %v3000 = vpop.f32.mrf.mxu0
        %v3001 = vadd.f32 %v2978, %v3000
        %3002 = vmatmul.f32.gmra.mxu0 %v2889
        %v3003 = vpop.f32.mrf.mxu0
        %v3004 = vadd.f32 %v2981, %v3003
        %3005 = vdwg.mxu0
        %3006 = vmatpush.msra.mxu0 %v2939
        %3007 = vmatpush.msra.mxu0 %v2938
        %3008 = vmatpush.msra.mxu0 %v2937
        %3009 = vmatpush.msra.mxu0 %v2936
        %3010 = vmatpush.msra.mxu0 %v2935
        %3011 = vmatpush.msra.mxu0 %v2934
        %3012 = vmatpush.msra.mxu0 %v2933
        %3013 = vmatpush.msra.mxu0 %v2932
        %3014 = vmatpush.msra.mxu0 %v2931
        %3015 = vmatpush.msra.mxu0 %v2930
        %3016 = vmatpush.msra.mxu0 %v2929
        %3017 = vmatpush.msra.mxu0 %v2928
        %3018 = vmatpush.msra.mxu0 %v2927
        %3019 = vmatpush.msra.mxu0 %v2926
        %3020 = vmatpush.msra.mxu0 %v2925
        %3021 = vmatpush.msra.mxu0 %v2924
        %3022 = vmatmul.f32.gmra.mxu0 %v2886
        %v3023 = vpop.f32.mrf.mxu0
        %v3024 = vadd.f32 %v3001, %v3023
        %3025 = vmatmul.f32.gmra.mxu0 %v2890
        %v3026 = vpop.f32.mrf.mxu0
        %v3027 = vadd.f32 %v3004, %v3026
        %3028 = vdwg.mxu0
        %3029 = vmatpush.msra.mxu0 %v2955
        %3030 = vmatpush.msra.mxu0 %v2954
        %3031 = vmatpush.msra.mxu0 %v2953
        %3032 = vmatpush.msra.mxu0 %v2952
        %3033 = vmatpush.msra.mxu0 %v2951
        %3034 = vmatpush.msra.mxu0 %v2950
        %3035 = vmatpush.msra.mxu0 %v2949
        %3036 = vmatpush.msra.mxu0 %v2948
        %3037 = vmatpush.msra.mxu0 %v2947
        %3038 = vmatpush.msra.mxu0 %v2946
        %3039 = vmatpush.msra.mxu0 %v2945
        %3040 = vmatpush.msra.mxu0 %v2944
        %3041 = vmatpush.msra.mxu0 %v2943
        %3042 = vmatpush.msra.mxu0 %v2942
        %3043 = vmatpush.msra.mxu0 %v2941
        %3044 = vmatpush.msra.mxu0 %v2940
        %3045 = vmatmul.f32.gmra.mxu0 %v2887
        %v3046 = vpop.f32.mrf.mxu0
        %v3047 = vadd.f32 %v3024, %v3046
        %3048 = vmatmul.f32.gmra.mxu0 %v2891
        %v3049 = vpop.f32.mrf.mxu0
        %v3050 = vadd.f32 %v3027, %v3049
        %3051 = vdwg.mxu0
        %v3052 = vmax.f32 %v3047, 0.0
        %v3053 = vmax.f32 %v3050, 0.0
        %v3054 = vld [vmem:[%s5] sm:$0xff]
        %v3055 = vld [vmem:[%s5 + $0x8] sm:$0xff]
        %v3056 = vld [vmem:[%s5 + $0x10] sm:$0xff]
        %v3057 = vld [vmem:[%s5 + $0x18] sm:$0xff]
        %v3058 = vld [vmem:[#allocation7] sm:$0x1]
        %v3060 = vperm.slane %v3058, 0
        %vm3062 = vcmask 261120
        %v3064 = vsel %vm3062, %v3052, 0
        %v3067 = vsel %vm3062, %v3053, 0
        %3069 = vmatpush.msra.mxu0 0.0
        %3070 = vmatpush.msra.mxu0 0.0
        %3071 = vmatpush.msra.mxu0 0.0
        %3072 = vmatpush.msra.mxu0 0.0
        %3073 = vmatpush.msra.mxu0 0.0
        %3074 = vmatpush.msra.mxu0 0.0
        %3075 = vmatpush.msra.mxu0 0.0
        %3076 = vmatpush.msra.mxu0 0.0
        %3077 = vmatpush.msra.mxu0 0.0
        %3078 = vmatpush.msra.mxu0 0.0
        %3079 = vmatpush.msra.mxu0 0.0
        %3080 = vmatpush.msra.mxu0 0.0
        %3081 = vmatpush.msra.mxu0 %v3057
        %3082 = vmatpush.msra.mxu0 %v3056
        %3083 = vmatpush.msra.mxu0 %v3055
        %3084 = vmatpush.msra.mxu0 %v3054
        %3085 = vmatmul.f32.gmra.mxu0 %v3064
        %v3086 = vpop.f32.mrf.mxu0
        %v3087 = vadd.f32 %v3060, %v3086
        %3088 = vmatmul.f32.gmra.mxu0 %v3067
        %v3089 = vpop.f32.mrf.mxu0
        %v3090 = vadd.f32 %v3060, %v3089
        %3091 = vdwg.mxu0
        %v3092 = vxor.u32 %v3087, 2147483648
        %v3093 = vxor.u32 %v3090, 2147483648
        %v3094 = vmul.f32 %v3092, 1.442695
        %v3095 = vpow.pop %v3094
        %v3096 = vmul.f32 %v3093, 1.442695
        %v3097 = vpow.pop %v3096
        %v3098 = vadd.f32 %v3095, 1.0
        %v3099 = vadd.f32 %v3097, 1.0
        %v3100 = vrcp.pop %v3098
        %v3101 = vmul.f32 %v3098, %v3100
        %v3102 = vsub.f32 1.0, %v3101
        %v3103 = vmul.f32 %v3100, %v3102
        %v3104 = vadd.f32 %v3100, %v3103
        %vm3105 = vweird.f32 %v3098
        %vm3106 = vweird.f32 %v3100
        %vm3107 = vmor %vm3105, %vm3106
        %v3108 = vsel %vm3107, %v3100, %v3104
        %v3109 = vand.u32 2147483647, %v3098
        %vm3110 = vcmp.eq.f32.partialorder %v3109, 8.507059e+37
        %v3111 = vand.u32 %v3098, 2147483648
        %v3112 = vor.u32 1.1754944e-38, %v3111
        %v3113 = vsel %vm3110, %v3112, %v3108
        %v3114 = vmul.f32 1.0, %v3113
        %v3115 = vrcp.pop %v3099
        %v3116 = vmul.f32 %v3099, %v3115
        %v3117 = vsub.f32 1.0, %v3116
        %v3118 = vmul.f32 %v3115, %v3117
        %v3119 = vadd.f32 %v3115, %v3118
        %vm3120 = vweird.f32 %v3099
        %vm3121 = vweird.f32 %v3115
        %vm3122 = vmor %vm3120, %vm3121
        %v3123 = vsel %vm3122, %v3115, %v3119
        %v3124 = vand.u32 2147483647, %v3099
        %vm3125 = vcmp.eq.f32.partialorder %v3124, 8.507059e+37
        %v3126 = vand.u32 %v3099, 2147483648
        %v3127 = vor.u32 1.1754944e-38, %v3126
        %v3128 = vsel %vm3125, %v3127, %v3123
        %v3129 = vmul.f32 1.0, %v3128
        %3130 = vst [vmem:[%s344] sm:$0xff] 0.0
        %3131 = vst [vmem:[%s344 + $0x8] sm:$0xff] 0.0
        %3132 = vst.msk [vmem:[%s344] sm:$0xff] %vm3062, %v3052
        %3133 = vst.msk [vmem:[%s344 + $0x8] sm:$0xff] %vm3062, %v3053
        %3136 = vrot.lane.b32.xlu0 %v3114, 32
        %v3137 = vpop.permute.xlu0 %3136
        %3138 = vrot.lane.b32.xlu0 %v3129, 32
        %v3139 = vpop.permute.xlu0 %3138
        %vm3142 = vcmask 277760
        %3143 = vst.msk [vmem:[%s344] sm:$0xff] %vm3142, %v3137
        %3144 = vst.msk [vmem:[%s344 + $0x8] sm:$0xff] %vm3142, %v3139
        %s3145 = smul.u32 2, %s21
        %p3146 = scmp.lt.s32.totalorder %s3145, 3
        %s3147 = scalar_select %p3146, %s3145, 3
        %s3148 = smul.addr %s3147, 8
        %s3149 = scalar_lea.vmem %s7, %s3148
        // Predicated region
        $region65: #{discriminator_forward.1} parent=47 // pred_check
          %p3150 = pneg %p191
        $region66: #{discriminator_forward.1} parent=47 // pred_check_branch
          %3152 = sbr.rel (%p3150) target = $region68
        $region67: #{discriminator_forward.1} parent=47 // pred_region
          %s3153 = smul.u32 2, %s21
        $region68: #{discriminator_forward.1} parent=47 // pred_fallthru
          _
      $region48: #{discriminator_forward.1} parent=5 // pred_fallthru
        _
      %p3154 = scmp.le.s32.totalorder 2, %s16
      // Predicated region
      $region69: #{discriminator_forward.1} parent=5 // pred_check
        %p3155 = pneg %p3154
      $region70: #{discriminator_forward.1} parent=5 // pred_check_branch
        %3157 = sbr.rel (%p3155) target = $region72
      $region71: #{discriminator_forward.1} parent=5 // pred_region
        %s3158 = ssub.s32 %s16, 2
        // Predicated region
        $region73: #{discriminator_forward.1} parent=71 // pred_check
          %p3159 = pneg %p197
        $region74: #{discriminator_forward.1} parent=71 // pred_check_branch
          %3161 = sbr.rel (%p3159) target = $region76
        $region75: #{discriminator_forward.1} parent=71 // pred_region
          %s3162 = smul.u32 2, %s22
          %p3163 = scmp.lt.s32.totalorder %s3162, 3
          %s3164 = scalar_select %p3163, %s3162, 3
          %s3165 = smul.addr %s3164, 8
          %s3166 = scalar_lea.vmem %s7, %s3165
        $region76: #{discriminator_forward.1} parent=71 // pred_fallthru
          _
      $region72: #{discriminator_forward.1} parent=5 // pred_fallthru
        _
    $region6: #{discriminator_forward.1} parent=1 // loop_footer
      %s20 = sadd.s32 1, %s16
    $region7: #{discriminator_forward.1} parent=1 // loop_footer_branch
      %15 = sbr.rel target = $region3
    $region8: #{discriminator_forward.1} parent=1 // loop_exit
      _
    %3167 = vsyncpa [#allocation3], 1
    %s3168 = scalar_lea.sflag [#allocation3], 1
    %3169 = vsyncpa %s3168, 1
    %3170 = vsyncpa [#allocation5], 1
    %3171 = vsyncpa [#allocation8], 1

</llo_original>
